<compile_context>
chip_gen: v6e
topology: v6e:2x2x1
jax: 0.10.0
libtpu: 0.0.40
codegen_flags: <defaults>
</compile_context>

<pallas_src>
import functools

import jax
import jax.numpy as jnp
from jax import lax
from jax.experimental import pallas as pl
from jax.experimental.pallas import tpu as pltpu


_BN_EPS = 1e-5
TILE_N = 1024   # spatial (lane) tile; multiple of 128; conservative for v7x 64 MiB VMEM


def _spatial_tile(n):
    # Full extent for small arrays (always legal), otherwise a 128-aligned tile.
    return n if n <= TILE_N else TILE_N


# ----------------------------------------------------------------------------
# Pallas kernels
# ----------------------------------------------------------------------------
def _conv_bn_stats_kernel(x_ref, w_ref, sz_ref, sz2_ref, *, n_valid, tile_n):
    """Pass 1: accumulate per-channel sum(z) and sum(z^2), z = w @ x (1x1 conv).

    Outputs have constant index_maps -> stay VMEM-resident across the whole grid.
    The reduction is over the lane axis (flattened spatial), i.e. an XLU lane
    reduce (free slot), not the sublane-crossing reduce flagged in review.
    """
    @pl.when(jnp.logical_and(pl.program_id(0) == 0, pl.program_id(1) == 0))
    def _():
        sz_ref[...] = jnp.zeros_like(sz_ref)
        sz2_ref[...] = jnp.zeros_like(sz2_ref)

    x = x_ref[0]                                           # (Cin, tile_n)
    if n_valid % tile_n:                                   # static: mask ragged spatial tail
        col = pl.program_id(1) * tile_n + lax.broadcasted_iota(jnp.int32, x.shape, 1)
        x = jnp.where(col < n_valid, x, jnp.zeros_like(x))

    z = jnp.dot(w_ref[...], x, preferred_element_type=jnp.float32)   # (Cout, tile_n) on MXU
    sz_ref[...] += jnp.sum(z, axis=1, keepdims=True)
    sz2_ref[...] += jnp.sum(z * z, axis=1, keepdims=True)


def _conv_bn_relu_apply_kernel(x_ref, w_ref, g_ref, b_ref, sz_ref, sz2_ref, o_ref,
                               *, m_total):
    """Pass 2: o = relu((w @ x) * scale + shift) with BN scale/shift from global stats."""
    inv_m = 1.0 / float(m_total)
    mean = sz_ref[...] * inv_m                             # (Cout, 1)
    var = jnp.maximum(sz2_ref[...] * inv_m - mean * mean, 0.0)   # clamp: no rsqrt(neg)
    inv = lax.rsqrt(var + _BN_EPS)                         # EUP slot
    scale = g_ref[...] * inv
    shift = b_ref[...] - mean * scale
    z = jnp.dot(w_ref[...], x_ref[0], preferred_element_type=jnp.float32)  # (Cout, tile_n)
    o_ref[0] = jnp.maximum(z * scale + shift, 0.0)


def _add3_conv_kernel(a_ref, b_ref, c_ref, w_ref, o_ref):
    """o = w @ (a + b + c): fused elementwise add + final 1x1 conv (conv2)."""
    s = a_ref[0] + b_ref[0] + c_ref[0]                     # (Cin, tile_n)
    o_ref[0] = jnp.dot(w_ref[...], s, preferred_element_type=jnp.float32)


# ----------------------------------------------------------------------------
# Pallas wrappers (operate on channels-first slabs (B, C, N), N = H*W flattened)
# ----------------------------------------------------------------------------
def conv_bn_relu_nc(x, w, gamma, beta):
    """Fused 1x1 conv + train-mode BatchNorm + ReLU.

    x: (B, Cin, N) f32, w: (Cout, Cin), gamma/beta: (Cout, 1). Returns (B, Cout, N) f32.
    """
    bsz, cin, n = x.shape
    cout = w.shape[0]
    tile = _spatial_tile(n)
    grid = (bsz, pl.cdiv(n, tile))
    m_total = bsz * n                                      # BN count: all batch+spatial positions

    x_spec = pl.BlockSpec((1, cin, tile), lambda b, t: (b, 0, t))
    w_spec = pl.BlockSpec((cout, cin), lambda b, t: (0, 0))
    v_spec = pl.BlockSpec((cout, 1), lambda b, t: (0, 0))
    o_spec = pl.BlockSpec((1, cout, tile), lambda b, t: (b, 0, t))

    # Pass 1: global BN statistics (reduction grid -> "arbitrary").
    sum_z, sum_z2 = pl.pallas_call(
        functools.partial(_conv_bn_stats_kernel, n_valid=n, tile_n=tile),
        out_shape=(jax.ShapeDtypeStruct((cout, 1), jnp.float32),
                   jax.ShapeDtypeStruct((cout, 1), jnp.float32)),
        grid=grid,
        in_specs=[x_spec, w_spec],
        out_specs=(v_spec, v_spec),
        compiler_params=pltpu.CompilerParams(
            dimension_semantics=("arbitrary", "arbitrary")),
    )(x, w)

    # Pass 2: apply conv + BN affine + ReLU (independent tiles -> "parallel" for v7x).
    return pl.pallas_call(
        functools.partial(_conv_bn_relu_apply_kernel, m_total=m_total),
        out_shape=jax.ShapeDtypeStruct((bsz, cout, n), jnp.float32),
        grid=grid,
        in_specs=[x_spec, w_spec, v_spec, v_spec, v_spec, v_spec],
        out_specs=o_spec,
        compiler_params=pltpu.CompilerParams(
            dimension_semantics=("parallel", "parallel")),
    )(x, w, gamma, beta, sum_z, sum_z2)


def add3_conv_nc(a, b, c, w):
    """(a + b + c) -> 1x1 conv (conv2). a/b/c: (B, Cin, N), w: (Cout, Cin)."""
    bsz, cin, n = a.shape
    cout = w.shape[0]
    tile = _spatial_tile(n)
    grid = (bsz, pl.cdiv(n, tile))
    in_spec = pl.BlockSpec((1, cin, tile), lambda bi, t: (bi, 0, t))
    return pl.pallas_call(
        _add3_conv_kernel,
        out_shape=jax.ShapeDtypeStruct((bsz, cout, n), jnp.float32),
        grid=grid,
        in_specs=[in_spec, in_spec, in_spec,
                  pl.BlockSpec((cout, cin), lambda bi, t: (0, 0))],
        out_specs=pl.BlockSpec((1, cout, tile), lambda bi, t: (bi, 0, t)),
        compiler_params=pltpu.CompilerParams(
            dimension_semantics=("parallel", "parallel")),
    )(a, b, c, w)


# ----------------------------------------------------------------------------
# FourierUnit2d: rfft2 -> (real,imag as channels) -> conv+BN+ReLU (Pallas) -> irfft2
# ----------------------------------------------------------------------------
def fourier_unit2d(x, w, gamma, beta):
    """FourierUnit2d forward, NCHW in/out.

    # TODO(synk): rfft2/irfft2 have no Pallas primitive; they run as XLA FFT ops on the
    # native trailing (H, W) axes (no layout change needed in NCHW).
    """
    b, c, h, wd = x.shape
    ff = jnp.fft.rfft2(x, norm="ortho")                    # (b, c, h, wh) complex64
    wh = ff.shape[-1]
    # stack(real, imag) -> channel order [c0_r, c0_i, c1_r, c1_i, ...]
    # (matches torch stack(dim=-1).permute(0,1,4,2,3).view(b, 2c, h, wh))
    stacked = jnp.stack([jnp.real(ff), jnp.imag(ff)], axis=2).reshape(b, 2 * c, h * wh)
    o = conv_bn_relu_nc(stacked, w, gamma, beta)           # Pallas: conv1x1 + BN + ReLU
    cout = w.shape[0] // 2
    o = o.reshape(b, cout, 2, h, wh)
    comp = lax.complex(o[:, :, 0], o[:, :, 1])
    return jnp.fft.irfft2(comp, s=(h, wd), norm="ortho")


# ----------------------------------------------------------------------------
# SpectralTransform2d forward (stride=1, groups=1, enable_lfu=True, fft_norm='ortho')
# ----------------------------------------------------------------------------
def spectral_transform2d(x, params):
    b, cin, h, w = x.shape
    chalf = params["w1"].shape[0]

    # downsample: stride == 1 -> Identity
    # conv1: 1x1 conv + BN + ReLU  (Pallas, two-pass tiled BN)
    x1 = conv_bn_relu_nc(x.reshape(b, cin, h * w), params["w1"], params["g1"], params["b1"])
    x1 = x1.reshape(b, chalf, h, w)

    # fu: global Fourier unit
    y = fourier_unit2d(x1, params["w_fu"], params["g_fu"], params["b_fu"])

    # lfu: local Fourier unit on quarter channels over a 2x2 spatial split
    c = chalf
    xs = x1[:, : c // 4]
    xs = jnp.concatenate(jnp.split(xs, 2, axis=2), axis=1)   # split H, cat on channels
    xs = jnp.concatenate(jnp.split(xs, 2, axis=3), axis=1)   # split W, cat on channels
    xs = fourier_unit2d(xs, params["w_lfu"], params["g_lfu"], params["b_lfu"])
    xs = jnp.tile(xs, (1, 1, 2, 2))                          # repeat(1,1,2,2)

    # conv2: 1x1 conv of (x1 + y + xs) with the add fused into the Pallas kernel
    cout = params["w2"].shape[0]
    out = add3_conv_nc(x1.reshape(b, chalf, h * w),
                       y.reshape(b, chalf, h * w),
                       xs.reshape(b, chalf, h * w),
                       params["w2"])
    return out.reshape(b, cout, h, w)


# ----------------------------------------------------------------------------
# Deterministic synthetic parameters.  Conv weights use PyTorch's native
# (Cout, Cin) layout (kernel_size=1 squeezed); gamma/beta stored as (C, 1).
# ----------------------------------------------------------------------------
def init_params(key, in_channels, out_channels):
    chalf = out_channels // 2
    ks = jax.random.split(key, 8)

    def wmat(k, cout, cin):
        return jax.random.normal(k, (cout, cin), jnp.float32) / jnp.sqrt(cin)

    def affine(k, c):
        k1, k2 = jax.random.split(k)
        gamma = 1.0 + 0.1 * jax.random.normal(k1, (c, 1), jnp.float32)
        beta = 0.1 * jax.random.normal(k2, (c, 1), jnp.float32)
        return gamma, beta

    g1, b1 = affine(ks[1], chalf)
    g_fu, b_fu = affine(ks[3], 2 * chalf)
    g_lfu, b_lfu = affine(ks[5], 2 * chalf)
    return {
        "w1": wmat(ks[0], chalf, in_channels),
        "g1": g1, "b1": b1,
        "w_fu": wmat(ks[2], 2 * chalf, 2 * chalf),
        "g_fu": g_fu, "b_fu": b_fu,
        "w_lfu": wmat(ks[4], 2 * chalf, 2 * chalf),
        "g_lfu": g_lfu, "b_lfu": b_lfu,
        "w2": wmat(ks[6], out_channels, chalf),
    }


if __name__ == "__main__":
    key = jax.random.PRNGKey(0)
    k_x, k_p = jax.random.split(key)

    in_channels, out_channels = 4, 8          # chalf = 4 (divisible by 4 for the LFU split)
    b, h, w = 2, 16, 16
    x = jax.random.normal(k_x, (b, in_channels, h, w), jnp.float32)
    params = init_params(k_p, in_channels, out_channels)

    fwd = jax.jit(functools.partial(spectral_transform2d, params=params))
    out = fwd(x)
    jax.block_until_ready(out)
    assert out.shape == (b, out_channels, h, w), out.shape
    assert bool(jnp.all(jnp.isfinite(out)))
    print("KERNEL_OK")
</pallas_src>

<mosaic_0001>
module attributes {stable_mosaic.version = 11 : i64} {
  func.func @_conv_bn_stats_kernel(%arg0: i32, %arg1: i32, %arg2: memref<1x4x256xf32, #tpu.memory_space<vmem>>, %arg3: memref<4x4xf32, #tpu.memory_space<vmem>>, %arg4: memref<4x1xf32, #tpu.memory_space<vmem>>, %arg5: memref<4x1xf32, #tpu.memory_space<vmem>>) attributes {dimension_semantics = [#tpu.dimension_semantics<arbitrary>, #tpu.dimension_semantics<arbitrary>], iteration_bounds = array<i64: 2, 1>, scalar_prefetch = 0 : i64, scratch_operands = 0 : i64, tpu.core_type = #tpu.core_type<tc>, window_params = [{transform_indices = @transform_0, window_bounds = array<i64: 1, 4, 256>}, {pipeline_mode = #tpu.pipeline_mode<synchronous>, transform_indices = @transform_1, window_bounds = array<i64: 4, 4>}, {pipeline_mode = #tpu.pipeline_mode<synchronous>, transform_indices = @transform_2, window_bounds = array<i64: 4, 1>}, {pipeline_mode = #tpu.pipeline_mode<synchronous>, transform_indices = @transform_3, window_bounds = array<i64: 4, 1>}]} {
    %c0_i32 = arith.constant 0 : i32
    %0 = arith.cmpi eq, %arg0, %c0_i32 : i32
    %c0_i32_0 = arith.constant 0 : i32
    %1 = arith.cmpi eq, %arg1, %c0_i32_0 : i32
    %2 = arith.andi %0, %1 : i1
    %3 = arith.extui %2 : i1 to i32
    %c0_i32_1 = arith.constant 0 : i32
    %4 = arith.cmpi ne, %3, %c0_i32_1 : i32
    scf.if %4 {
      %cst_16 = arith.constant 0.000000e+00 : f32
      %20 = vector.broadcast %cst_16 : f32 to vector<4x1xf32>
      %c0_17 = arith.constant 0 : index
      %c0_18 = arith.constant 0 : index
      %21 = vector.load %arg4[%c0_17, %c0_18] : memref<4x1xf32, #tpu.memory_space<vmem>>, vector<4x1xf32>
      tpu.vector_store %arg4[%c0_17, %c0_18], %20 {strides = array<i32>} : memref<4x1xf32, #tpu.memory_space<vmem>>, vector<4x1xf32>,
      %cst_19 = arith.constant 0.000000e+00 : f32
      %22 = vector.broadcast %cst_19 : f32 to vector<4x1xf32>
      %c0_20 = arith.constant 0 : index
      %c0_21 = arith.constant 0 : index
      %23 = vector.load %arg5[%c0_20, %c0_21] : memref<4x1xf32, #tpu.memory_space<vmem>>, vector<4x1xf32>
      tpu.vector_store %arg5[%c0_20, %c0_21], %22 {strides = array<i32>} : memref<4x1xf32, #tpu.memory_space<vmem>>, vector<4x1xf32>,
    } else {
    }
    %c0 = arith.constant 0 : index
    %c0_2 = arith.constant 0 : index
    %c0_3 = arith.constant 0 : index
    %5 = vector.load %arg2[%c0, %c0_2, %c0_3] : memref<1x4x256xf32, #tpu.memory_space<vmem>>, vector<1x4x256xf32>
    %6 = vector.shape_cast %5 : vector<1x4x256xf32> to vector<4x256xf32>
    %c0_4 = arith.constant 0 : index
    %c0_5 = arith.constant 0 : index
    %7 = vector.load %arg3[%c0_4, %c0_5] : memref<4x4xf32, #tpu.memory_space<vmem>>, vector<4x4xf32>
    %cst = arith.constant dense<0.000000e+00> : vector<4x256xf32>
    %8 = tpu.matmul %7, %6, %cst {dimension_numbers = #tpu.dot_dimension_numbers<[1], [0], [0], [1], [0, 0, 1, 1], [], []>} : vector<4x4xf32>, vector<4x256xf32>, vector<4x256xf32> -> vector<4x256xf32>
    %c0_6 = arith.constant 0 : index
    %c0_7 = arith.constant 0 : index
    %9 = vector.load %arg4[%c0_6, %c0_7] : memref<4x1xf32, #tpu.memory_space<vmem>>, vector<4x1xf32>
    %cst_8 = arith.constant dense<0.000000e+00> : vector<4xf32>
    %10 = vector.multi_reduction <add>, %8, %cst_8 [1] : vector<4x256xf32> to vector<4xf32>
    %11 = vector.shape_cast %10 : vector<4xf32> to vector<4x1xf32>
    %12 = arith.addf %9, %11 : vector<4x1xf32>
    %c0_9 = arith.constant 0 : index
    %c0_10 = arith.constant 0 : index
    %13 = vector.load %arg4[%c0_9, %c0_10] : memref<4x1xf32, #tpu.memory_space<vmem>>, vector<4x1xf32>
    tpu.vector_store %arg4[%c0_9, %c0_10], %12 {strides = array<i32>} : memref<4x1xf32, #tpu.memory_space<vmem>>, vector<4x1xf32>,
    %c0_11 = arith.constant 0 : index
    %c0_12 = arith.constant 0 : index
    %14 = vector.load %arg5[%c0_11, %c0_12] : memref<4x1xf32, #tpu.memory_space<vmem>>, vector<4x1xf32>
    %15 = arith.mulf %8, %8 : vector<4x256xf32>
    %cst_13 = arith.constant dense<0.000000e+00> : vector<4xf32>
    %16 = vector.multi_reduction <add>, %15, %cst_13 [1] : vector<4x256xf32> to vector<4xf32>
    %17 = vector.shape_cast %16 : vector<4xf32> to vector<4x1xf32>
    %18 = arith.addf %14, %17 : vector<4x1xf32>
    %c0_14 = arith.constant 0 : index
    %c0_15 = arith.constant 0 : index
    %19 = vector.load %arg5[%c0_14, %c0_15] : memref<4x1xf32, #tpu.memory_space<vmem>>, vector<4x1xf32>
    tpu.vector_store %arg5[%c0_14, %c0_15], %18 {strides = array<i32>} : memref<4x1xf32, #tpu.memory_space<vmem>>, vector<4x1xf32>,
    return
  }
  func.func @transform_0(%arg0: i32, %arg1: i32) -> (i32, i32, i32) {
    %c0_i32 = arith.constant 0 : i32
    %c0_i32_0 = arith.constant 0 : i32
    return %arg0, %c0_i32, %arg1 : i32, i32, i32
  }
  func.func @transform_1(%arg0: i32, %arg1: i32) -> (i32, i32) {
    %c0_i32 = arith.constant 0 : i32
    %c0_i32_0 = arith.constant 0 : i32
    %c0_i32_1 = arith.constant 0 : i32
    return %c0_i32, %c0_i32_0 : i32, i32
  }
  func.func @transform_2(%arg0: i32, %arg1: i32) -> (i32, i32) {
    %c0_i32 = arith.constant 0 : i32
    %c0_i32_0 = arith.constant 0 : i32
    %c0_i32_1 = arith.constant 0 : i32
    return %c0_i32, %c0_i32_0 : i32, i32
  }
  func.func @transform_3(%arg0: i32, %arg1: i32) -> (i32, i32) {
    %c0_i32 = arith.constant 0 : i32
    %c0_i32_0 = arith.constant 0 : i32
    %c0_i32_1 = arith.constant 0 : i32
    return %c0_i32, %c0_i32_0 : i32, i32
  }
}

module attributes {stable_mosaic.version = 11 : i64} {
  func.func @_conv_bn_relu_apply_kernel(%arg0: i32, %arg1: i32, %arg2: memref<1x4x256xf32, #tpu.memory_space<vmem>>, %arg3: memref<4x4xf32, #tpu.memory_space<vmem>>, %arg4: memref<4x1xf32, #tpu.memory_space<vmem>>, %arg5: memref<4x1xf32, #tpu.memory_space<vmem>>, %arg6: memref<4x1xf32, #tpu.memory_space<vmem>>, %arg7: memref<4x1xf32, #tpu.memory_space<vmem>>, %arg8: memref<1x4x256xf32, #tpu.memory_space<vmem>>) attributes {dimension_semantics = [#tpu.dimension_semantics<parallel>, #tpu.dimension_semantics<parallel>], iteration_bounds = array<i64: 2, 1>, scalar_prefetch = 0 : i64, scratch_operands = 0 : i64, tpu.core_type = #tpu.core_type<tc>, window_params = [{transform_indices = @transform_0, window_bounds = array<i64: 1, 4, 256>}, {pipeline_mode = #tpu.pipeline_mode<synchronous>, transform_indices = @transform_1, window_bounds = array<i64: 4, 4>}, {pipeline_mode = #tpu.pipeline_mode<synchronous>, transform_indices = @transform_2, window_bounds = array<i64: 4, 1>}, {pipeline_mode = #tpu.pipeline_mode<synchronous>, transform_indices = @transform_3, window_bounds = array<i64: 4, 1>}, {pipeline_mode = #tpu.pipeline_mode<synchronous>, transform_indices = @transform_4, window_bounds = array<i64: 4, 1>}, {pipeline_mode = #tpu.pipeline_mode<synchronous>, transform_indices = @transform_5, window_bounds = array<i64: 4, 1>}, {transform_indices = @transform_6, window_bounds = array<i64: 1, 4, 256>}]} {
    %c0 = arith.constant 0 : index
    %c0_0 = arith.constant 0 : index
    %0 = vector.load %arg6[%c0, %c0_0] : memref<4x1xf32, #tpu.memory_space<vmem>>, vector<4x1xf32>
    %cst = arith.constant 0.001953125 : f32
    %1 = vector.broadcast %cst : f32 to vector<4x1xf32>
    %2 = arith.mulf %0, %1 : vector<4x1xf32>
    %c0_1 = arith.constant 0 : index
    %c0_2 = arith.constant 0 : index
    %3 = vector.load %arg7[%c0_1, %c0_2] : memref<4x1xf32, #tpu.memory_space<vmem>>, vector<4x1xf32>
    %cst_3 = arith.constant 0.001953125 : f32
    %4 = vector.broadcast %cst_3 : f32 to vector<4x1xf32>
    %5 = arith.mulf %3, %4 : vector<4x1xf32>
    %6 = arith.mulf %2, %2 : vector<4x1xf32>
    %7 = arith.subf %5, %6 : vector<4x1xf32>
    %cst_4 = arith.constant 0.000000e+00 : f32
    %8 = vector.broadcast %cst_4 : f32 to vector<4x1xf32>
    %9 = arith.maximumf %7, %8 : vector<4x1xf32>
    %cst_5 = arith.constant 9.99999974E-6 : f32
    %10 = vector.broadcast %cst_5 : f32 to vector<4x1xf32>
    %11 = arith.addf %9, %10 : vector<4x1xf32>
    %12 = math.rsqrt %11 : vector<4x1xf32>
    %c0_6 = arith.constant 0 : index
    %c0_7 = arith.constant 0 : index
    %13 = vector.load %arg4[%c0_6, %c0_7] : memref<4x1xf32, #tpu.memory_space<vmem>>, vector<4x1xf32>
    %14 = arith.mulf %13, %12 : vector<4x1xf32>
    %c0_8 = arith.constant 0 : index
    %c0_9 = arith.constant 0 : index
    %15 = vector.load %arg5[%c0_8, %c0_9] : memref<4x1xf32, #tpu.memory_space<vmem>>, vector<4x1xf32>
    %16 = arith.mulf %2, %14 : vector<4x1xf32>
    %17 = arith.subf %15, %16 : vector<4x1xf32>
    %c0_10 = arith.constant 0 : index
    %c0_11 = arith.constant 0 : index
    %18 = vector.load %arg3[%c0_10, %c0_11] : memref<4x4xf32, #tpu.memory_space<vmem>>, vector<4x4xf32>
    %c0_12 = arith.constant 0 : index
    %c0_13 = arith.constant 0 : index
    %c0_14 = arith.constant 0 : index
    %19 = vector.load %arg2[%c0_12, %c0_13, %c0_14] : memref<1x4x256xf32, #tpu.memory_space<vmem>>, vector<1x4x256xf32>
    %20 = vector.shape_cast %19 : vector<1x4x256xf32> to vector<4x256xf32>
    %cst_15 = arith.constant dense<0.000000e+00> : vector<4x256xf32>
    %21 = tpu.matmul %18, %20, %cst_15 {dimension_numbers = #tpu.dot_dimension_numbers<[1], [0], [0], [1], [0, 0, 1, 1], [], []>} : vector<4x4xf32>, vector<4x256xf32>, vector<4x256xf32> -> vector<4x256xf32>
    %22 = vector.broadcast %14 : vector<4x1xf32> to vector<4x256xf32>
    %23 = arith.mulf %21, %22 : vector<4x256xf32>
    %24 = vector.broadcast %17 : vector<4x1xf32> to vector<4x256xf32>
    %25 = arith.addf %23, %24 : vector<4x256xf32>
    %cst_16 = arith.constant 0.000000e+00 : f32
    %26 = vector.broadcast %cst_16 : f32 to vector<4x256xf32>
    %27 = arith.maximumf %25, %26 : vector<4x256xf32>
    %c0_17 = arith.constant 0 : index
    %c0_18 = arith.constant 0 : index
    %c0_19 = arith.constant 0 : index
    %28 = vector.load %arg8[%c0_17, %c0_18, %c0_19] : memref<1x4x256xf32, #tpu.memory_space<vmem>>, vector<1x4x256xf32>
    %29 = vector.shape_cast %28 : vector<1x4x256xf32> to vector<4x256xf32>
    %30 = vector.shape_cast %27 : vector<4x256xf32> to vector<1x4x256xf32>
    tpu.vector_store %arg8[%c0_17, %c0_18, %c0_19], %30 {strides = array<i32>} : memref<1x4x256xf32, #tpu.memory_space<vmem>>, vector<1x4x256xf32>,
    return
  }
  func.func @transform_0(%arg0: i32, %arg1: i32) -> (i32, i32, i32) {
    %c0_i32 = arith.constant 0 : i32
    %c0_i32_0 = arith.constant 0 : i32
    return %arg0, %c0_i32, %arg1 : i32, i32, i32
  }
  func.func @transform_1(%arg0: i32, %arg1: i32) -> (i32, i32) {
    %c0_i32 = arith.constant 0 : i32
    %c0_i32_0 = arith.constant 0 : i32
    %c0_i32_1 = arith.constant 0 : i32
    return %c0_i32, %c0_i32_0 : i32, i32
  }
  func.func @transform_2(%arg0: i32, %arg1: i32) -> (i32, i32) {
    %c0_i32 = arith.constant 0 : i32
    %c0_i32_0 = arith.constant 0 : i32
    %c0_i32_1 = arith.constant 0 : i32
    return %c0_i32, %c0_i32_0 : i32, i32
  }
  func.func @transform_3(%arg0: i32, %arg1: i32) -> (i32, i32) {
    %c0_i32 = arith.constant 0 : i32
    %c0_i32_0 = arith.constant 0 : i32
    %c0_i32_1 = arith.constant 0 : i32
    return %c0_i32, %c0_i32_0 : i32, i32
  }
  func.func @transform_4(%arg0: i32, %arg1: i32) -> (i32, i32) {
    %c0_i32 = arith.constant 0 : i32
    %c0_i32_0 = arith.constant 0 : i32
    %c0_i32_1 = arith.constant 0 : i32
    return %c0_i32, %c0_i32_0 : i32, i32
  }
  func.func @transform_5(%arg0: i32, %arg1: i32) -> (i32, i32) {
    %c0_i32 = arith.constant 0 : i32
    %c0_i32_0 = arith.constant 0 : i32
    %c0_i32_1 = arith.constant 0 : i32
    return %c0_i32, %c0_i32_0 : i32, i32
  }
  func.func @transform_6(%arg0: i32, %arg1: i32) -> (i32, i32, i32) {
    %c0_i32 = arith.constant 0 : i32
    %c0_i32_0 = arith.constant 0 : i32
    return %arg0, %c0_i32, %arg1 : i32, i32, i32
  }
}

module attributes {stable_mosaic.version = 11 : i64} {
  func.func @_conv_bn_stats_kernel(%arg0: i32, %arg1: i32, %arg2: memref<1x8x40xf32, #tpu.memory_space<vmem>>, %arg3: memref<8x8xf32, #tpu.memory_space<vmem>>, %arg4: memref<8x1xf32, #tpu.memory_space<vmem>>, %arg5: memref<8x1xf32, #tpu.memory_space<vmem>>) attributes {dimension_semantics = [#tpu.dimension_semantics<arbitrary>, #tpu.dimension_semantics<arbitrary>], iteration_bounds = array<i64: 2, 1>, scalar_prefetch = 0 : i64, scratch_operands = 0 : i64, tpu.core_type = #tpu.core_type<tc>, window_params = [{transform_indices = @transform_0, window_bounds = array<i64: 1, 8, 40>}, {pipeline_mode = #tpu.pipeline_mode<synchronous>, transform_indices = @transform_1, window_bounds = array<i64: 8, 8>}, {pipeline_mode = #tpu.pipeline_mode<synchronous>, transform_indices = @transform_2, window_bounds = array<i64: 8, 1>}, {pipeline_mode = #tpu.pipeline_mode<synchronous>, transform_indices = @transform_3, window_bounds = array<i64: 8, 1>}]} {
    %c0_i32 = arith.constant 0 : i32
    %0 = arith.cmpi eq, %arg0, %c0_i32 : i32
    %c0_i32_0 = arith.constant 0 : i32
    %1 = arith.cmpi eq, %arg1, %c0_i32_0 : i32
    %2 = arith.andi %0, %1 : i1
    %3 = arith.extui %2 : i1 to i32
    %c0_i32_1 = arith.constant 0 : i32
    %4 = arith.cmpi ne, %3, %c0_i32_1 : i32
    scf.if %4 {
      %cst_16 = arith.constant 0.000000e+00 : f32
      %20 = vector.broadcast %cst_16 : f32 to vector<8x1xf32>
      %c0_17 = arith.constant 0 : index
      %c0_18 = arith.constant 0 : index
      %21 = vector.load %arg4[%c0_17, %c0_18] : memref<8x1xf32, #tpu.memory_space<vmem>>, vector<8x1xf32>
      tpu.vector_store %arg4[%c0_17, %c0_18], %20 {strides = array<i32>} : memref<8x1xf32, #tpu.memory_space<vmem>>, vector<8x1xf32>,
      %cst_19 = arith.constant 0.000000e+00 : f32
      %22 = vector.broadcast %cst_19 : f32 to vector<8x1xf32>
      %c0_20 = arith.constant 0 : index
      %c0_21 = arith.constant 0 : index
      %23 = vector.load %arg5[%c0_20, %c0_21] : memref<8x1xf32, #tpu.memory_space<vmem>>, vector<8x1xf32>
      tpu.vector_store %arg5[%c0_20, %c0_21], %22 {strides = array<i32>} : memref<8x1xf32, #tpu.memory_space<vmem>>, vector<8x1xf32>,
    } else {
    }
    %c0 = arith.constant 0 : index
    %c0_2 = arith.constant 0 : index
    %c0_3 = arith.constant 0 : index
    %5 = vector.load %arg2[%c0, %c0_2, %c0_3] : memref<1x8x40xf32, #tpu.memory_space<vmem>>, vector<1x8x40xf32>
    %6 = vector.shape_cast %5 : vector<1x8x40xf32> to vector<8x40xf32>
    %c0_4 = arith.constant 0 : index
    %c0_5 = arith.constant 0 : index
    %7 = vector.load %arg3[%c0_4, %c0_5] : memref<8x8xf32, #tpu.memory_space<vmem>>, vector<8x8xf32>
    %cst = arith.constant dense<0.000000e+00> : vector<8x40xf32>
    %8 = tpu.matmul %7, %6, %cst {dimension_numbers = #tpu.dot_dimension_numbers<[1], [0], [0], [1], [0, 0, 1, 1], [], []>} : vector<8x8xf32>, vector<8x40xf32>, vector<8x40xf32> -> vector<8x40xf32>
    %c0_6 = arith.constant 0 : index
    %c0_7 = arith.constant 0 : index
    %9 = vector.load %arg4[%c0_6, %c0_7] : memref<8x1xf32, #tpu.memory_space<vmem>>, vector<8x1xf32>
    %cst_8 = arith.constant dense<0.000000e+00> : vector<8xf32>
    %10 = vector.multi_reduction <add>, %8, %cst_8 [1] : vector<8x40xf32> to vector<8xf32>
    %11 = vector.shape_cast %10 : vector<8xf32> to vector<8x1xf32>
    %12 = arith.addf %9, %11 : vector<8x1xf32>
    %c0_9 = arith.constant 0 : index
    %c0_10 = arith.constant 0 : index
    %13 = vector.load %arg4[%c0_9, %c0_10] : memref<8x1xf32, #tpu.memory_space<vmem>>, vector<8x1xf32>
    tpu.vector_store %arg4[%c0_9, %c0_10], %12 {strides = array<i32>} : memref<8x1xf32, #tpu.memory_space<vmem>>, vector<8x1xf32>,
    %c0_11 = arith.constant 0 : index
    %c0_12 = arith.constant 0 : index
    %14 = vector.load %arg5[%c0_11, %c0_12] : memref<8x1xf32, #tpu.memory_space<vmem>>, vector<8x1xf32>
    %15 = arith.mulf %8, %8 : vector<8x40xf32>
    %cst_13 = arith.constant dense<0.000000e+00> : vector<8xf32>
    %16 = vector.multi_reduction <add>, %15, %cst_13 [1] : vector<8x40xf32> to vector<8xf32>
    %17 = vector.shape_cast %16 : vector<8xf32> to vector<8x1xf32>
    %18 = arith.addf %14, %17 : vector<8x1xf32>
    %c0_14 = arith.constant 0 : index
    %c0_15 = arith.constant 0 : index
    %19 = vector.load %arg5[%c0_14, %c0_15] : memref<8x1xf32, #tpu.memory_space<vmem>>, vector<8x1xf32>
    tpu.vector_store %arg5[%c0_14, %c0_15], %18 {strides = array<i32>} : memref<8x1xf32, #tpu.memory_space<vmem>>, vector<8x1xf32>,
    return
  }
  func.func @transform_0(%arg0: i32, %arg1: i32) -> (i32, i32, i32) {
    %c0_i32 = arith.constant 0 : i32
    %c0_i32_0 = arith.constant 0 : i32
    return %arg0, %c0_i32, %arg1 : i32, i32, i32
  }
  func.func @transform_1(%arg0: i32, %arg1: i32) -> (i32, i32) {
    %c0_i32 = arith.constant 0 : i32
    %c0_i32_0 = arith.constant 0 : i32
    %c0_i32_1 = arith.constant 0 : i32
    return %c0_i32, %c0_i32_0 : i32, i32
  }
  func.func @transform_2(%arg0: i32, %arg1: i32) -> (i32, i32) {
    %c0_i32 = arith.constant 0 : i32
    %c0_i32_0 = arith.constant 0 : i32
    %c0_i32_1 = arith.constant 0 : i32
    return %c0_i32, %c0_i32_0 : i32, i32
  }
  func.func @transform_3(%arg0: i32, %arg1: i32) -> (i32, i32) {
    %c0_i32 = arith.constant 0 : i32
    %c0_i32_0 = arith.constant 0 : i32
    %c0_i32_1 = arith.constant 0 : i32
    return %c0_i32, %c0_i32_0 : i32, i32
  }
}

module attributes {stable_mosaic.version = 11 : i64} {
  func.func @_conv_bn_relu_apply_kernel(%arg0: i32, %arg1: i32, %arg2: memref<1x8x40xf32, #tpu.memory_space<vmem>>, %arg3: memref<8x8xf32, #tpu.memory_space<vmem>>, %arg4: memref<8x1xf32, #tpu.memory_space<vmem>>, %arg5: memref<8x1xf32, #tpu.memory_space<vmem>>, %arg6: memref<8x1xf32, #tpu.memory_space<vmem>>, %arg7: memref<8x1xf32, #tpu.memory_space<vmem>>, %arg8: memref<1x8x40xf32, #tpu.memory_space<vmem>>) attributes {dimension_semantics = [#tpu.dimension_semantics<parallel>, #tpu.dimension_semantics<parallel>], iteration_bounds = array<i64: 2, 1>, scalar_prefetch = 0 : i64, scratch_operands = 0 : i64, tpu.core_type = #tpu.core_type<tc>, window_params = [{transform_indices = @transform_0, window_bounds = array<i64: 1, 8, 40>}, {pipeline_mode = #tpu.pipeline_mode<synchronous>, transform_indices = @transform_1, window_bounds = array<i64: 8, 8>}, {pipeline_mode = #tpu.pipeline_mode<synchronous>, transform_indices = @transform_2, window_bounds = array<i64: 8, 1>}, {pipeline_mode = #tpu.pipeline_mode<synchronous>, transform_indices = @transform_3, window_bounds = array<i64: 8, 1>}, {pipeline_mode = #tpu.pipeline_mode<synchronous>, transform_indices = @transform_4, window_bounds = array<i64: 8, 1>}, {pipeline_mode = #tpu.pipeline_mode<synchronous>, transform_indices = @transform_5, window_bounds = array<i64: 8, 1>}, {transform_indices = @transform_6, window_bounds = array<i64: 1, 8, 40>}]} {
    %c0 = arith.constant 0 : index
    %c0_0 = arith.constant 0 : index
    %0 = vector.load %arg6[%c0, %c0_0] : memref<8x1xf32, #tpu.memory_space<vmem>>, vector<8x1xf32>
    %cst = arith.constant 1.250000e-02 : f32
    %1 = vector.broadcast %cst : f32 to vector<8x1xf32>
    %2 = arith.mulf %0, %1 : vector<8x1xf32>
    %c0_1 = arith.constant 0 : index
    %c0_2 = arith.constant 0 : index
    %3 = vector.load %arg7[%c0_1, %c0_2] : memref<8x1xf32, #tpu.memory_space<vmem>>, vector<8x1xf32>
    %cst_3 = arith.constant 1.250000e-02 : f32
    %4 = vector.broadcast %cst_3 : f32 to vector<8x1xf32>
    %5 = arith.mulf %3, %4 : vector<8x1xf32>
    %6 = arith.mulf %2, %2 : vector<8x1xf32>
    %7 = arith.subf %5, %6 : vector<8x1xf32>
    %cst_4 = arith.constant 0.000000e+00 : f32
    %8 = vector.broadcast %cst_4 : f32 to vector<8x1xf32>
    %9 = arith.maximumf %7, %8 : vector<8x1xf32>
    %cst_5 = arith.constant 9.99999974E-6 : f32
    %10 = vector.broadcast %cst_5 : f32 to vector<8x1xf32>
    %11 = arith.addf %9, %10 : vector<8x1xf32>
    %12 = math.rsqrt %11 : vector<8x1xf32>
    %c0_6 = arith.constant 0 : index
    %c0_7 = arith.constant 0 : index
    %13 = vector.load %arg4[%c0_6, %c0_7] : memref<8x1xf32, #tpu.memory_space<vmem>>, vector<8x1xf32>
    %14 = arith.mulf %13, %12 : vector<8x1xf32>
    %c0_8 = arith.constant 0 : index
    %c0_9 = arith.constant 0 : index
    %15 = vector.load %arg5[%c0_8, %c0_9] : memref<8x1xf32, #tpu.memory_space<vmem>>, vector<8x1xf32>
    %16 = arith.mulf %2, %14 : vector<8x1xf32>
    %17 = arith.subf %15, %16 : vector<8x1xf32>
    %c0_10 = arith.constant 0 : index
    %c0_11 = arith.constant 0 : index
    %18 = vector.load %arg3[%c0_10, %c0_11] : memref<8x8xf32, #tpu.memory_space<vmem>>, vector<8x8xf32>
    %c0_12 = arith.constant 0 : index
    %c0_13 = arith.constant 0 : index
    %c0_14 = arith.constant 0 : index
    %19 = vector.load %arg2[%c0_12, %c0_13, %c0_14] : memref<1x8x40xf32, #tpu.memory_space<vmem>>, vector<1x8x40xf32>
    %20 = vector.shape_cast %19 : vector<1x8x40xf32> to vector<8x40xf32>
    %cst_15 = arith.constant dense<0.000000e+00> : vector<8x40xf32>
    %21 = tpu.matmul %18, %20, %cst_15 {dimension_numbers = #tpu.dot_dimension_numbers<[1], [0], [0], [1], [0, 0, 1, 1], [], []>} : vector<8x8xf32>, vector<8x40xf32>, vector<8x40xf32> -> vector<8x40xf32>
    %22 = vector.broadcast %14 : vector<8x1xf32> to vector<8x40xf32>
    %23 = arith.mulf %21, %22 : vector<8x40xf32>
    %24 = vector.broadcast %17 : vector<8x1xf32> to vector<8x40xf32>
    %25 = arith.addf %23, %24 : vector<8x40xf32>
    %cst_16 = arith.constant 0.000000e+00 : f32
    %26 = vector.broadcast %cst_16 : f32 to vector<8x40xf32>
    %27 = arith.maximumf %25, %26 : vector<8x40xf32>
    %c0_17 = arith.constant 0 : index
    %c0_18 = arith.constant 0 : index
    %c0_19 = arith.constant 0 : index
    %28 = vector.load %arg8[%c0_17, %c0_18, %c0_19] : memref<1x8x40xf32, #tpu.memory_space<vmem>>, vector<1x8x40xf32>
    %29 = vector.shape_cast %28 : vector<1x8x40xf32> to vector<8x40xf32>
    %30 = vector.shape_cast %27 : vector<8x40xf32> to vector<1x8x40xf32>
    tpu.vector_store %arg8[%c0_17, %c0_18, %c0_19], %30 {strides = array<i32>} : memref<1x8x40xf32, #tpu.memory_space<vmem>>, vector<1x8x40xf32>,
    return
  }
  func.func @transform_0(%arg0: i32, %arg1: i32) -> (i32, i32, i32) {
    %c0_i32 = arith.constant 0 : i32
    %c0_i32_0 = arith.constant 0 : i32
    return %arg0, %c0_i32, %arg1 : i32, i32, i32
  }
  func.func @transform_1(%arg0: i32, %arg1: i32) -> (i32, i32) {
    %c0_i32 = arith.constant 0 : i32
    %c0_i32_0 = arith.constant 0 : i32
    %c0_i32_1 = arith.constant 0 : i32
    return %c0_i32, %c0_i32_0 : i32, i32
  }
  func.func @transform_2(%arg0: i32, %arg1: i32) -> (i32, i32) {
    %c0_i32 = arith.constant 0 : i32
    %c0_i32_0 = arith.constant 0 : i32
    %c0_i32_1 = arith.constant 0 : i32
    return %c0_i32, %c0_i32_0 : i32, i32
  }
  func.func @transform_3(%arg0: i32, %arg1: i32) -> (i32, i32) {
    %c0_i32 = arith.constant 0 : i32
    %c0_i32_0 = arith.constant 0 : i32
    %c0_i32_1 = arith.constant 0 : i32
    return %c0_i32, %c0_i32_0 : i32, i32
  }
  func.func @transform_4(%arg0: i32, %arg1: i32) -> (i32, i32) {
    %c0_i32 = arith.constant 0 : i32
    %c0_i32_0 = arith.constant 0 : i32
    %c0_i32_1 = arith.constant 0 : i32
    return %c0_i32, %c0_i32_0 : i32, i32
  }
  func.func @transform_5(%arg0: i32, %arg1: i32) -> (i32, i32) {
    %c0_i32 = arith.constant 0 : i32
    %c0_i32_0 = arith.constant 0 : i32
    %c0_i32_1 = arith.constant 0 : i32
    return %c0_i32, %c0_i32_0 : i32, i32
  }
  func.func @transform_6(%arg0: i32, %arg1: i32) -> (i32, i32, i32) {
    %c0_i32 = arith.constant 0 : i32
    %c0_i32_0 = arith.constant 0 : i32
    return %arg0, %c0_i32, %arg1 : i32, i32, i32
  }
}

module attributes {stable_mosaic.version = 11 : i64} {
  func.func @_conv_bn_stats_kernel(%arg0: i32, %arg1: i32, %arg2: memref<1x8x144xf32, #tpu.memory_space<vmem>>, %arg3: memref<8x8xf32, #tpu.memory_space<vmem>>, %arg4: memref<8x1xf32, #tpu.memory_space<vmem>>, %arg5: memref<8x1xf32, #tpu.memory_space<vmem>>) attributes {dimension_semantics = [#tpu.dimension_semantics<arbitrary>, #tpu.dimension_semantics<arbitrary>], iteration_bounds = array<i64: 2, 1>, scalar_prefetch = 0 : i64, scratch_operands = 0 : i64, tpu.core_type = #tpu.core_type<tc>, window_params = [{transform_indices = @transform_0, window_bounds = array<i64: 1, 8, 144>}, {pipeline_mode = #tpu.pipeline_mode<synchronous>, transform_indices = @transform_1, window_bounds = array<i64: 8, 8>}, {pipeline_mode = #tpu.pipeline_mode<synchronous>, transform_indices = @transform_2, window_bounds = array<i64: 8, 1>}, {pipeline_mode = #tpu.pipeline_mode<synchronous>, transform_indices = @transform_3, window_bounds = array<i64: 8, 1>}]} {
    %c0_i32 = arith.constant 0 : i32
    %0 = arith.cmpi eq, %arg0, %c0_i32 : i32
    %c0_i32_0 = arith.constant 0 : i32
    %1 = arith.cmpi eq, %arg1, %c0_i32_0 : i32
    %2 = arith.andi %0, %1 : i1
    %3 = arith.extui %2 : i1 to i32
    %c0_i32_1 = arith.constant 0 : i32
    %4 = arith.cmpi ne, %3, %c0_i32_1 : i32
    scf.if %4 {
      %cst_16 = arith.constant 0.000000e+00 : f32
      %20 = vector.broadcast %cst_16 : f32 to vector<8x1xf32>
      %c0_17 = arith.constant 0 : index
      %c0_18 = arith.constant 0 : index
      %21 = vector.load %arg4[%c0_17, %c0_18] : memref<8x1xf32, #tpu.memory_space<vmem>>, vector<8x1xf32>
      tpu.vector_store %arg4[%c0_17, %c0_18], %20 {strides = array<i32>} : memref<8x1xf32, #tpu.memory_space<vmem>>, vector<8x1xf32>,
      %cst_19 = arith.constant 0.000000e+00 : f32
      %22 = vector.broadcast %cst_19 : f32 to vector<8x1xf32>
      %c0_20 = arith.constant 0 : index
      %c0_21 = arith.constant 0 : index
      %23 = vector.load %arg5[%c0_20, %c0_21] : memref<8x1xf32, #tpu.memory_space<vmem>>, vector<8x1xf32>
      tpu.vector_store %arg5[%c0_20, %c0_21], %22 {strides = array<i32>} : memref<8x1xf32, #tpu.memory_space<vmem>>, vector<8x1xf32>,
    } else {
    }
    %c0 = arith.constant 0 : index
    %c0_2 = arith.constant 0 : index
    %c0_3 = arith.constant 0 : index
    %5 = vector.load %arg2[%c0, %c0_2, %c0_3] : memref<1x8x144xf32, #tpu.memory_space<vmem>>, vector<1x8x144xf32>
    %6 = vector.shape_cast %5 : vector<1x8x144xf32> to vector<8x144xf32>
    %c0_4 = arith.constant 0 : index
    %c0_5 = arith.constant 0 : index
    %7 = vector.load %arg3[%c0_4, %c0_5] : memref<8x8xf32, #tpu.memory_space<vmem>>, vector<8x8xf32>
    %cst = arith.constant dense<0.000000e+00> : vector<8x144xf32>
    %8 = tpu.matmul %7, %6, %cst {dimension_numbers = #tpu.dot_dimension_numbers<[1], [0], [0], [1], [0, 0, 1, 1], [], []>} : vector<8x8xf32>, vector<8x144xf32>, vector<8x144xf32> -> vector<8x144xf32>
    %c0_6 = arith.constant 0 : index
    %c0_7 = arith.constant 0 : index
    %9 = vector.load %arg4[%c0_6, %c0_7] : memref<8x1xf32, #tpu.memory_space<vmem>>, vector<8x1xf32>
    %cst_8 = arith.constant dense<0.000000e+00> : vector<8xf32>
    %10 = vector.multi_reduction <add>, %8, %cst_8 [1] : vector<8x144xf32> to vector<8xf32>
    %11 = vector.shape_cast %10 : vector<8xf32> to vector<8x1xf32>
    %12 = arith.addf %9, %11 : vector<8x1xf32>
    %c0_9 = arith.constant 0 : index
    %c0_10 = arith.constant 0 : index
    %13 = vector.load %arg4[%c0_9, %c0_10] : memref<8x1xf32, #tpu.memory_space<vmem>>, vector<8x1xf32>
    tpu.vector_store %arg4[%c0_9, %c0_10], %12 {strides = array<i32>} : memref<8x1xf32, #tpu.memory_space<vmem>>, vector<8x1xf32>,
    %c0_11 = arith.constant 0 : index
    %c0_12 = arith.constant 0 : index
    %14 = vector.load %arg5[%c0_11, %c0_12] : memref<8x1xf32, #tpu.memory_space<vmem>>, vector<8x1xf32>
    %15 = arith.mulf %8, %8 : vector<8x144xf32>
    %cst_13 = arith.constant dense<0.000000e+00> : vector<8xf32>
    %16 = vector.multi_reduction <add>, %15, %cst_13 [1] : vector<8x144xf32> to vector<8xf32>
    %17 = vector.shape_cast %16 : vector<8xf32> to vector<8x1xf32>
    %18 = arith.addf %14, %17 : vector<8x1xf32>
    %c0_14 = arith.constant 0 : index
    %c0_15 = arith.constant 0 : index
    %19 = vector.load %arg5[%c0_14, %c0_15] : memref<8x1xf32, #tpu.memory_space<vmem>>, vector<8x1xf32>
    tpu.vector_store %arg5[%c0_14, %c0_15], %18 {strides = array<i32>} : memref<8x1xf32, #tpu.memory_space<vmem>>, vector<8x1xf32>,
    return
  }
  func.func @transform_0(%arg0: i32, %arg1: i32) -> (i32, i32, i32) {
    %c0_i32 = arith.constant 0 : i32
    %c0_i32_0 = arith.constant 0 : i32
    return %arg0, %c0_i32, %arg1 : i32, i32, i32
  }
  func.func @transform_1(%arg0: i32, %arg1: i32) -> (i32, i32) {
    %c0_i32 = arith.constant 0 : i32
    %c0_i32_0 = arith.constant 0 : i32
    %c0_i32_1 = arith.constant 0 : i32
    return %c0_i32, %c0_i32_0 : i32, i32
  }
  func.func @transform_2(%arg0: i32, %arg1: i32) -> (i32, i32) {
    %c0_i32 = arith.constant 0 : i32
    %c0_i32_0 = arith.constant 0 : i32
    %c0_i32_1 = arith.constant 0 : i32
    return %c0_i32, %c0_i32_0 : i32, i32
  }
  func.func @transform_3(%arg0: i32, %arg1: i32) -> (i32, i32) {
    %c0_i32 = arith.constant 0 : i32
    %c0_i32_0 = arith.constant 0 : i32
    %c0_i32_1 = arith.constant 0 : i32
    return %c0_i32, %c0_i32_0 : i32, i32
  }
}

module attributes {stable_mosaic.version = 11 : i64} {
  func.func @_conv_bn_relu_apply_kernel(%arg0: i32, %arg1: i32, %arg2: memref<1x8x144xf32, #tpu.memory_space<vmem>>, %arg3: memref<8x8xf32, #tpu.memory_space<vmem>>, %arg4: memref<8x1xf32, #tpu.memory_space<vmem>>, %arg5: memref<8x1xf32, #tpu.memory_space<vmem>>, %arg6: memref<8x1xf32, #tpu.memory_space<vmem>>, %arg7: memref<8x1xf32, #tpu.memory_space<vmem>>, %arg8: memref<1x8x144xf32, #tpu.memory_space<vmem>>) attributes {dimension_semantics = [#tpu.dimension_semantics<parallel>, #tpu.dimension_semantics<parallel>], iteration_bounds = array<i64: 2, 1>, scalar_prefetch = 0 : i64, scratch_operands = 0 : i64, tpu.core_type = #tpu.core_type<tc>, window_params = [{transform_indices = @transform_0, window_bounds = array<i64: 1, 8, 144>}, {pipeline_mode = #tpu.pipeline_mode<synchronous>, transform_indices = @transform_1, window_bounds = array<i64: 8, 8>}, {pipeline_mode = #tpu.pipeline_mode<synchronous>, transform_indices = @transform_2, window_bounds = array<i64: 8, 1>}, {pipeline_mode = #tpu.pipeline_mode<synchronous>, transform_indices = @transform_3, window_bounds = array<i64: 8, 1>}, {pipeline_mode = #tpu.pipeline_mode<synchronous>, transform_indices = @transform_4, window_bounds = array<i64: 8, 1>}, {pipeline_mode = #tpu.pipeline_mode<synchronous>, transform_indices = @transform_5, window_bounds = array<i64: 8, 1>}, {transform_indices = @transform_6, window_bounds = array<i64: 1, 8, 144>}]} {
    %c0 = arith.constant 0 : index
    %c0_0 = arith.constant 0 : index
    %0 = vector.load %arg6[%c0, %c0_0] : memref<8x1xf32, #tpu.memory_space<vmem>>, vector<8x1xf32>
    %cst = arith.constant 0.00347222225 : f32
    %1 = vector.broadcast %cst : f32 to vector<8x1xf32>
    %2 = arith.mulf %0, %1 : vector<8x1xf32>
    %c0_1 = arith.constant 0 : index
    %c0_2 = arith.constant 0 : index
    %3 = vector.load %arg7[%c0_1, %c0_2] : memref<8x1xf32, #tpu.memory_space<vmem>>, vector<8x1xf32>
    %cst_3 = arith.constant 0.00347222225 : f32
    %4 = vector.broadcast %cst_3 : f32 to vector<8x1xf32>
    %5 = arith.mulf %3, %4 : vector<8x1xf32>
    %6 = arith.mulf %2, %2 : vector<8x1xf32>
    %7 = arith.subf %5, %6 : vector<8x1xf32>
    %cst_4 = arith.constant 0.000000e+00 : f32
    %8 = vector.broadcast %cst_4 : f32 to vector<8x1xf32>
    %9 = arith.maximumf %7, %8 : vector<8x1xf32>
    %cst_5 = arith.constant 9.99999974E-6 : f32
    %10 = vector.broadcast %cst_5 : f32 to vector<8x1xf32>
    %11 = arith.addf %9, %10 : vector<8x1xf32>
    %12 = math.rsqrt %11 : vector<8x1xf32>
    %c0_6 = arith.constant 0 : index
    %c0_7 = arith.constant 0 : index
    %13 = vector.load %arg4[%c0_6, %c0_7] : memref<8x1xf32, #tpu.memory_space<vmem>>, vector<8x1xf32>
    %14 = arith.mulf %13, %12 : vector<8x1xf32>
    %c0_8 = arith.constant 0 : index
    %c0_9 = arith.constant 0 : index
    %15 = vector.load %arg5[%c0_8, %c0_9] : memref<8x1xf32, #tpu.memory_space<vmem>>, vector<8x1xf32>
    %16 = arith.mulf %2, %14 : vector<8x1xf32>
    %17 = arith.subf %15, %16 : vector<8x1xf32>
    %c0_10 = arith.constant 0 : index
    %c0_11 = arith.constant 0 : index
    %18 = vector.load %arg3[%c0_10, %c0_11] : memref<8x8xf32, #tpu.memory_space<vmem>>, vector<8x8xf32>
    %c0_12 = arith.constant 0 : index
    %c0_13 = arith.constant 0 : index
    %c0_14 = arith.constant 0 : index
    %19 = vector.load %arg2[%c0_12, %c0_13, %c0_14] : memref<1x8x144xf32, #tpu.memory_space<vmem>>, vector<1x8x144xf32>
    %20 = vector.shape_cast %19 : vector<1x8x144xf32> to vector<8x144xf32>
    %cst_15 = arith.constant dense<0.000000e+00> : vector<8x144xf32>
    %21 = tpu.matmul %18, %20, %cst_15 {dimension_numbers = #tpu.dot_dimension_numbers<[1], [0], [0], [1], [0, 0, 1, 1], [], []>} : vector<8x8xf32>, vector<8x144xf32>, vector<8x144xf32> -> vector<8x144xf32>
    %22 = vector.broadcast %14 : vector<8x1xf32> to vector<8x144xf32>
    %23 = arith.mulf %21, %22 : vector<8x144xf32>
    %24 = vector.broadcast %17 : vector<8x1xf32> to vector<8x144xf32>
    %25 = arith.addf %23, %24 : vector<8x144xf32>
    %cst_16 = arith.constant 0.000000e+00 : f32
    %26 = vector.broadcast %cst_16 : f32 to vector<8x144xf32>
    %27 = arith.maximumf %25, %26 : vector<8x144xf32>
    %c0_17 = arith.constant 0 : index
    %c0_18 = arith.constant 0 : index
    %c0_19 = arith.constant 0 : index
    %28 = vector.load %arg8[%c0_17, %c0_18, %c0_19] : memref<1x8x144xf32, #tpu.memory_space<vmem>>, vector<1x8x144xf32>
    %29 = vector.shape_cast %28 : vector<1x8x144xf32> to vector<8x144xf32>
    %30 = vector.shape_cast %27 : vector<8x144xf32> to vector<1x8x144xf32>
    tpu.vector_store %arg8[%c0_17, %c0_18, %c0_19], %30 {strides = array<i32>} : memref<1x8x144xf32, #tpu.memory_space<vmem>>, vector<1x8x144xf32>,
    return
  }
  func.func @transform_0(%arg0: i32, %arg1: i32) -> (i32, i32, i32) {
    %c0_i32 = arith.constant 0 : i32
    %c0_i32_0 = arith.constant 0 : i32
    return %arg0, %c0_i32, %arg1 : i32, i32, i32
  }
  func.func @transform_1(%arg0: i32, %arg1: i32) -> (i32, i32) {
    %c0_i32 = arith.constant 0 : i32
    %c0_i32_0 = arith.constant 0 : i32
    %c0_i32_1 = arith.constant 0 : i32
    return %c0_i32, %c0_i32_0 : i32, i32
  }
  func.func @transform_2(%arg0: i32, %arg1: i32) -> (i32, i32) {
    %c0_i32 = arith.constant 0 : i32
    %c0_i32_0 = arith.constant 0 : i32
    %c0_i32_1 = arith.constant 0 : i32
    return %c0_i32, %c0_i32_0 : i32, i32
  }
  func.func @transform_3(%arg0: i32, %arg1: i32) -> (i32, i32) {
    %c0_i32 = arith.constant 0 : i32
    %c0_i32_0 = arith.constant 0 : i32
    %c0_i32_1 = arith.constant 0 : i32
    return %c0_i32, %c0_i32_0 : i32, i32
  }
  func.func @transform_4(%arg0: i32, %arg1: i32) -> (i32, i32) {
    %c0_i32 = arith.constant 0 : i32
    %c0_i32_0 = arith.constant 0 : i32
    %c0_i32_1 = arith.constant 0 : i32
    return %c0_i32, %c0_i32_0 : i32, i32
  }
  func.func @transform_5(%arg0: i32, %arg1: i32) -> (i32, i32) {
    %c0_i32 = arith.constant 0 : i32
    %c0_i32_0 = arith.constant 0 : i32
    %c0_i32_1 = arith.constant 0 : i32
    return %c0_i32, %c0_i32_0 : i32, i32
  }
  func.func @transform_6(%arg0: i32, %arg1: i32) -> (i32, i32, i32) {
    %c0_i32 = arith.constant 0 : i32
    %c0_i32_0 = arith.constant 0 : i32
    return %arg0, %c0_i32, %arg1 : i32, i32, i32
  }
}

module attributes {stable_mosaic.version = 11 : i64} {
  func.func @_add3_conv_kernel(%arg0: i32, %arg1: i32, %arg2: memref<1x4x256xf32, #tpu.memory_space<vmem>>, %arg3: memref<1x4x256xf32, #tpu.memory_space<vmem>>, %arg4: memref<1x4x256xf32, #tpu.memory_space<vmem>>, %arg5: memref<8x4xf32, #tpu.memory_space<vmem>>, %arg6: memref<1x8x256xf32, #tpu.memory_space<vmem>>) attributes {dimension_semantics = [#tpu.dimension_semantics<parallel>, #tpu.dimension_semantics<parallel>], iteration_bounds = array<i64: 2, 1>, scalar_prefetch = 0 : i64, scratch_operands = 0 : i64, tpu.core_type = #tpu.core_type<tc>, window_params = [{transform_indices = @transform_0, window_bounds = array<i64: 1, 4, 256>}, {transform_indices = @transform_1, window_bounds = array<i64: 1, 4, 256>}, {transform_indices = @transform_2, window_bounds = array<i64: 1, 4, 256>}, {pipeline_mode = #tpu.pipeline_mode<synchronous>, transform_indices = @transform_3, window_bounds = array<i64: 8, 4>}, {transform_indices = @transform_4, window_bounds = array<i64: 1, 8, 256>}]} {
    %c0 = arith.constant 0 : index
    %c0_0 = arith.constant 0 : index
    %c0_1 = arith.constant 0 : index
    %0 = vector.load %arg2[%c0, %c0_0, %c0_1] : memref<1x4x256xf32, #tpu.memory_space<vmem>>, vector<1x4x256xf32>
    %1 = vector.shape_cast %0 : vector<1x4x256xf32> to vector<4x256xf32>
    %c0_2 = arith.constant 0 : index
    %c0_3 = arith.constant 0 : index
    %c0_4 = arith.constant 0 : index
    %2 = vector.load %arg3[%c0_2, %c0_3, %c0_4] : memref<1x4x256xf32, #tpu.memory_space<vmem>>, vector<1x4x256xf32>
    %3 = vector.shape_cast %2 : vector<1x4x256xf32> to vector<4x256xf32>
    %4 = arith.addf %1, %3 : vector<4x256xf32>
    %c0_5 = arith.constant 0 : index
    %c0_6 = arith.constant 0 : index
    %c0_7 = arith.constant 0 : index
    %5 = vector.load %arg4[%c0_5, %c0_6, %c0_7] : memref<1x4x256xf32, #tpu.memory_space<vmem>>, vector<1x4x256xf32>
    %6 = vector.shape_cast %5 : vector<1x4x256xf32> to vector<4x256xf32>
    %7 = arith.addf %4, %6 : vector<4x256xf32>
    %c0_8 = arith.constant 0 : index
    %c0_9 = arith.constant 0 : index
    %8 = vector.load %arg5[%c0_8, %c0_9] : memref<8x4xf32, #tpu.memory_space<vmem>>, vector<8x4xf32>
    %cst = arith.constant dense<0.000000e+00> : vector<8x256xf32>
    %9 = tpu.matmul %8, %7, %cst {dimension_numbers = #tpu.dot_dimension_numbers<[1], [0], [0], [1], [0, 0, 1, 1], [], []>} : vector<8x4xf32>, vector<4x256xf32>, vector<8x256xf32> -> vector<8x256xf32>
    %c0_10 = arith.constant 0 : index
    %c0_11 = arith.constant 0 : index
    %c0_12 = arith.constant 0 : index
    %10 = vector.load %arg6[%c0_10, %c0_11, %c0_12] : memref<1x8x256xf32, #tpu.memory_space<vmem>>, vector<1x8x256xf32>
    %11 = vector.shape_cast %10 : vector<1x8x256xf32> to vector<8x256xf32>
    %12 = vector.shape_cast %9 : vector<8x256xf32> to vector<1x8x256xf32>
    tpu.vector_store %arg6[%c0_10, %c0_11, %c0_12], %12 {strides = array<i32>} : memref<1x8x256xf32, #tpu.memory_space<vmem>>, vector<1x8x256xf32>,
    return
  }
  func.func @transform_0(%arg0: i32, %arg1: i32) -> (i32, i32, i32) {
    %c0_i32 = arith.constant 0 : i32
    %c0_i32_0 = arith.constant 0 : i32
    return %arg0, %c0_i32, %arg1 : i32, i32, i32
  }
  func.func @transform_1(%arg0: i32, %arg1: i32) -> (i32, i32, i32) {
    %c0_i32 = arith.constant 0 : i32
    %c0_i32_0 = arith.constant 0 : i32
    return %arg0, %c0_i32, %arg1 : i32, i32, i32
  }
  func.func @transform_2(%arg0: i32, %arg1: i32) -> (i32, i32, i32) {
    %c0_i32 = arith.constant 0 : i32
    %c0_i32_0 = arith.constant 0 : i32
    return %arg0, %c0_i32, %arg1 : i32, i32, i32
  }
  func.func @transform_3(%arg0: i32, %arg1: i32) -> (i32, i32) {
    %c0_i32 = arith.constant 0 : i32
    %c0_i32_0 = arith.constant 0 : i32
    %c0_i32_1 = arith.constant 0 : i32
    return %c0_i32, %c0_i32_0 : i32, i32
  }
  func.func @transform_4(%arg0: i32, %arg1: i32) -> (i32, i32, i32) {
    %c0_i32 = arith.constant 0 : i32
    %c0_i32_0 = arith.constant 0 : i32
    return %arg0, %c0_i32, %arg1 : i32, i32, i32
  }
}

</mosaic_0001>

<llo_original>
// kernel: spectral_transform2d.7
$region0: #{spectral_transform2d.7}
  #allocation0 [shape = 'u32[]', space=smem, size = 0x4, offset = 0x4, fixed_abs, tag = 'smem constant byte address 0x4 - core index']
  #allocation1 [shape = 'u32[144,128]{1,0:T(1,128)}', space=vmem, size = 0x12000, scoped, tag = 'internal scratch']
  %s0 = inlined_call_operand.vmem [shape: f32[2,4,256], index: 0, kind: input, shape index: {}]
  %s1 = inlined_call_operand.vmem [shape: f32[4,4], index: 1, kind: input, shape index: {}]
  %s2 = inlined_call_operand.vmem [shape: f32[4,1], index: 2, kind: output, shape index: {0}]
  %s3 = inlined_call_operand.vmem [shape: f32[4,1], index: 3, kind: output, shape index: {1}]
  %4 = xla_tuple %s2, %s3
  %s5 = sld [smem:[#allocation0]]
  $region53: #{spectral_transform2d.7} parent=0
    _
  %s7 = ssub.s32 1, %s5
  %s8 = scalar_select 0, %s7, %s5
  loop: start=0, step=1, limit=4
  $region2: #{spectral_transform2d.7} parent=0 // loop_pre_header
    _
  $region3: #{spectral_transform2d.7} parent=0 // loop_header
    %s10 = sphi 0, %s14
    %p11 = scmp.ge.s32.totalorder %s10, 4
    %s17 = sphi 0, %s29
    %s18 = sphi 0, %s25
    %s19 = sphi 0, %s17
    %s20 = sphi 0, %s18
    %s21 = sphi 0, %s19
    %s22 = sphi 0, %s20
    %s34 = sphi 0, %s36
    %s37 = sphi 0, %s34
    %s38 = sphi 0, %s37
    %s54 = sphi 0, %s38
    %s58 = sphi 0, %s58
    %s60 = sphi 0, %s58
    %s61 = sphi 0, %s60
    %s75 = sphi 0, %s61
    %s79 = sphi 0, %s79
    %s81 = sphi 0, %s79
    %s82 = sphi 0, %s81
    %s96 = sphi 0, %s82
    %s100 = sphi 0, %s100
    %s102 = sphi 0, %s100
    %s103 = sphi 0, %s102
    %s117 = sphi 0, %s103
  $region4: #{spectral_transform2d.7} parent=0 // loop_header_branch
    %13 = sbr.rel (%p11) target = $region8
  $region5: #{spectral_transform2d.7} parent=0 // loop_body
    %s15 = ssub.s32 %s10, 1
    %s16 = ssub.s32 %s10, 2
    %s23 = sadd.s32 1, %s18
    %p24 = scmp.ge.s32.totalorder %s23, 1
    %s25 = scalar_select %p24, 0, %s23
    %s26 = sadd.s32 1, %s17
    %s27 = scalar_select %p24, %s26, %s17
    %p28 = scmp.ge.s32.totalorder %s27, 2
    %s29 = scalar_select %p28, 0, %s27
    %s30 = ssub.s32 %s17, %s29
    %s31 = ssub.s32 %s18, %s25
    %s32 = sor.u32 %s30, %s31
    %p33 = scmp.eq.s32.totalorder %s32, 0
    %s35 = sadd.s32 %s34, 1
    %s36 = scalar_select %p33, %s34, %s35
    %p39 = pneg %p33
    %p40 = scmp.eq.s32.totalorder %s10, 1
    %p41 = por %p39, %p40
    %p42 = scmp.ne.s32.totalorder %s34, %s37
    %p43 = scmp.eq.s32.totalorder %s10, 0
    %p44 = por %p42, %p43
    %p45 = scmp.ne.s32.totalorder %s34, %s37
    %p46 = scmp.eq.s32.totalorder %s15, 1
    %p47 = por %p45, %p46
    %p48 = scmp.ne.s32.totalorder %s37, %s38
    %p49 = scmp.eq.s32.totalorder %s15, 0
    %p50 = por %p48, %p49
    %p51 = scmp.ne.s32.totalorder %s37, %s38
    %p52 = scmp.eq.s32.totalorder %s16, 1
    %p53 = por %p51, %p52
    %p55 = scmp.ne.s32.totalorder %s38, %s54
    %p56 = scmp.eq.s32.totalorder %s16, 0
    %p57 = por %p55, %p56
    %s59 = sadd.s32 %s58, 1
    %p62 = scmp.eq.s32.totalorder %s10, 1
    %p63 = scmp.ne.s32.totalorder %s58, %s60
    %p64 = scmp.eq.s32.totalorder %s10, 0
    %p65 = por %p63, %p64
    %p66 = scmp.ne.s32.totalorder %s58, %s60
    %p67 = scmp.eq.s32.totalorder %s15, 1
    %p68 = por %p66, %p67
    %p69 = scmp.ne.s32.totalorder %s60, %s61
    %p70 = scmp.eq.s32.totalorder %s15, 0
    %p71 = por %p69, %p70
    %p72 = scmp.ne.s32.totalorder %s60, %s61
    %p73 = scmp.eq.s32.totalorder %s16, 1
    %p74 = por %p72, %p73
    %p76 = scmp.ne.s32.totalorder %s61, %s75
    %p77 = scmp.eq.s32.totalorder %s16, 0
    %p78 = por %p76, %p77
    %s80 = sadd.s32 %s79, 1
    %p83 = scmp.eq.s32.totalorder %s10, 1
    %p84 = scmp.ne.s32.totalorder %s79, %s81
    %p85 = scmp.eq.s32.totalorder %s10, 0
    %p86 = por %p84, %p85
    %p87 = scmp.ne.s32.totalorder %s79, %s81
    %p88 = scmp.eq.s32.totalorder %s15, 1
    %p89 = por %p87, %p88
    %p90 = scmp.ne.s32.totalorder %s81, %s82
    %p91 = scmp.eq.s32.totalorder %s15, 0
    %p92 = por %p90, %p91
    %p93 = scmp.ne.s32.totalorder %s81, %s82
    %p94 = scmp.eq.s32.totalorder %s16, 1
    %p95 = por %p93, %p94
    %p97 = scmp.ne.s32.totalorder %s82, %s96
    %p98 = scmp.eq.s32.totalorder %s16, 0
    %p99 = por %p97, %p98
    %s101 = sadd.s32 %s100, 1
    %p104 = scmp.eq.s32.totalorder %s10, 1
    %p105 = scmp.ne.s32.totalorder %s100, %s102
    %p106 = scmp.eq.s32.totalorder %s10, 0
    %p107 = por %p105, %p106
    %p108 = scmp.ne.s32.totalorder %s100, %s102
    %p109 = scmp.eq.s32.totalorder %s15, 1
    %p110 = por %p108, %p109
    %p111 = scmp.ne.s32.totalorder %s102, %s103
    %p112 = scmp.eq.s32.totalorder %s15, 0
    %p113 = por %p111, %p112
    %p114 = scmp.ne.s32.totalorder %s102, %s103
    %p115 = scmp.eq.s32.totalorder %s16, 1
    %p116 = por %p114, %p115
    %p118 = scmp.ne.s32.totalorder %s103, %s117
    %p119 = scmp.eq.s32.totalorder %s16, 0
    %p120 = por %p118, %p119
    %p121 = scmp.le.s32.totalorder 1, %s10
    %p122 = scmp.lt.s32.totalorder %s10, 3
    %p123 = pnand %p121, %p122
    %p124 = pneg %p123
    // Predicated region
    $region9: #{spectral_transform2d.7} parent=5 // pred_check
      _
    $region10: #{spectral_transform2d.7} parent=5 // pred_check_branch
      %126 = sbr.rel (%p123) target = $region12
    $region11: #{spectral_transform2d.7} parent=5 // pred_region
      %s127 = ssub.s32 %s10, 1
      // Predicated region
      $region13: #{spectral_transform2d.7} parent=11 // pred_check
        %p128 = pneg %p71
      $region14: #{spectral_transform2d.7} parent=11 // pred_check_branch
        %130 = sbr.rel (%p128) target = $region16
      $region15: #{spectral_transform2d.7} parent=11 // pred_region
        _
      $region16: #{spectral_transform2d.7} parent=11 // pred_fallthru
        _
    $region12: #{spectral_transform2d.7} parent=5 // pred_fallthru
      _
    %p131 = scmp.lt.s32.totalorder %s10, 2
    // Predicated region
    $region17: #{spectral_transform2d.7} parent=5 // pred_check
      %p132 = pneg %p131
    $region18: #{spectral_transform2d.7} parent=5 // pred_check_branch
      %134 = sbr.rel (%p132) target = $region20
    $region19: #{spectral_transform2d.7} parent=5 // pred_region
      // Predicated region
      $region21: #{spectral_transform2d.7} parent=19 // pred_check
        %p135 = pneg %p44
      $region22: #{spectral_transform2d.7} parent=19 // pred_check_branch
        %137 = sbr.rel (%p135) target = $region24
      $region23: #{spectral_transform2d.7} parent=19 // pred_region
        %s138 = smul.u32 2, %s18
        %p139 = scmp.lt.s32.totalorder %s17, 1
        %s140 = scalar_select %p139, %s17, 1
        %p141 = scmp.lt.s32.totalorder %s138, 1
        %s142 = scalar_select %p141, %s138, 1
        %s143 = smul.addr %s140, 2
        %s144 = sadd.s32 %s142, %s143
        %s145 = smul.addr %s144, 4
        %s146 = scalar_lea.vmem %s0, %s145
        %s147 = smul.u32 2, %s18
      $region24: #{spectral_transform2d.7} parent=19 // pred_fallthru
        _
    $region20: #{spectral_transform2d.7} parent=5 // pred_fallthru
      _
    %p148 = scmp.le.s32.totalorder 1, %s10
    %p149 = scmp.lt.s32.totalorder %s10, 3
    %p150 = pnand %p148, %p149
    %p151 = pneg %p150
    // Predicated region
    $region25: #{spectral_transform2d.7} parent=5 // pred_check
      _
    $region26: #{spectral_transform2d.7} parent=5 // pred_check_branch
      %153 = sbr.rel (%p150) target = $region28
    $region27: #{spectral_transform2d.7} parent=5 // pred_region
      %s154 = ssub.s32 %s10, 1
      %s155 = smul.u32 2, %s20
      %p156 = scmp.lt.s32.totalorder %s19, 1
      %s157 = scalar_select %p156, %s19, 1
      %p158 = scmp.lt.s32.totalorder %s155, 1
      %s159 = scalar_select %p158, %s155, 1
      %s160 = smul.addr %s157, 2
      %s161 = sadd.s32 %s159, %s160
      %s162 = smul.addr %s161, 4
      %s163 = scalar_lea.vmem %s0, %s162
      %p164 = pneg %p50
      %p165 = pneg %p47
      %p166 = pneg %p71
      %p167 = pneg %p68
      %p168 = pneg %p92
      %p169 = pneg %p89
      %p170 = pneg %p113
      %p171 = pneg %p110
      %s172 = smul.u32 2, %s20
      %p173 = scmp.lt.s32.totalorder %s19, 1
      %s174 = scalar_select %p173, %s19, 1
      %p175 = scmp.lt.s32.totalorder %s172, 1
      %s176 = scalar_select %p175, %s172, 1
      %s177 = smul.addr %s174, 2
      %s178 = sadd.s32 %s176, %s177
      %s179 = smul.addr %s178, 4
      %s180 = scalar_lea.vmem %s0, %s179
      %s181 = smul.u32 2, %s20
      %p182 = scmp.eq.s32.totalorder %s19, 0
      %p183 = scmp.eq.s32.totalorder %s20, 0
      %p184 = pnand %p182, %p183
      %p185 = pneg %p184
      // Predicated region
      $region29: #{spectral_transform2d.7} parent=27 // pred_check
        _
      $region30: #{spectral_transform2d.7} parent=27 // pred_check_branch
        %187 = sbr.rel (%p184) target = $region32
      $region31: #{spectral_transform2d.7} parent=27 // pred_region
        %vm188 = vcmask 3072
        %189 = vst.msk [vmem:[%s2] sm:$0xf] %vm188, 0.0
        %190 = vst.msk [vmem:[%s3] sm:$0xf] %vm188, 0.0
      $region32: #{spectral_transform2d.7} parent=27 // pred_fallthru
        _
      %v191 = vld [vmem:[%s180] sm:$0xff]
      %v192 = vld [vmem:[%s1] sm:$0xf]
      %v194 = vcombine.high %v191, %v191
      %vm195 = vcmask 31744
      %v197 = vsel %vm195, %v192, 0
      %vm199 = vcmask 1043456
      %v200 = vsel %vm199, %v191, 0
      %v202 = vsel %vm199, %v194, 0
      %204 = vmatprep.subr.mxu0 0.0
      %205 = vmatpush1.msra.mxu0 0.0
      %206 = vmatprep.subr.mxu0 0.0
      %207 = vmatpush1.msra.mxu0 0.0
      %208 = vmatprep.subr.mxu0 0.0
      %209 = vmatpush1.msra.mxu0 0.0
      %210 = vmatprep.subr.mxu0 0.0
      %211 = vmatpush1.msra.mxu0 0.0
      %212 = vmatprep.subr.mxu0 0.0
      %213 = vmatpush1.msra.mxu0 0.0
      %214 = vmatprep.subr.mxu0 0.0
      %215 = vmatpush1.msra.mxu0 0.0
      %216 = vmatprep.subr.mxu0 0.0
      %217 = vmatpush1.msra.mxu0 0.0
      %218 = vmatprep.subr.mxu0 0.0
      %219 = vmatpush1.msra.mxu0 0.0
      %220 = vmatprep.subr.mxu0 0.0
      %221 = vmatpush1.msra.mxu0 0.0
      %222 = vmatprep.subr.mxu0 0.0
      %223 = vmatpush1.msra.mxu0 0.0
      %224 = vmatprep.subr.mxu0 0.0
      %225 = vmatpush1.msra.mxu0 0.0
      %226 = vmatprep.subr.mxu0 0.0
      %227 = vmatpush1.msra.mxu0 0.0
      %228 = vmatprep.subr.mxu0 0.0
      %229 = vmatpush1.msra.mxu0 0.0
      %230 = vmatprep.subr.mxu0 0.0
      %231 = vmatpush1.msra.mxu0 0.0
      %232 = vmatprep.subr.mxu0 0.0
      %233 = vmatpush1.msra.mxu0 0.0
      %234 = vmatprep.subr.mxu0 %v202
      %235 = vmatpush1.msra.mxu0 %v200
      %236 = vmatprep.subr.mxu0 0.0
      %237 = vmatpush2.msra.mxu0 0.0
      %238 = vmatprep.subr.mxu0 0.0
      %239 = vmatpush2.msra.mxu0 0.0
      %240 = vmatprep.subr.mxu0 0.0
      %241 = vmatpush2.msra.mxu0 0.0
      %242 = vmatprep.subr.mxu0 0.0
      %243 = vmatpush2.msra.mxu0 0.0
      %244 = vmatprep.subr.mxu0 0.0
      %245 = vmatpush2.msra.mxu0 0.0
      %246 = vmatprep.subr.mxu0 0.0
      %247 = vmatpush2.msra.mxu0 0.0
      %248 = vmatprep.subr.mxu0 0.0
      %249 = vmatpush2.msra.mxu0 0.0
      %250 = vmatprep.subr.mxu0 0.0
      %251 = vmatpush2.msra.mxu0 0.0
      %252 = vmatprep.subr.mxu0 0.0
      %253 = vmatpush2.msra.mxu0 0.0
      %254 = vmatprep.subr.mxu0 0.0
      %255 = vmatpush2.msra.mxu0 0.0
      %256 = vmatprep.subr.mxu0 0.0
      %257 = vmatpush2.msra.mxu0 0.0
      %258 = vmatprep.subr.mxu0 0.0
      %259 = vmatpush2.msra.mxu0 0.0
      %260 = vmatprep.subr.mxu0 0.0
      %261 = vmatpush2.msra.mxu0 0.0
      %262 = vmatprep.subr.mxu0 0.0
      %263 = vmatpush2.msra.mxu0 0.0
      %264 = vmatprep.subr.mxu0 0.0
      %265 = vmatpush2.msra.mxu0 0.0
      %266 = vmatprep.subr.mxu0 0.0
      %267 = vmatpush2.msra.mxu0 0.0
      %268 = vmatprep.mubr.f32.mxu0 0.0
      %269 = vmatmul.mubr.f32.gmra.mxu0 %v197
      %v270 = vpop.f32.mrf.mxu0
      %v271 = vadd.f32 0.0, %v270
      %v272 = vpop.f32.mrf.mxu0
      %v273 = vadd.f32 0.0, %v272
      %274 = vdwg.mxu0
      %v275 = vld [vmem:[%s2] sm:$0xf]
      %v276 = vsel %vm199, %v271, 0.0
      %v277 = vsel %vm199, %v273, 0.0
      %v278 = vadd.f32 %v276, %v277
      %279 = vadd.xlane.f32.xlu0 %v278
      %v280 = vpop.xlane.xlu0 %279
      %v281 = vadd.f32 %v275, %v280
      %vm282 = vcmask 3072
      %283 = vst.msk [vmem:[%s2] sm:$0xf] %vm282, %v281
      %v284 = vld [vmem:[%s3] sm:$0xf]
      %v285 = vmul.f32 %v271, %v271
      %v286 = vmul.f32 %v273, %v273
      %v287 = vsel %vm199, %v285, 0.0
      %v288 = vsel %vm199, %v286, 0.0
      %v289 = vadd.f32 %v287, %v288
      %290 = vadd.xlane.f32.xlu0 %v289
      %v291 = vpop.xlane.xlu0 %290
      %v292 = vadd.f32 %v284, %v291
      %293 = vst.msk [vmem:[%s3] sm:$0xf] %vm282, %v292
      // Predicated region
      $region33: #{spectral_transform2d.7} parent=27 // pred_check
        %p294 = pneg %p89
      $region34: #{spectral_transform2d.7} parent=27 // pred_check_branch
        %296 = sbr.rel (%p294) target = $region36
      $region35: #{spectral_transform2d.7} parent=27 // pred_region
        _
      $region36: #{spectral_transform2d.7} parent=27 // pred_fallthru
        _
      // Predicated region
      $region37: #{spectral_transform2d.7} parent=27 // pred_check
        %p297 = pneg %p110
      $region38: #{spectral_transform2d.7} parent=27 // pred_check_branch
        %299 = sbr.rel (%p297) target = $region40
      $region39: #{spectral_transform2d.7} parent=27 // pred_region
        _
      $region40: #{spectral_transform2d.7} parent=27 // pred_fallthru
        _
      // Predicated region
      $region41: #{spectral_transform2d.7} parent=27 // pred_check
        %p300 = pneg %p89
      $region42: #{spectral_transform2d.7} parent=27 // pred_check_branch
        %302 = sbr.rel (%p300) target = $region44
      $region43: #{spectral_transform2d.7} parent=27 // pred_region
        _
      $region44: #{spectral_transform2d.7} parent=27 // pred_fallthru
        _
      // Predicated region
      $region45: #{spectral_transform2d.7} parent=27 // pred_check
        %p303 = pneg %p110
      $region46: #{spectral_transform2d.7} parent=27 // pred_check_branch
        %305 = sbr.rel (%p303) target = $region48
      $region47: #{spectral_transform2d.7} parent=27 // pred_region
        _
      $region48: #{spectral_transform2d.7} parent=27 // pred_fallthru
        _
    $region28: #{spectral_transform2d.7} parent=5 // pred_fallthru
      _
    %p306 = scmp.le.s32.totalorder 2, %s10
    // Predicated region
    $region49: #{spectral_transform2d.7} parent=5 // pred_check
      %p307 = pneg %p306
    $region50: #{spectral_transform2d.7} parent=5 // pred_check_branch
      %309 = sbr.rel (%p307) target = $region52
    $region51: #{spectral_transform2d.7} parent=5 // pred_region
      %s310 = ssub.s32 %s10, 2
    $region52: #{spectral_transform2d.7} parent=5 // pred_fallthru
      _
  $region6: #{spectral_transform2d.7} parent=0 // loop_footer
    %s14 = sadd.s32 1, %s10
  $region7: #{spectral_transform2d.7} parent=0 // loop_footer_branch
    %9 = sbr.rel target = $region3
  $region8: #{spectral_transform2d.7} parent=0 // loop_exit
    _

// kernel: spectral_transform2d.8
$region0: #{spectral_transform2d.8}
  #allocation0 [shape = 'u32[]', space=smem, size = 0x4, offset = 0x4, fixed_abs, tag = 'smem constant byte address 0x4 - core index']
  #allocation1 [shape = 'u32[144,128]{1,0:T(1,128)}', space=vmem, size = 0x12000, scoped, tag = 'internal scratch']
  %s0 = inlined_call_operand.vmem [shape: f32[2,4,256], index: 0, kind: input, shape index: {}]
  %s1 = inlined_call_operand.vmem [shape: f32[4,4], index: 1, kind: input, shape index: {}]
  %s2 = inlined_call_operand.vmem [shape: f32[4,1], index: 2, kind: input, shape index: {}]
  %s3 = inlined_call_operand.vmem [shape: f32[4,1], index: 3, kind: input, shape index: {}]
  %s4 = inlined_call_operand.vmem [shape: f32[4,1], index: 4, kind: input, shape index: {}]
  %s5 = inlined_call_operand.vmem [shape: f32[4,1], index: 5, kind: input, shape index: {}]
  %s6 = inlined_call_operand.vmem [shape: f32[2,4,256], index: 6, kind: output, shape index: {}]
  %s7 = sld [smem:[#allocation0]]
  $region57: #{spectral_transform2d.8} parent=0
    _
  %s9 = ssub.s32 1, %s7
  %s10 = scalar_select 0, %s9, %s7
  loop: start=0, step=1, limit=4
  $region2: #{spectral_transform2d.8} parent=0 // loop_pre_header
    _
  $region3: #{spectral_transform2d.8} parent=0 // loop_header
    %s12 = sphi 0, %s16
    %p13 = scmp.ge.s32.totalorder %s12, 4
    %s19 = sphi 0, %s31
    %s20 = sphi 0, %s27
    %s21 = sphi 0, %s19
    %s22 = sphi 0, %s20
    %s23 = sphi 0, %s21
    %s24 = sphi 0, %s22
    %s36 = sphi 0, %s38
    %s39 = sphi 0, %s36
    %s40 = sphi 0, %s39
    %s56 = sphi 0, %s40
    %s60 = sphi 0, %s60
    %s62 = sphi 0, %s60
    %s63 = sphi 0, %s62
    %s77 = sphi 0, %s63
    %s81 = sphi 0, %s81
    %s83 = sphi 0, %s81
    %s84 = sphi 0, %s83
    %s98 = sphi 0, %s84
    %s102 = sphi 0, %s102
    %s104 = sphi 0, %s102
    %s105 = sphi 0, %s104
    %s119 = sphi 0, %s105
    %s123 = sphi 0, %s123
    %s125 = sphi 0, %s123
    %s126 = sphi 0, %s125
    %s140 = sphi 0, %s126
    %s144 = sphi 0, %s144
    %s146 = sphi 0, %s144
    %s147 = sphi 0, %s146
    %s161 = sphi 0, %s147
    %s169 = sphi 0, %s171
    %s172 = sphi 0, %s169
    %s173 = sphi 0, %s172
    %s189 = sphi 0, %s173
  $region4: #{spectral_transform2d.8} parent=0 // loop_header_branch
    %15 = sbr.rel (%p13) target = $region8
  $region5: #{spectral_transform2d.8} parent=0 // loop_body
    %s17 = ssub.s32 %s12, 1
    %s18 = ssub.s32 %s12, 2
    %s25 = sadd.s32 1, %s20
    %p26 = scmp.ge.s32.totalorder %s25, 1
    %s27 = scalar_select %p26, 0, %s25
    %s28 = sadd.s32 1, %s19
    %s29 = scalar_select %p26, %s28, %s19
    %p30 = scmp.ge.s32.totalorder %s29, 2
    %s31 = scalar_select %p30, 0, %s29
    %s32 = ssub.s32 %s19, %s31
    %s33 = ssub.s32 %s20, %s27
    %s34 = sor.u32 %s32, %s33
    %p35 = scmp.eq.s32.totalorder %s34, 0
    %s37 = sadd.s32 %s36, 1
    %s38 = scalar_select %p35, %s36, %s37
    %p41 = pneg %p35
    %p42 = scmp.eq.s32.totalorder %s12, 1
    %p43 = por %p41, %p42
    %p44 = scmp.ne.s32.totalorder %s36, %s39
    %p45 = scmp.eq.s32.totalorder %s12, 0
    %p46 = por %p44, %p45
    %p47 = scmp.ne.s32.totalorder %s36, %s39
    %p48 = scmp.eq.s32.totalorder %s17, 1
    %p49 = por %p47, %p48
    %p50 = scmp.ne.s32.totalorder %s39, %s40
    %p51 = scmp.eq.s32.totalorder %s17, 0
    %p52 = por %p50, %p51
    %p53 = scmp.ne.s32.totalorder %s39, %s40
    %p54 = scmp.eq.s32.totalorder %s18, 1
    %p55 = por %p53, %p54
    %p57 = scmp.ne.s32.totalorder %s40, %s56
    %p58 = scmp.eq.s32.totalorder %s18, 0
    %p59 = por %p57, %p58
    %s61 = sadd.s32 %s60, 1
    %p64 = scmp.eq.s32.totalorder %s12, 1
    %p65 = scmp.ne.s32.totalorder %s60, %s62
    %p66 = scmp.eq.s32.totalorder %s12, 0
    %p67 = por %p65, %p66
    %p68 = scmp.ne.s32.totalorder %s60, %s62
    %p69 = scmp.eq.s32.totalorder %s17, 1
    %p70 = por %p68, %p69
    %p71 = scmp.ne.s32.totalorder %s62, %s63
    %p72 = scmp.eq.s32.totalorder %s17, 0
    %p73 = por %p71, %p72
    %p74 = scmp.ne.s32.totalorder %s62, %s63
    %p75 = scmp.eq.s32.totalorder %s18, 1
    %p76 = por %p74, %p75
    %p78 = scmp.ne.s32.totalorder %s63, %s77
    %p79 = scmp.eq.s32.totalorder %s18, 0
    %p80 = por %p78, %p79
    %s82 = sadd.s32 %s81, 1
    %p85 = scmp.eq.s32.totalorder %s12, 1
    %p86 = scmp.ne.s32.totalorder %s81, %s83
    %p87 = scmp.eq.s32.totalorder %s12, 0
    %p88 = por %p86, %p87
    %p89 = scmp.ne.s32.totalorder %s81, %s83
    %p90 = scmp.eq.s32.totalorder %s17, 1
    %p91 = por %p89, %p90
    %p92 = scmp.ne.s32.totalorder %s83, %s84
    %p93 = scmp.eq.s32.totalorder %s17, 0
    %p94 = por %p92, %p93
    %p95 = scmp.ne.s32.totalorder %s83, %s84
    %p96 = scmp.eq.s32.totalorder %s18, 1
    %p97 = por %p95, %p96
    %p99 = scmp.ne.s32.totalorder %s84, %s98
    %p100 = scmp.eq.s32.totalorder %s18, 0
    %p101 = por %p99, %p100
    %s103 = sadd.s32 %s102, 1
    %p106 = scmp.eq.s32.totalorder %s12, 1
    %p107 = scmp.ne.s32.totalorder %s102, %s104
    %p108 = scmp.eq.s32.totalorder %s12, 0
    %p109 = por %p107, %p108
    %p110 = scmp.ne.s32.totalorder %s102, %s104
    %p111 = scmp.eq.s32.totalorder %s17, 1
    %p112 = por %p110, %p111
    %p113 = scmp.ne.s32.totalorder %s104, %s105
    %p114 = scmp.eq.s32.totalorder %s17, 0
    %p115 = por %p113, %p114
    %p116 = scmp.ne.s32.totalorder %s104, %s105
    %p117 = scmp.eq.s32.totalorder %s18, 1
    %p118 = por %p116, %p117
    %p120 = scmp.ne.s32.totalorder %s105, %s119
    %p121 = scmp.eq.s32.totalorder %s18, 0
    %p122 = por %p120, %p121
    %s124 = sadd.s32 %s123, 1
    %p127 = scmp.eq.s32.totalorder %s12, 1
    %p128 = scmp.ne.s32.totalorder %s123, %s125
    %p129 = scmp.eq.s32.totalorder %s12, 0
    %p130 = por %p128, %p129
    %p131 = scmp.ne.s32.totalorder %s123, %s125
    %p132 = scmp.eq.s32.totalorder %s17, 1
    %p133 = por %p131, %p132
    %p134 = scmp.ne.s32.totalorder %s125, %s126
    %p135 = scmp.eq.s32.totalorder %s17, 0
    %p136 = por %p134, %p135
    %p137 = scmp.ne.s32.totalorder %s125, %s126
    %p138 = scmp.eq.s32.totalorder %s18, 1
    %p139 = por %p137, %p138
    %p141 = scmp.ne.s32.totalorder %s126, %s140
    %p142 = scmp.eq.s32.totalorder %s18, 0
    %p143 = por %p141, %p142
    %s145 = sadd.s32 %s144, 1
    %p148 = scmp.eq.s32.totalorder %s12, 1
    %p149 = scmp.ne.s32.totalorder %s144, %s146
    %p150 = scmp.eq.s32.totalorder %s12, 0
    %p151 = por %p149, %p150
    %p152 = scmp.ne.s32.totalorder %s144, %s146
    %p153 = scmp.eq.s32.totalorder %s17, 1
    %p154 = por %p152, %p153
    %p155 = scmp.ne.s32.totalorder %s146, %s147
    %p156 = scmp.eq.s32.totalorder %s17, 0
    %p157 = por %p155, %p156
    %p158 = scmp.ne.s32.totalorder %s146, %s147
    %p159 = scmp.eq.s32.totalorder %s18, 1
    %p160 = por %p158, %p159
    %p162 = scmp.ne.s32.totalorder %s147, %s161
    %p163 = scmp.eq.s32.totalorder %s18, 0
    %p164 = por %p162, %p163
    %s165 = ssub.s32 %s19, %s31
    %s166 = ssub.s32 %s20, %s27
    %s167 = sor.u32 %s165, %s166
    %p168 = scmp.eq.s32.totalorder %s167, 0
    %s170 = sadd.s32 %s169, 1
    %s171 = scalar_select %p168, %s169, %s170
    %p174 = pneg %p168
    %p175 = scmp.eq.s32.totalorder %s12, 1
    %p176 = por %p174, %p175
    %p177 = scmp.ne.s32.totalorder %s169, %s172
    %p178 = scmp.eq.s32.totalorder %s12, 0
    %p179 = por %p177, %p178
    %p180 = scmp.ne.s32.totalorder %s169, %s172
    %p181 = scmp.eq.s32.totalorder %s17, 1
    %p182 = por %p180, %p181
    %p183 = scmp.ne.s32.totalorder %s172, %s173
    %p184 = scmp.eq.s32.totalorder %s17, 0
    %p185 = por %p183, %p184
    %p186 = scmp.ne.s32.totalorder %s172, %s173
    %p187 = scmp.eq.s32.totalorder %s18, 1
    %p188 = por %p186, %p187
    %p190 = scmp.ne.s32.totalorder %s173, %s189
    %p191 = scmp.eq.s32.totalorder %s18, 0
    %p192 = por %p190, %p191
    %p193 = scmp.le.s32.totalorder 1, %s12
    %p194 = scmp.lt.s32.totalorder %s12, 3
    %p195 = pnand %p193, %p194
    %p196 = pneg %p195
    // Predicated region
    $region9: #{spectral_transform2d.8} parent=5 // pred_check
      _
    $region10: #{spectral_transform2d.8} parent=5 // pred_check_branch
      %198 = sbr.rel (%p195) target = $region12
    $region11: #{spectral_transform2d.8} parent=5 // pred_region
      %s199 = ssub.s32 %s12, 1
      // Predicated region
      $region13: #{spectral_transform2d.8} parent=11 // pred_check
        %p200 = pneg %p73
      $region14: #{spectral_transform2d.8} parent=11 // pred_check_branch
        %202 = sbr.rel (%p200) target = $region16
      $region15: #{spectral_transform2d.8} parent=11 // pred_region
        _
      $region16: #{spectral_transform2d.8} parent=11 // pred_fallthru
        _
      // Predicated region
      $region17: #{spectral_transform2d.8} parent=11 // pred_check
        %p203 = pneg %p94
      $region18: #{spectral_transform2d.8} parent=11 // pred_check_branch
        %205 = sbr.rel (%p203) target = $region20
      $region19: #{spectral_transform2d.8} parent=11 // pred_region
        _
      $region20: #{spectral_transform2d.8} parent=11 // pred_fallthru
        _
      // Predicated region
      $region21: #{spectral_transform2d.8} parent=11 // pred_check
        %p206 = pneg %p115
      $region22: #{spectral_transform2d.8} parent=11 // pred_check_branch
        %208 = sbr.rel (%p206) target = $region24
      $region23: #{spectral_transform2d.8} parent=11 // pred_region
        _
      $region24: #{spectral_transform2d.8} parent=11 // pred_fallthru
        _
      // Predicated region
      $region25: #{spectral_transform2d.8} parent=11 // pred_check
        %p209 = pneg %p136
      $region26: #{spectral_transform2d.8} parent=11 // pred_check_branch
        %211 = sbr.rel (%p209) target = $region28
      $region27: #{spectral_transform2d.8} parent=11 // pred_region
        _
      $region28: #{spectral_transform2d.8} parent=11 // pred_fallthru
        _
      // Predicated region
      $region29: #{spectral_transform2d.8} parent=11 // pred_check
        %p212 = pneg %p157
      $region30: #{spectral_transform2d.8} parent=11 // pred_check_branch
        %214 = sbr.rel (%p212) target = $region32
      $region31: #{spectral_transform2d.8} parent=11 // pred_region
        _
      $region32: #{spectral_transform2d.8} parent=11 // pred_fallthru
        _
    $region12: #{spectral_transform2d.8} parent=5 // pred_fallthru
      _
    %p215 = scmp.lt.s32.totalorder %s12, 2
    // Predicated region
    $region33: #{spectral_transform2d.8} parent=5 // pred_check
      %p216 = pneg %p215
    $region34: #{spectral_transform2d.8} parent=5 // pred_check_branch
      %218 = sbr.rel (%p216) target = $region36
    $region35: #{spectral_transform2d.8} parent=5 // pred_region
      // Predicated region
      $region37: #{spectral_transform2d.8} parent=35 // pred_check
        %p219 = pneg %p46
      $region38: #{spectral_transform2d.8} parent=35 // pred_check_branch
        %221 = sbr.rel (%p219) target = $region40
      $region39: #{spectral_transform2d.8} parent=35 // pred_region
        %s222 = smul.u32 2, %s20
        %p223 = scmp.lt.s32.totalorder %s19, 1
        %s224 = scalar_select %p223, %s19, 1
        %p225 = scmp.lt.s32.totalorder %s222, 1
        %s226 = scalar_select %p225, %s222, 1
        %s227 = smul.addr %s224, 2
        %s228 = sadd.s32 %s226, %s227
        %s229 = smul.addr %s228, 4
        %s230 = scalar_lea.vmem %s0, %s229
        %s231 = smul.u32 2, %s20
      $region40: #{spectral_transform2d.8} parent=35 // pred_fallthru
        _
    $region36: #{spectral_transform2d.8} parent=5 // pred_fallthru
      _
    %p232 = scmp.le.s32.totalorder 1, %s12
    %p233 = scmp.lt.s32.totalorder %s12, 3
    %p234 = pnand %p232, %p233
    %p235 = pneg %p234
    // Predicated region
    $region41: #{spectral_transform2d.8} parent=5 // pred_check
      _
    $region42: #{spectral_transform2d.8} parent=5 // pred_check_branch
      %237 = sbr.rel (%p234) target = $region44
    $region43: #{spectral_transform2d.8} parent=5 // pred_region
      %s238 = ssub.s32 %s12, 1
      %s239 = smul.u32 2, %s22
      %p240 = scmp.lt.s32.totalorder %s21, 1
      %s241 = scalar_select %p240, %s21, 1
      %p242 = scmp.lt.s32.totalorder %s239, 1
      %s243 = scalar_select %p242, %s239, 1
      %s244 = smul.addr %s241, 2
      %s245 = sadd.s32 %s243, %s244
      %s246 = smul.addr %s245, 4
      %s247 = scalar_lea.vmem %s0, %s246
      %p248 = pneg %p52
      %p249 = pneg %p49
      %p250 = pneg %p73
      %p251 = pneg %p70
      %p252 = pneg %p94
      %p253 = pneg %p91
      %p254 = pneg %p115
      %p255 = pneg %p112
      %p256 = pneg %p136
      %p257 = pneg %p133
      %p258 = pneg %p157
      %p259 = pneg %p154
      %p260 = pneg %p185
      %p261 = pneg %p182
      %s262 = smul.u32 2, %s22
      %p263 = scmp.lt.s32.totalorder %s21, 1
      %s264 = scalar_select %p263, %s21, 1
      %p265 = scmp.lt.s32.totalorder %s262, 1
      %s266 = scalar_select %p265, %s262, 1
      %s267 = smul.addr %s264, 2
      %s268 = sadd.s32 %s266, %s267
      %s269 = smul.addr %s268, 4
      %s270 = scalar_lea.vmem %s6, %s269
      %s271 = smul.u32 2, %s22
      %p272 = scmp.lt.s32.totalorder %s21, 1
      %s273 = scalar_select %p272, %s21, 1
      %p274 = scmp.lt.s32.totalorder %s271, 1
      %s275 = scalar_select %p274, %s271, 1
      %s276 = smul.addr %s273, 2
      %s277 = sadd.s32 %s275, %s276
      %s278 = smul.addr %s277, 4
      %s279 = scalar_lea.vmem %s0, %s278
      %s280 = smul.u32 2, %s22
      %s281 = smul.u32 2, %s22
      %p282 = scmp.lt.s32.totalorder %s21, 1
      %s283 = scalar_select %p282, %s21, 1
      %p284 = scmp.lt.s32.totalorder %s281, 1
      %s285 = scalar_select %p284, %s281, 1
      %s286 = smul.addr %s283, 2
      %s287 = sadd.s32 %s285, %s286
      %s288 = smul.addr %s287, 4
      %s289 = scalar_lea.vmem %s6, %s288
      %s290 = smul.u32 2, %s22
      %v291 = vld [vmem:[%s4] sm:$0xf]
      %v292 = vmul.f32 %v291, 0.001953125
      %v293 = vld [vmem:[%s5] sm:$0xf]
      %v294 = vmul.f32 %v293, 0.001953125
      %v295 = vmul.f32 %v292, %v292
      %v296 = vsub.f32 %v294, %v295
      %v297 = vmax.f32 %v296, 0.0
      %v298 = vadd.f32 %v297, 1e-05
      %v299 = vrsqrt.pop %v298
      %v300 = vld [vmem:[%s2] sm:$0xf]
      %v301 = vmul.f32 %v300, %v299
      %v302 = vld [vmem:[%s3] sm:$0xf]
      %v303 = vmul.f32 %v292, %v301
      %v304 = vsub.f32 %v302, %v303
      %v305 = vld [vmem:[%s1] sm:$0xf]
      %v306 = vld [vmem:[%s279] sm:$0xff]
      %v308 = vcombine.high %v306, %v306
      %vm309 = vcmask 31744
      %v311 = vsel %vm309, %v305, 0
      %vm313 = vcmask 1043456
      %v314 = vsel %vm313, %v306, 0
      %v316 = vsel %vm313, %v308, 0
      %318 = vmatprep.subr.mxu0 0.0
      %319 = vmatpush1.msra.mxu0 0.0
      %320 = vmatprep.subr.mxu0 0.0
      %321 = vmatpush1.msra.mxu0 0.0
      %322 = vmatprep.subr.mxu0 0.0
      %323 = vmatpush1.msra.mxu0 0.0
      %324 = vmatprep.subr.mxu0 0.0
      %325 = vmatpush1.msra.mxu0 0.0
      %326 = vmatprep.subr.mxu0 0.0
      %327 = vmatpush1.msra.mxu0 0.0
      %328 = vmatprep.subr.mxu0 0.0
      %329 = vmatpush1.msra.mxu0 0.0
      %330 = vmatprep.subr.mxu0 0.0
      %331 = vmatpush1.msra.mxu0 0.0
      %332 = vmatprep.subr.mxu0 0.0
      %333 = vmatpush1.msra.mxu0 0.0
      %334 = vmatprep.subr.mxu0 0.0
      %335 = vmatpush1.msra.mxu0 0.0
      %336 = vmatprep.subr.mxu0 0.0
      %337 = vmatpush1.msra.mxu0 0.0
      %338 = vmatprep.subr.mxu0 0.0
      %339 = vmatpush1.msra.mxu0 0.0
      %340 = vmatprep.subr.mxu0 0.0
      %341 = vmatpush1.msra.mxu0 0.0
      %342 = vmatprep.subr.mxu0 0.0
      %343 = vmatpush1.msra.mxu0 0.0
      %344 = vmatprep.subr.mxu0 0.0
      %345 = vmatpush1.msra.mxu0 0.0
      %346 = vmatprep.subr.mxu0 0.0
      %347 = vmatpush1.msra.mxu0 0.0
      %348 = vmatprep.subr.mxu0 %v316
      %349 = vmatpush1.msra.mxu0 %v314
      %350 = vmatprep.subr.mxu0 0.0
      %351 = vmatpush2.msra.mxu0 0.0
      %352 = vmatprep.subr.mxu0 0.0
      %353 = vmatpush2.msra.mxu0 0.0
      %354 = vmatprep.subr.mxu0 0.0
      %355 = vmatpush2.msra.mxu0 0.0
      %356 = vmatprep.subr.mxu0 0.0
      %357 = vmatpush2.msra.mxu0 0.0
      %358 = vmatprep.subr.mxu0 0.0
      %359 = vmatpush2.msra.mxu0 0.0
      %360 = vmatprep.subr.mxu0 0.0
      %361 = vmatpush2.msra.mxu0 0.0
      %362 = vmatprep.subr.mxu0 0.0
      %363 = vmatpush2.msra.mxu0 0.0
      %364 = vmatprep.subr.mxu0 0.0
      %365 = vmatpush2.msra.mxu0 0.0
      %366 = vmatprep.subr.mxu0 0.0
      %367 = vmatpush2.msra.mxu0 0.0
      %368 = vmatprep.subr.mxu0 0.0
      %369 = vmatpush2.msra.mxu0 0.0
      %370 = vmatprep.subr.mxu0 0.0
      %371 = vmatpush2.msra.mxu0 0.0
      %372 = vmatprep.subr.mxu0 0.0
      %373 = vmatpush2.msra.mxu0 0.0
      %374 = vmatprep.subr.mxu0 0.0
      %375 = vmatpush2.msra.mxu0 0.0
      %376 = vmatprep.subr.mxu0 0.0
      %377 = vmatpush2.msra.mxu0 0.0
      %378 = vmatprep.subr.mxu0 0.0
      %379 = vmatpush2.msra.mxu0 0.0
      %380 = vmatprep.subr.mxu0 0.0
      %381 = vmatpush2.msra.mxu0 0.0
      %382 = vmatprep.mubr.f32.mxu0 0.0
      %383 = vmatmul.mubr.f32.gmra.mxu0 %v311
      %v384 = vpop.f32.mrf.mxu0
      %v385 = vadd.f32 0.0, %v384
      %v386 = vpop.f32.mrf.mxu0
      %v387 = vadd.f32 0.0, %v386
      %388 = vdwg.mxu0
      %390 = vset.pattern.permute.xlu0 0
      %391 = vperm.xlu0 %390, %v301
      %v392 = vpop.permute.xlu0 %391
      %v394 = vmul.f32 %v385, %v392
      %v395 = vmul.f32 %v387, %v392
      %397 = vset.pattern.permute.xlu0 0
      %398 = vperm.xlu0 %397, %v304
      %v399 = vpop.permute.xlu0 %398
      %v401 = vadd.f32 %v394, %v399
      %v402 = vadd.f32 %v395, %v399
      %v403 = vmax.f32 %v401, 0.0
      %v404 = vmax.f32 %v402, 0.0
      %v407 = vcombine.low %v403, %v404
      %409 = vst [vmem:[%s289] sm:$0xff] %v407
      %s410 = smul.u32 2, %s22
      %p411 = scmp.lt.s32.totalorder %s21, 1
      %s412 = scalar_select %p411, %s21, 1
      %p413 = scmp.lt.s32.totalorder %s410, 1
      %s414 = scalar_select %p413, %s410, 1
      %s415 = smul.addr %s412, 2
      %s416 = sadd.s32 %s414, %s415
      %s417 = smul.addr %s416, 4
      %s418 = scalar_lea.vmem %s6, %s417
      // Predicated region
      $region45: #{spectral_transform2d.8} parent=43 // pred_check
        %p419 = pneg %p182
      $region46: #{spectral_transform2d.8} parent=43 // pred_check_branch
        %421 = sbr.rel (%p419) target = $region48
      $region47: #{spectral_transform2d.8} parent=43 // pred_region
        %s422 = smul.u32 2, %s22
      $region48: #{spectral_transform2d.8} parent=43 // pred_fallthru
        _
    $region44: #{spectral_transform2d.8} parent=5 // pred_fallthru
      _
    %p423 = scmp.le.s32.totalorder 2, %s12
    // Predicated region
    $region49: #{spectral_transform2d.8} parent=5 // pred_check
      %p424 = pneg %p423
    $region50: #{spectral_transform2d.8} parent=5 // pred_check_branch
      %426 = sbr.rel (%p424) target = $region52
    $region51: #{spectral_transform2d.8} parent=5 // pred_region
      %s427 = ssub.s32 %s12, 2
      // Predicated region
      $region53: #{spectral_transform2d.8} parent=51 // pred_check
        %p428 = pneg %p188
      $region54: #{spectral_transform2d.8} parent=51 // pred_check_branch
        %430 = sbr.rel (%p428) target = $region56
      $region55: #{spectral_transform2d.8} parent=51 // pred_region
        %s431 = smul.u32 2, %s24
        %p432 = scmp.lt.s32.totalorder %s23, 1
        %s433 = scalar_select %p432, %s23, 1
        %p434 = scmp.lt.s32.totalorder %s431, 1
        %s435 = scalar_select %p434, %s431, 1
        %s436 = smul.addr %s433, 2
        %s437 = sadd.s32 %s435, %s436
        %s438 = smul.addr %s437, 4
        %s439 = scalar_lea.vmem %s6, %s438
      $region56: #{spectral_transform2d.8} parent=51 // pred_fallthru
        _
    $region52: #{spectral_transform2d.8} parent=5 // pred_fallthru
      _
  $region6: #{spectral_transform2d.8} parent=0 // loop_footer
    %s16 = sadd.s32 1, %s12
  $region7: #{spectral_transform2d.8} parent=0 // loop_footer_branch
    %11 = sbr.rel target = $region3
  $region8: #{spectral_transform2d.8} parent=0 // loop_exit
    _

// kernel: reverse.1
$region0: #{reverse.1}
  %s0 = inlined_call_operand.vmem [shape: f32[2,4,8,3], index: 0, kind: input, shape index: {}]
  %s1 = inlined_call_operand.vmem [shape: f32[2,4,8,3], index: 1, kind: output, shape index: {}]
  $region1: #{reverse.1} parent=0
    #allocation0 [shape = 'u8[65536]{0}', space=vmem, size = 0x10000, scoped, tag = 'operand span for operand 0']
    #allocation1 [shape = 'u8[32768]{0}', space=vmem, size = 0x8000, scoped, tag = 'packed  for operand 0']
    #allocation2 [shape = 'u8[32768]{0}', space=vmem, size = 0x8000, scoped, tag = 'operand span for operand 1']
    #allocation3 [shape = 'u8[16384]{0}', space=vmem, size = 0x4000, scoped, tag = 'packed  for operand 1']
    %s2 = scalar_lea.vmem [#allocation1], 4
    // Predicated region
    $region2: #{reverse.1} parent=1 // pred_check
      _
    $region3: #{reverse.1} parent=1 // pred_check_branch
      %4 = sbr.rel (0) target = $region5
    $region4: #{reverse.1} parent=1 // pred_region
      // Predicated region
      $region6: #{reverse.1} parent=4 // pred_check
        _
      $region7: #{reverse.1} parent=4 // pred_check_branch
        %6 = sbr.rel target = $region9
      $region8: #{reverse.1} parent=4 // pred_region
        // Predicated region
        $region21: #{reverse.1} parent=8 // pred_check
          _
        $region22: #{reverse.1} parent=8 // pred_check_branch
          %36 = sbr.rel (0) target = $region24
        $region23: #{reverse.1} parent=8 // pred_region
          loop: start=0, step=1, limit=1
          $region25: #{reverse.1} parent=23 // loop_pre_header
            _
          $region26: #{reverse.1} parent=23 // loop_header
            %s38 = sphi 0, %s42
            %p39 = scmp.ge.s32.totalorder %s38, 1
            %s43 = sphi %s0, %s0
            %s44 = sphi %s2, %s2
          $region27: #{reverse.1} parent=23 // loop_header_branch
            %41 = sbr.rel (%p39) target = $region31
          $region28: #{reverse.1} parent=23 // loop_body
            _
          $region29: #{reverse.1} parent=23 // loop_footer
            %s42 = sadd.s32 1, %s38
          $region30: #{reverse.1} parent=23 // loop_footer_branch
            %37 = sbr.rel target = $region26
          $region31: #{reverse.1} parent=23 // loop_exit
            _
          %s46 = ssub.s32 16, 1
          loop: start=0, step=1, limit=1
          $region32: #{reverse.1} parent=23 // loop_pre_header
            _
          $region33: #{reverse.1} parent=23 // loop_header
            %s48 = sphi 0, %s52
            %p49 = scmp.ge.s32.totalorder %s48, 1
            %s53 = sphi %s0, %s0
            %s54 = sphi %s2, %s2
          $region34: #{reverse.1} parent=23 // loop_header_branch
            %51 = sbr.rel (%p49) target = $region38
          $region35: #{reverse.1} parent=23 // loop_body
            %v55 = vld [vmem:[%s53] sm:%s46]
            %56 = vst [vmem:[%s54] sm:%s46] %v55
            %v57 = vld [vmem:[%s53 + $0x4] sm:%s46]
            %58 = vst [vmem:[%s54 + $0x8] sm:%s46] %v57
            %v59 = vld [vmem:[%s53 + $0x8] sm:%s46]
            %60 = vst [vmem:[%s54 + $0x10] sm:%s46] %v59
            %v61 = vld [vmem:[%s53 + $0xc] sm:%s46]
            %62 = vst [vmem:[%s54 + $0x18] sm:%s46] %v61
            %v63 = vld [vmem:[%s53 + $0x10] sm:%s46]
            %64 = vst [vmem:[%s54 + $0x20] sm:%s46] %v63
            %v65 = vld [vmem:[%s53 + $0x14] sm:%s46]
            %66 = vst [vmem:[%s54 + $0x28] sm:%s46] %v65
            %v67 = vld [vmem:[%s53 + $0x18] sm:%s46]
            %68 = vst [vmem:[%s54 + $0x30] sm:%s46] %v67
            %v69 = vld [vmem:[%s53 + $0x1c] sm:%s46]
            %70 = vst [vmem:[%s54 + $0x38] sm:%s46] %v69
          $region36: #{reverse.1} parent=23 // loop_footer
            %s52 = sadd.s32 1, %s48
          $region37: #{reverse.1} parent=23 // loop_footer_branch
            %47 = sbr.rel target = $region33
          $region38: #{reverse.1} parent=23 // loop_exit
            _
        $region24: #{reverse.1} parent=8 // pred_fallthru
          _
      $region9: #{reverse.1} parent=4 // pred_fallthru
        _
      // Predicated region
      $region10: #{reverse.1} parent=4 // pred_check
        _
      $region11: #{reverse.1} parent=4 // pred_check_branch
        %8 = sbr.rel (0) target = $region13
      $region12: #{reverse.1} parent=4 // pred_region
        %s10 = ssub.s32 16, 1
        loop: start=0, step=1, limit=1
        $region14: #{reverse.1} parent=12 // loop_pre_header
          _
        $region15: #{reverse.1} parent=12 // loop_header
          %s12 = sphi 0, %s16
          %p13 = scmp.ge.s32.totalorder %s12, 1
          %s17 = sphi %s0, %s0
          %s18 = sphi %s2, %s2
        $region16: #{reverse.1} parent=12 // loop_header_branch
          %15 = sbr.rel (%p13) target = $region20
        $region17: #{reverse.1} parent=12 // loop_body
          %v19 = vld [vmem:[%s17] sm:%s10]
          %20 = vst [vmem:[%s18] sm:%s10] %v19
          %v21 = vld [vmem:[%s17 + $0x4] sm:%s10]
          %22 = vst [vmem:[%s18 + $0x8] sm:%s10] %v21
          %v23 = vld [vmem:[%s17 + $0x8] sm:%s10]
          %24 = vst [vmem:[%s18 + $0x10] sm:%s10] %v23
          %v25 = vld [vmem:[%s17 + $0xc] sm:%s10]
          %26 = vst [vmem:[%s18 + $0x18] sm:%s10] %v25
          %v27 = vld [vmem:[%s17 + $0x10] sm:%s10]
          %28 = vst [vmem:[%s18 + $0x20] sm:%s10] %v27
          %v29 = vld [vmem:[%s17 + $0x14] sm:%s10]
          %30 = vst [vmem:[%s18 + $0x28] sm:%s10] %v29
          %v31 = vld [vmem:[%s17 + $0x18] sm:%s10]
          %32 = vst [vmem:[%s18 + $0x30] sm:%s10] %v31
          %v33 = vld [vmem:[%s17 + $0x1c] sm:%s10]
          %34 = vst [vmem:[%s18 + $0x38] sm:%s10] %v33
        $region18: #{reverse.1} parent=12 // loop_footer
          %s16 = sadd.s32 1, %s12
        $region19: #{reverse.1} parent=12 // loop_footer_branch
          %11 = sbr.rel target = $region15
        $region20: #{reverse.1} parent=12 // loop_exit
          _
      $region13: #{reverse.1} parent=4 // pred_fallthru
        _
    $region5: #{reverse.1} parent=1 // pred_fallthru
      _
    %71 = vnop
    %s73 = sshll.u32 1, 4
    %s74 = ssub.s32 %s73, 1
    %s75 = smul.addr 4, 15
    %s76 = scalar_lea.vmem [#allocation1], %s75
    %v77 = vld [vmem:[%s76] sm:%s74]
    %s78 = scalar_lea.vmem [#allocation0], 120
    %79 = vst [vmem:[%s78] sm:%s74] %v77
    %s80 = smul.addr 4, 14
    %s81 = scalar_lea.vmem [#allocation1], %s80
    %v82 = vld [vmem:[%s81] sm:%s74]
    %s83 = scalar_lea.vmem [#allocation0], 112
    %84 = vst [vmem:[%s83] sm:%s74] %v82
    %s85 = smul.addr 4, 13
    %s86 = scalar_lea.vmem [#allocation1], %s85
    %v87 = vld [vmem:[%s86] sm:%s74]
    %s88 = scalar_lea.vmem [#allocation0], 104
    %89 = vst [vmem:[%s88] sm:%s74] %v87
    %s90 = smul.addr 4, 12
    %s91 = scalar_lea.vmem [#allocation1], %s90
    %v92 = vld [vmem:[%s91] sm:%s74]
    %s93 = scalar_lea.vmem [#allocation0], 96
    %94 = vst [vmem:[%s93] sm:%s74] %v92
    %s95 = smul.addr 4, 11
    %s96 = scalar_lea.vmem [#allocation1], %s95
    %v97 = vld [vmem:[%s96] sm:%s74]
    %s98 = scalar_lea.vmem [#allocation0], 88
    %99 = vst [vmem:[%s98] sm:%s74] %v97
    %s100 = smul.addr 4, 10
    %s101 = scalar_lea.vmem [#allocation1], %s100
    %v102 = vld [vmem:[%s101] sm:%s74]
    %s103 = scalar_lea.vmem [#allocation0], 80
    %104 = vst [vmem:[%s103] sm:%s74] %v102
    %s105 = smul.addr 4, 9
    %s106 = scalar_lea.vmem [#allocation1], %s105
    %v107 = vld [vmem:[%s106] sm:%s74]
    %s108 = scalar_lea.vmem [#allocation0], 72
    %109 = vst [vmem:[%s108] sm:%s74] %v107
    %s110 = smul.addr 4, 8
    %s111 = scalar_lea.vmem [#allocation1], %s110
    %v112 = vld [vmem:[%s111] sm:%s74]
    %s113 = scalar_lea.vmem [#allocation0], 64
    %114 = vst [vmem:[%s113] sm:%s74] %v112
    %s115 = smul.addr 4, 7
    %s116 = scalar_lea.vmem [#allocation1], %s115
    %v117 = vld [vmem:[%s116] sm:%s74]
    %s118 = scalar_lea.vmem [#allocation0], 56
    %119 = vst [vmem:[%s118] sm:%s74] %v117
    %s120 = smul.addr 4, 6
    %s121 = scalar_lea.vmem [#allocation1], %s120
    %v122 = vld [vmem:[%s121] sm:%s74]
    %s123 = scalar_lea.vmem [#allocation0], 48
    %124 = vst [vmem:[%s123] sm:%s74] %v122
    %s125 = smul.addr 4, 5
    %s126 = scalar_lea.vmem [#allocation1], %s125
    %v127 = vld [vmem:[%s126] sm:%s74]
    %s128 = scalar_lea.vmem [#allocation0], 40
    %129 = vst [vmem:[%s128] sm:%s74] %v127
    %s130 = smul.addr 4, 4
    %s131 = scalar_lea.vmem [#allocation1], %s130
    %v132 = vld [vmem:[%s131] sm:%s74]
    %s133 = scalar_lea.vmem [#allocation0], 32
    %134 = vst [vmem:[%s133] sm:%s74] %v132
    %s135 = smul.addr 4, 3
    %s136 = scalar_lea.vmem [#allocation1], %s135
    %v137 = vld [vmem:[%s136] sm:%s74]
    %s138 = scalar_lea.vmem [#allocation0], 24
    %139 = vst [vmem:[%s138] sm:%s74] %v137
    %s140 = smul.addr 4, 2
    %s141 = scalar_lea.vmem [#allocation1], %s140
    %v142 = vld [vmem:[%s141] sm:%s74]
    %s143 = scalar_lea.vmem [#allocation0], 16
    %144 = vst [vmem:[%s143] sm:%s74] %v142
    %s145 = scalar_lea.vmem [#allocation1], 4
    %v146 = vld [vmem:[%s145] sm:%s74]
    %s147 = scalar_lea.vmem [#allocation0], 8
    %148 = vst [vmem:[%s147] sm:%s74] %v146
    %v149 = vld [vmem:[#allocation1] sm:%s74]
    %150 = vst [vmem:[#allocation0] sm:%s74] %v149
    %s151 = scalar_lea.vmem [#allocation0], 7
    %v152 = vld [vmem:[%s151] ss:$-1 sm:$0xff]
    %v153 = vrot.slane %v152, 5
    %154 = vst [vmem:[#allocation2] sm:$0xff] %v153
    %s155 = scalar_lea.vmem [#allocation0], 8
    %s156 = scalar_lea.vmem %s155, 7 [#allocation0]
    %v157 = vld [vmem:[%s156] ss:$-1 sm:$0xff]
    %v158 = vrot.slane %v157, 5
    %v159 = vlaneseq
    %v160 = vshrl.u32 %v159, 7
    %vm161 = vcmp.lt.s32.totalorder %v160, 3
    %162 = vst.msk [vmem:[#allocation2] sm:$0xff] %vm161, %v158
    %s163 = scalar_lea.vmem [#allocation2], 8
    %s164 = scalar_lea.vmem [#allocation0], 16
    %s165 = scalar_lea.vmem %s164, 7 [#allocation0]
    %v166 = vld [vmem:[%s165] ss:$-1 sm:$0xff]
    %v167 = vrot.slane %v166, 5
    %168 = vst [vmem:[%s163] sm:$0xff] %v167
    %s169 = scalar_lea.vmem %s164, 8 [#allocation0]
    %s170 = scalar_lea.vmem %s169, 7 [#allocation0]
    %v171 = vld [vmem:[%s170] ss:$-1 sm:$0xff]
    %v172 = vrot.slane %v171, 5
    %v173 = vlaneseq
    %v174 = vshrl.u32 %v173, 7
    %vm175 = vcmp.lt.s32.totalorder %v174, 3
    %176 = vst.msk [vmem:[%s163] sm:$0xff] %vm175, %v172
    %s177 = scalar_lea.vmem [#allocation2], 16
    %s178 = scalar_lea.vmem [#allocation0], 32
    %s179 = scalar_lea.vmem %s178, 7 [#allocation0]
    %v180 = vld [vmem:[%s179] ss:$-1 sm:$0xff]
    %v181 = vrot.slane %v180, 5
    %182 = vst [vmem:[%s177] sm:$0xff] %v181
    %s183 = scalar_lea.vmem %s178, 8 [#allocation0]
    %s184 = scalar_lea.vmem %s183, 7 [#allocation0]
    %v185 = vld [vmem:[%s184] ss:$-1 sm:$0xff]
    %v186 = vrot.slane %v185, 5
    %v187 = vlaneseq
    %v188 = vshrl.u32 %v187, 7
    %vm189 = vcmp.lt.s32.totalorder %v188, 3
    %190 = vst.msk [vmem:[%s177] sm:$0xff] %vm189, %v186
    %s191 = scalar_lea.vmem [#allocation2], 24
    %s192 = scalar_lea.vmem [#allocation0], 48
    %s193 = scalar_lea.vmem %s192, 7 [#allocation0]
    %v194 = vld [vmem:[%s193] ss:$-1 sm:$0xff]
    %v195 = vrot.slane %v194, 5
    %196 = vst [vmem:[%s191] sm:$0xff] %v195
    %s197 = scalar_lea.vmem %s192, 8 [#allocation0]
    %s198 = scalar_lea.vmem %s197, 7 [#allocation0]
    %v199 = vld [vmem:[%s198] ss:$-1 sm:$0xff]
    %v200 = vrot.slane %v199, 5
    %v201 = vlaneseq
    %v202 = vshrl.u32 %v201, 7
    %vm203 = vcmp.lt.s32.totalorder %v202, 3
    %204 = vst.msk [vmem:[%s191] sm:$0xff] %vm203, %v200
    %s205 = scalar_lea.vmem [#allocation2], 32
    %s206 = scalar_lea.vmem [#allocation0], 64
    %s207 = scalar_lea.vmem %s206, 7 [#allocation0]
    %v208 = vld [vmem:[%s207] ss:$-1 sm:$0xff]
    %v209 = vrot.slane %v208, 5
    %210 = vst [vmem:[%s205] sm:$0xff] %v209
    %s211 = scalar_lea.vmem %s206, 8 [#allocation0]
    %s212 = scalar_lea.vmem %s211, 7 [#allocation0]
    %v213 = vld [vmem:[%s212] ss:$-1 sm:$0xff]
    %v214 = vrot.slane %v213, 5
    %v215 = vlaneseq
    %v216 = vshrl.u32 %v215, 7
    %vm217 = vcmp.lt.s32.totalorder %v216, 3
    %218 = vst.msk [vmem:[%s205] sm:$0xff] %vm217, %v214
    %s219 = scalar_lea.vmem [#allocation2], 40
    %s220 = scalar_lea.vmem [#allocation0], 80
    %s221 = scalar_lea.vmem %s220, 7 [#allocation0]
    %v222 = vld [vmem:[%s221] ss:$-1 sm:$0xff]
    %v223 = vrot.slane %v222, 5
    %224 = vst [vmem:[%s219] sm:$0xff] %v223
    %s225 = scalar_lea.vmem %s220, 8 [#allocation0]
    %s226 = scalar_lea.vmem %s225, 7 [#allocation0]
    %v227 = vld [vmem:[%s226] ss:$-1 sm:$0xff]
    %v228 = vrot.slane %v227, 5
    %v229 = vlaneseq
    %v230 = vshrl.u32 %v229, 7
    %vm231 = vcmp.lt.s32.totalorder %v230, 3
    %232 = vst.msk [vmem:[%s219] sm:$0xff] %vm231, %v228
    %s233 = scalar_lea.vmem [#allocation2], 48
    %s234 = scalar_lea.vmem [#allocation0], 96
    %s235 = scalar_lea.vmem %s234, 7 [#allocation0]
    %v236 = vld [vmem:[%s235] ss:$-1 sm:$0xff]
    %v237 = vrot.slane %v236, 5
    %238 = vst [vmem:[%s233] sm:$0xff] %v237
    %s239 = scalar_lea.vmem %s234, 8 [#allocation0]
    %s240 = scalar_lea.vmem %s239, 7 [#allocation0]
    %v241 = vld [vmem:[%s240] ss:$-1 sm:$0xff]
    %v242 = vrot.slane %v241, 5
    %v243 = vlaneseq
    %v244 = vshrl.u32 %v243, 7
    %vm245 = vcmp.lt.s32.totalorder %v244, 3
    %246 = vst.msk [vmem:[%s233] sm:$0xff] %vm245, %v242
    %s247 = scalar_lea.vmem [#allocation2], 56
    %s248 = scalar_lea.vmem [#allocation0], 112
    %s249 = scalar_lea.vmem %s248, 7 [#allocation0]
    %v250 = vld [vmem:[%s249] ss:$-1 sm:$0xff]
    %v251 = vrot.slane %v250, 5
    %252 = vst [vmem:[%s247] sm:$0xff] %v251
    %s253 = scalar_lea.vmem %s248, 8 [#allocation0]
    %s254 = scalar_lea.vmem %s253, 7 [#allocation0]
    %v255 = vld [vmem:[%s254] ss:$-1 sm:$0xff]
    %v256 = vrot.slane %v255, 5
    %v257 = vlaneseq
    %v258 = vshrl.u32 %v257, 7
    %vm259 = vcmp.lt.s32.totalorder %v258, 3
    %260 = vst.msk [vmem:[%s247] sm:$0xff] %vm259, %v256
    %s262 = sshll.u32 1, 4
    %s263 = ssub.s32 %s262, 1
    %v265 = vld [vmem:[#allocation2] sm:%s263]
    %s266 = sshll.u32 1, 4
    %s267 = ssub.s32 %s266, 1
    %268 = vst [vmem:[#allocation3] sm:%s267] %v265
    %s269 = scalar_lea.vmem [#allocation2], 8
    %v270 = vld [vmem:[%s269] sm:%s263]
    %s271 = sshll.u32 1, 4
    %s272 = ssub.s32 %s271, 1
    %s273 = scalar_lea.vmem [#allocation3], 4
    %274 = vst [vmem:[%s273] sm:%s272] %v270
    %s275 = scalar_lea.vmem [#allocation2], 16
    %v276 = vld [vmem:[%s275] sm:%s263]
    %s277 = sshll.u32 1, 4
    %s278 = ssub.s32 %s277, 1
    %s279 = smul.addr 4, 2
    %s280 = scalar_lea.vmem [#allocation3], %s279
    %281 = vst [vmem:[%s280] sm:%s278] %v276
    %s282 = scalar_lea.vmem [#allocation2], 24
    %v283 = vld [vmem:[%s282] sm:%s263]
    %s284 = sshll.u32 1, 4
    %s285 = ssub.s32 %s284, 1
    %s286 = smul.addr 4, 3
    %s287 = scalar_lea.vmem [#allocation3], %s286
    %288 = vst [vmem:[%s287] sm:%s285] %v283
    %s289 = scalar_lea.vmem [#allocation2], 32
    %v290 = vld [vmem:[%s289] sm:%s263]
    %s291 = sshll.u32 1, 4
    %s292 = ssub.s32 %s291, 1
    %s293 = smul.addr 4, 4
    %s294 = scalar_lea.vmem [#allocation3], %s293
    %295 = vst [vmem:[%s294] sm:%s292] %v290
    %s296 = scalar_lea.vmem [#allocation2], 40
    %v297 = vld [vmem:[%s296] sm:%s263]
    %s298 = sshll.u32 1, 4
    %s299 = ssub.s32 %s298, 1
    %s300 = smul.addr 4, 5
    %s301 = scalar_lea.vmem [#allocation3], %s300
    %302 = vst [vmem:[%s301] sm:%s299] %v297
    %s303 = scalar_lea.vmem [#allocation2], 48
    %v304 = vld [vmem:[%s303] sm:%s263]
    %s305 = sshll.u32 1, 4
    %s306 = ssub.s32 %s305, 1
    %s307 = smul.addr 4, 6
    %s308 = scalar_lea.vmem [#allocation3], %s307
    %309 = vst [vmem:[%s308] sm:%s306] %v304
    %s310 = scalar_lea.vmem [#allocation2], 56
    %v311 = vld [vmem:[%s310] sm:%s263]
    %s312 = sshll.u32 1, 4
    %s313 = ssub.s32 %s312, 1
    %s314 = smul.addr 4, 7
    %s315 = scalar_lea.vmem [#allocation3], %s314
    %316 = vst [vmem:[%s315] sm:%s313] %v311
    // Predicated region
    $region39: #{reverse.1} parent=1 // pred_check
      _
    $region40: #{reverse.1} parent=1 // pred_check_branch
      %318 = sbr.rel (0) target = $region42
    $region41: #{reverse.1} parent=1 // pred_region
      // Predicated region
      $region43: #{reverse.1} parent=41 // pred_check
        _
      $region44: #{reverse.1} parent=41 // pred_check_branch
        %320 = sbr.rel target = $region46
      $region45: #{reverse.1} parent=41 // pred_region
        // Predicated region
        $region58: #{reverse.1} parent=45 // pred_check
          _
        $region59: #{reverse.1} parent=45 // pred_check_branch
          %350 = sbr.rel (0) target = $region61
        $region60: #{reverse.1} parent=45 // pred_region
          loop: start=0, step=1, limit=1
          $region62: #{reverse.1} parent=60 // loop_pre_header
            _
          $region63: #{reverse.1} parent=60 // loop_header
            %s352 = sphi 0, %s356
            %p353 = scmp.ge.s32.totalorder %s352, 1
            %s357 = sphi [#allocation3], [#allocation3]
            %s358 = sphi %s1, %s1
          $region64: #{reverse.1} parent=60 // loop_header_branch
            %355 = sbr.rel (%p353) target = $region68
          $region65: #{reverse.1} parent=60 // loop_body
            _
          $region66: #{reverse.1} parent=60 // loop_footer
            %s356 = sadd.s32 1, %s352
          $region67: #{reverse.1} parent=60 // loop_footer_branch
            %351 = sbr.rel target = $region63
          $region68: #{reverse.1} parent=60 // loop_exit
            _
          %s360 = ssub.s32 16, 1
          loop: start=0, step=1, limit=1
          $region69: #{reverse.1} parent=60 // loop_pre_header
            _
          $region70: #{reverse.1} parent=60 // loop_header
            %s362 = sphi 0, %s366
            %p363 = scmp.ge.s32.totalorder %s362, 1
            %s367 = sphi [#allocation3], [#allocation3]
            %s368 = sphi %s1, %s1
          $region71: #{reverse.1} parent=60 // loop_header_branch
            %365 = sbr.rel (%p363) target = $region75
          $region72: #{reverse.1} parent=60 // loop_body
            %v369 = vld [vmem:[%s367] sm:%s360]
            %370 = vst [vmem:[%s368] sm:%s360] %v369
            %v371 = vld [vmem:[%s367 + $0x4] sm:%s360]
            %372 = vst [vmem:[%s368 + $0x4] sm:%s360] %v371
            %v373 = vld [vmem:[%s367 + $0x8] sm:%s360]
            %374 = vst [vmem:[%s368 + $0x8] sm:%s360] %v373
            %v375 = vld [vmem:[%s367 + $0xc] sm:%s360]
            %376 = vst [vmem:[%s368 + $0xc] sm:%s360] %v375
            %v377 = vld [vmem:[%s367 + $0x10] sm:%s360]
            %378 = vst [vmem:[%s368 + $0x10] sm:%s360] %v377
            %v379 = vld [vmem:[%s367 + $0x14] sm:%s360]
            %380 = vst [vmem:[%s368 + $0x14] sm:%s360] %v379
            %v381 = vld [vmem:[%s367 + $0x18] sm:%s360]
            %382 = vst [vmem:[%s368 + $0x18] sm:%s360] %v381
            %v383 = vld [vmem:[%s367 + $0x1c] sm:%s360]
            %384 = vst [vmem:[%s368 + $0x1c] sm:%s360] %v383
          $region73: #{reverse.1} parent=60 // loop_footer
            %s366 = sadd.s32 1, %s362
          $region74: #{reverse.1} parent=60 // loop_footer_branch
            %361 = sbr.rel target = $region70
          $region75: #{reverse.1} parent=60 // loop_exit
            _
        $region61: #{reverse.1} parent=45 // pred_fallthru
          _
      $region46: #{reverse.1} parent=41 // pred_fallthru
        _
      // Predicated region
      $region47: #{reverse.1} parent=41 // pred_check
        _
      $region48: #{reverse.1} parent=41 // pred_check_branch
        %322 = sbr.rel (0) target = $region50
      $region49: #{reverse.1} parent=41 // pred_region
        %s324 = ssub.s32 16, 1
        loop: start=0, step=1, limit=1
        $region51: #{reverse.1} parent=49 // loop_pre_header
          _
        $region52: #{reverse.1} parent=49 // loop_header
          %s326 = sphi 0, %s330
          %p327 = scmp.ge.s32.totalorder %s326, 1
          %s331 = sphi [#allocation3], [#allocation3]
          %s332 = sphi %s1, %s1
        $region53: #{reverse.1} parent=49 // loop_header_branch
          %329 = sbr.rel (%p327) target = $region57
        $region54: #{reverse.1} parent=49 // loop_body
          %v333 = vld [vmem:[%s331] sm:%s324]
          %334 = vst [vmem:[%s332] sm:%s324] %v333
          %v335 = vld [vmem:[%s331 + $0x4] sm:%s324]
          %336 = vst [vmem:[%s332 + $0x4] sm:%s324] %v335
          %v337 = vld [vmem:[%s331 + $0x8] sm:%s324]
          %338 = vst [vmem:[%s332 + $0x8] sm:%s324] %v337
          %v339 = vld [vmem:[%s331 + $0xc] sm:%s324]
          %340 = vst [vmem:[%s332 + $0xc] sm:%s324] %v339
          %v341 = vld [vmem:[%s331 + $0x10] sm:%s324]
          %342 = vst [vmem:[%s332 + $0x10] sm:%s324] %v341
          %v343 = vld [vmem:[%s331 + $0x14] sm:%s324]
          %344 = vst [vmem:[%s332 + $0x14] sm:%s324] %v343
          %v345 = vld [vmem:[%s331 + $0x18] sm:%s324]
          %346 = vst [vmem:[%s332 + $0x18] sm:%s324] %v345
          %v347 = vld [vmem:[%s331 + $0x1c] sm:%s324]
          %348 = vst [vmem:[%s332 + $0x1c] sm:%s324] %v347
        $region55: #{reverse.1} parent=49 // loop_footer
          %s330 = sadd.s32 1, %s326
        $region56: #{reverse.1} parent=49 // loop_footer_branch
          %325 = sbr.rel target = $region52
        $region57: #{reverse.1} parent=49 // loop_exit
          _
      $region50: #{reverse.1} parent=41 // pred_fallthru
        _
    $region42: #{reverse.1} parent=1 // pred_fallthru
      _
    %385 = vnop

// kernel: spectral_transform2d.11
$region0: #{spectral_transform2d.11}
  #allocation0 [shape = 'u32[]', space=smem, size = 0x4, offset = 0x4, fixed_abs, tag = 'smem constant byte address 0x4 - core index']
  #allocation1 [shape = 'u32[144,128]{1,0:T(1,128)}', space=vmem, size = 0x12000, scoped, tag = 'internal scratch']
  %s0 = inlined_call_operand.vmem [shape: f32[2,8,40], index: 0, kind: input, shape index: {}]
  %s1 = inlined_call_operand.vmem [shape: f32[8,8], index: 1, kind: input, shape index: {}]
  %s2 = inlined_call_operand.vmem [shape: f32[8,1], index: 2, kind: output, shape index: {0}]
  %s3 = inlined_call_operand.vmem [shape: f32[8,1], index: 3, kind: output, shape index: {1}]
  %4 = xla_tuple %s2, %s3
  %s5 = sld [smem:[#allocation0]]
  $region53: #{spectral_transform2d.11} parent=0
    _
  %s7 = ssub.s32 1, %s5
  %s8 = scalar_select 0, %s7, %s5
  loop: start=0, step=1, limit=4
  $region2: #{spectral_transform2d.11} parent=0 // loop_pre_header
    _
  $region3: #{spectral_transform2d.11} parent=0 // loop_header
    %s10 = sphi 0, %s14
    %p11 = scmp.ge.s32.totalorder %s10, 4
    %s17 = sphi 0, %s29
    %s18 = sphi 0, %s25
    %s19 = sphi 0, %s17
    %s20 = sphi 0, %s18
    %s21 = sphi 0, %s19
    %s22 = sphi 0, %s20
    %s34 = sphi 0, %s36
    %s37 = sphi 0, %s34
    %s38 = sphi 0, %s37
    %s54 = sphi 0, %s38
    %s58 = sphi 0, %s58
    %s60 = sphi 0, %s58
    %s61 = sphi 0, %s60
    %s75 = sphi 0, %s61
    %s79 = sphi 0, %s79
    %s81 = sphi 0, %s79
    %s82 = sphi 0, %s81
    %s96 = sphi 0, %s82
    %s100 = sphi 0, %s100
    %s102 = sphi 0, %s100
    %s103 = sphi 0, %s102
    %s117 = sphi 0, %s103
  $region4: #{spectral_transform2d.11} parent=0 // loop_header_branch
    %13 = sbr.rel (%p11) target = $region8
  $region5: #{spectral_transform2d.11} parent=0 // loop_body
    %s15 = ssub.s32 %s10, 1
    %s16 = ssub.s32 %s10, 2
    %s23 = sadd.s32 1, %s18
    %p24 = scmp.ge.s32.totalorder %s23, 1
    %s25 = scalar_select %p24, 0, %s23
    %s26 = sadd.s32 1, %s17
    %s27 = scalar_select %p24, %s26, %s17
    %p28 = scmp.ge.s32.totalorder %s27, 2
    %s29 = scalar_select %p28, 0, %s27
    %s30 = ssub.s32 %s17, %s29
    %s31 = ssub.s32 %s18, %s25
    %s32 = sor.u32 %s30, %s31
    %p33 = scmp.eq.s32.totalorder %s32, 0
    %s35 = sadd.s32 %s34, 1
    %s36 = scalar_select %p33, %s34, %s35
    %p39 = pneg %p33
    %p40 = scmp.eq.s32.totalorder %s10, 1
    %p41 = por %p39, %p40
    %p42 = scmp.ne.s32.totalorder %s34, %s37
    %p43 = scmp.eq.s32.totalorder %s10, 0
    %p44 = por %p42, %p43
    %p45 = scmp.ne.s32.totalorder %s34, %s37
    %p46 = scmp.eq.s32.totalorder %s15, 1
    %p47 = por %p45, %p46
    %p48 = scmp.ne.s32.totalorder %s37, %s38
    %p49 = scmp.eq.s32.totalorder %s15, 0
    %p50 = por %p48, %p49
    %p51 = scmp.ne.s32.totalorder %s37, %s38
    %p52 = scmp.eq.s32.totalorder %s16, 1
    %p53 = por %p51, %p52
    %p55 = scmp.ne.s32.totalorder %s38, %s54
    %p56 = scmp.eq.s32.totalorder %s16, 0
    %p57 = por %p55, %p56
    %s59 = sadd.s32 %s58, 1
    %p62 = scmp.eq.s32.totalorder %s10, 1
    %p63 = scmp.ne.s32.totalorder %s58, %s60
    %p64 = scmp.eq.s32.totalorder %s10, 0
    %p65 = por %p63, %p64
    %p66 = scmp.ne.s32.totalorder %s58, %s60
    %p67 = scmp.eq.s32.totalorder %s15, 1
    %p68 = por %p66, %p67
    %p69 = scmp.ne.s32.totalorder %s60, %s61
    %p70 = scmp.eq.s32.totalorder %s15, 0
    %p71 = por %p69, %p70
    %p72 = scmp.ne.s32.totalorder %s60, %s61
    %p73 = scmp.eq.s32.totalorder %s16, 1
    %p74 = por %p72, %p73
    %p76 = scmp.ne.s32.totalorder %s61, %s75
    %p77 = scmp.eq.s32.totalorder %s16, 0
    %p78 = por %p76, %p77
    %s80 = sadd.s32 %s79, 1
    %p83 = scmp.eq.s32.totalorder %s10, 1
    %p84 = scmp.ne.s32.totalorder %s79, %s81
    %p85 = scmp.eq.s32.totalorder %s10, 0
    %p86 = por %p84, %p85
    %p87 = scmp.ne.s32.totalorder %s79, %s81
    %p88 = scmp.eq.s32.totalorder %s15, 1
    %p89 = por %p87, %p88
    %p90 = scmp.ne.s32.totalorder %s81, %s82
    %p91 = scmp.eq.s32.totalorder %s15, 0
    %p92 = por %p90, %p91
    %p93 = scmp.ne.s32.totalorder %s81, %s82
    %p94 = scmp.eq.s32.totalorder %s16, 1
    %p95 = por %p93, %p94
    %p97 = scmp.ne.s32.totalorder %s82, %s96
    %p98 = scmp.eq.s32.totalorder %s16, 0
    %p99 = por %p97, %p98
    %s101 = sadd.s32 %s100, 1
    %p104 = scmp.eq.s32.totalorder %s10, 1
    %p105 = scmp.ne.s32.totalorder %s100, %s102
    %p106 = scmp.eq.s32.totalorder %s10, 0
    %p107 = por %p105, %p106
    %p108 = scmp.ne.s32.totalorder %s100, %s102
    %p109 = scmp.eq.s32.totalorder %s15, 1
    %p110 = por %p108, %p109
    %p111 = scmp.ne.s32.totalorder %s102, %s103
    %p112 = scmp.eq.s32.totalorder %s15, 0
    %p113 = por %p111, %p112
    %p114 = scmp.ne.s32.totalorder %s102, %s103
    %p115 = scmp.eq.s32.totalorder %s16, 1
    %p116 = por %p114, %p115
    %p118 = scmp.ne.s32.totalorder %s103, %s117
    %p119 = scmp.eq.s32.totalorder %s16, 0
    %p120 = por %p118, %p119
    %p121 = scmp.le.s32.totalorder 1, %s10
    %p122 = scmp.lt.s32.totalorder %s10, 3
    %p123 = pnand %p121, %p122
    %p124 = pneg %p123
    // Predicated region
    $region9: #{spectral_transform2d.11} parent=5 // pred_check
      _
    $region10: #{spectral_transform2d.11} parent=5 // pred_check_branch
      %126 = sbr.rel (%p123) target = $region12
    $region11: #{spectral_transform2d.11} parent=5 // pred_region
      %s127 = ssub.s32 %s10, 1
      // Predicated region
      $region13: #{spectral_transform2d.11} parent=11 // pred_check
        %p128 = pneg %p71
      $region14: #{spectral_transform2d.11} parent=11 // pred_check_branch
        %130 = sbr.rel (%p128) target = $region16
      $region15: #{spectral_transform2d.11} parent=11 // pred_region
        _
      $region16: #{spectral_transform2d.11} parent=11 // pred_fallthru
        _
    $region12: #{spectral_transform2d.11} parent=5 // pred_fallthru
      _
    %p131 = scmp.lt.s32.totalorder %s10, 2
    // Predicated region
    $region17: #{spectral_transform2d.11} parent=5 // pred_check
      %p132 = pneg %p131
    $region18: #{spectral_transform2d.11} parent=5 // pred_check_branch
      %134 = sbr.rel (%p132) target = $region20
    $region19: #{spectral_transform2d.11} parent=5 // pred_region
      // Predicated region
      $region21: #{spectral_transform2d.11} parent=19 // pred_check
        %p135 = pneg %p44
      $region22: #{spectral_transform2d.11} parent=19 // pred_check_branch
        %137 = sbr.rel (%p135) target = $region24
      $region23: #{spectral_transform2d.11} parent=19 // pred_region
        %p138 = scmp.lt.s32.totalorder %s17, 1
        %s139 = scalar_select %p138, %s17, 1
        %p140 = scmp.lt.s32.totalorder %s18, 0
        %s141 = scalar_select %p140, %s18, 0
        %s142 = sadd.s32 %s141, %s139
        %s143 = smul.addr %s142, 8
        %s144 = scalar_lea.vmem %s0, %s143
      $region24: #{spectral_transform2d.11} parent=19 // pred_fallthru
        _
    $region20: #{spectral_transform2d.11} parent=5 // pred_fallthru
      _
    %p145 = scmp.le.s32.totalorder 1, %s10
    %p146 = scmp.lt.s32.totalorder %s10, 3
    %p147 = pnand %p145, %p146
    %p148 = pneg %p147
    // Predicated region
    $region25: #{spectral_transform2d.11} parent=5 // pred_check
      _
    $region26: #{spectral_transform2d.11} parent=5 // pred_check_branch
      %150 = sbr.rel (%p147) target = $region28
    $region27: #{spectral_transform2d.11} parent=5 // pred_region
      %s151 = ssub.s32 %s10, 1
      %p152 = scmp.lt.s32.totalorder %s19, 1
      %s153 = scalar_select %p152, %s19, 1
      %p154 = scmp.lt.s32.totalorder %s20, 0
      %s155 = scalar_select %p154, %s20, 0
      %s156 = sadd.s32 %s155, %s153
      %s157 = smul.addr %s156, 8
      %s158 = scalar_lea.vmem %s0, %s157
      %p159 = pneg %p50
      %p160 = pneg %p47
      %p161 = pneg %p71
      %p162 = pneg %p68
      %p163 = pneg %p92
      %p164 = pneg %p89
      %p165 = pneg %p113
      %p166 = pneg %p110
      %p167 = scmp.lt.s32.totalorder %s19, 1
      %s168 = scalar_select %p167, %s19, 1
      %p169 = scmp.lt.s32.totalorder %s20, 0
      %s170 = scalar_select %p169, %s20, 0
      %s171 = sadd.s32 %s170, %s168
      %s172 = smul.addr %s171, 8
      %s173 = scalar_lea.vmem %s0, %s172
      %p174 = scmp.eq.s32.totalorder %s19, 0
      %p175 = scmp.eq.s32.totalorder %s20, 0
      %p176 = pnand %p174, %p175
      %p177 = pneg %p176
      // Predicated region
      $region29: #{spectral_transform2d.11} parent=27 // pred_check
        _
      $region30: #{spectral_transform2d.11} parent=27 // pred_check_branch
        %179 = sbr.rel (%p176) target = $region32
      $region31: #{spectral_transform2d.11} parent=27 // pred_region
        %vm180 = vcmask 7168
        %181 = vst.msk [vmem:[%s2] sm:$0xff] %vm180, 0.0
        %182 = vst.msk [vmem:[%s3] sm:$0xff] %vm180, 0.0
      $region32: #{spectral_transform2d.11} parent=27 // pred_fallthru
        _
      %v183 = vld [vmem:[%s173] sm:$0xff]
      %v184 = vld [vmem:[%s1] sm:$0xff]
      %vm185 = vcmask 64512
      %v187 = vsel %vm185, %v184, 0
      %189 = vmatprep.subr.mxu0 0.0
      %190 = vmatpush1.msra.mxu0 0.0
      %191 = vmatprep.subr.mxu0 0.0
      %192 = vmatpush1.msra.mxu0 0.0
      %193 = vmatprep.subr.mxu0 0.0
      %194 = vmatpush1.msra.mxu0 0.0
      %195 = vmatprep.subr.mxu0 0.0
      %196 = vmatpush1.msra.mxu0 0.0
      %197 = vmatprep.subr.mxu0 0.0
      %198 = vmatpush1.msra.mxu0 0.0
      %199 = vmatprep.subr.mxu0 0.0
      %200 = vmatpush1.msra.mxu0 0.0
      %201 = vmatprep.subr.mxu0 0.0
      %202 = vmatpush1.msra.mxu0 0.0
      %203 = vmatprep.subr.mxu0 0.0
      %204 = vmatpush1.msra.mxu0 0.0
      %205 = vmatprep.subr.mxu0 0.0
      %206 = vmatpush1.msra.mxu0 0.0
      %207 = vmatprep.subr.mxu0 0.0
      %208 = vmatpush1.msra.mxu0 0.0
      %209 = vmatprep.subr.mxu0 0.0
      %210 = vmatpush1.msra.mxu0 0.0
      %211 = vmatprep.subr.mxu0 0.0
      %212 = vmatpush1.msra.mxu0 0.0
      %213 = vmatprep.subr.mxu0 0.0
      %214 = vmatpush1.msra.mxu0 0.0
      %215 = vmatprep.subr.mxu0 0.0
      %216 = vmatpush1.msra.mxu0 0.0
      %217 = vmatprep.subr.mxu0 0.0
      %218 = vmatpush1.msra.mxu0 0.0
      %219 = vmatprep.subr.mxu0 0.0
      %220 = vmatpush1.msra.mxu0 %v183
      %221 = vmatprep.subr.mxu0 0.0
      %222 = vmatpush2.msra.mxu0 0.0
      %223 = vmatprep.subr.mxu0 0.0
      %224 = vmatpush2.msra.mxu0 0.0
      %225 = vmatprep.subr.mxu0 0.0
      %226 = vmatpush2.msra.mxu0 0.0
      %227 = vmatprep.subr.mxu0 0.0
      %228 = vmatpush2.msra.mxu0 0.0
      %229 = vmatprep.subr.mxu0 0.0
      %230 = vmatpush2.msra.mxu0 0.0
      %231 = vmatprep.subr.mxu0 0.0
      %232 = vmatpush2.msra.mxu0 0.0
      %233 = vmatprep.subr.mxu0 0.0
      %234 = vmatpush2.msra.mxu0 0.0
      %235 = vmatprep.subr.mxu0 0.0
      %236 = vmatpush2.msra.mxu0 0.0
      %237 = vmatprep.subr.mxu0 0.0
      %238 = vmatpush2.msra.mxu0 0.0
      %239 = vmatprep.subr.mxu0 0.0
      %240 = vmatpush2.msra.mxu0 0.0
      %241 = vmatprep.subr.mxu0 0.0
      %242 = vmatpush2.msra.mxu0 0.0
      %243 = vmatprep.subr.mxu0 0.0
      %244 = vmatpush2.msra.mxu0 0.0
      %245 = vmatprep.subr.mxu0 0.0
      %246 = vmatpush2.msra.mxu0 0.0
      %247 = vmatprep.subr.mxu0 0.0
      %248 = vmatpush2.msra.mxu0 0.0
      %249 = vmatprep.subr.mxu0 0.0
      %250 = vmatpush2.msra.mxu0 0.0
      %251 = vmatprep.subr.mxu0 0.0
      %252 = vmatpush2.msra.mxu0 0.0
      %253 = vmatprep.mubr.f32.mxu0 0.0
      %254 = vmatmul.mubr.f32.gmra.mxu0 %v187
      %v255 = vpop.f32.mrf.mxu0
      %v256 = vadd.f32 0.0, %v255
      %v257 = vpop.f32.mrf.mxu0
      %258 = vdwg.mxu0
      %v259 = vld [vmem:[%s2] sm:$0xff]
      %vm260 = vcmask 326656
      %v261 = vsel %vm260, %v256, 0.0
      %262 = vadd.xlane.f32.xlu0 %v261
      %v263 = vpop.xlane.xlu0 %262
      %v264 = vadd.f32 %v259, %v263
      %vm265 = vcmask 7168
      %266 = vst.msk [vmem:[%s2] sm:$0xff] %vm265, %v264
      %v267 = vld [vmem:[%s3] sm:$0xff]
      %v268 = vmul.f32 %v256, %v256
      %v269 = vsel %vm260, %v268, 0.0
      %270 = vadd.xlane.f32.xlu0 %v269
      %v271 = vpop.xlane.xlu0 %270
      %v272 = vadd.f32 %v267, %v271
      %273 = vst.msk [vmem:[%s3] sm:$0xff] %vm265, %v272
      // Predicated region
      $region33: #{spectral_transform2d.11} parent=27 // pred_check
        %p274 = pneg %p89
      $region34: #{spectral_transform2d.11} parent=27 // pred_check_branch
        %276 = sbr.rel (%p274) target = $region36
      $region35: #{spectral_transform2d.11} parent=27 // pred_region
        _
      $region36: #{spectral_transform2d.11} parent=27 // pred_fallthru
        _
      // Predicated region
      $region37: #{spectral_transform2d.11} parent=27 // pred_check
        %p277 = pneg %p110
      $region38: #{spectral_transform2d.11} parent=27 // pred_check_branch
        %279 = sbr.rel (%p277) target = $region40
      $region39: #{spectral_transform2d.11} parent=27 // pred_region
        _
      $region40: #{spectral_transform2d.11} parent=27 // pred_fallthru
        _
      // Predicated region
      $region41: #{spectral_transform2d.11} parent=27 // pred_check
        %p280 = pneg %p89
      $region42: #{spectral_transform2d.11} parent=27 // pred_check_branch
        %282 = sbr.rel (%p280) target = $region44
      $region43: #{spectral_transform2d.11} parent=27 // pred_region
        _
      $region44: #{spectral_transform2d.11} parent=27 // pred_fallthru
        _
      // Predicated region
      $region45: #{spectral_transform2d.11} parent=27 // pred_check
        %p283 = pneg %p110
      $region46: #{spectral_transform2d.11} parent=27 // pred_check_branch
        %285 = sbr.rel (%p283) target = $region48
      $region47: #{spectral_transform2d.11} parent=27 // pred_region
        _
      $region48: #{spectral_transform2d.11} parent=27 // pred_fallthru
        _
    $region28: #{spectral_transform2d.11} parent=5 // pred_fallthru
      _
    %p286 = scmp.le.s32.totalorder 2, %s10
    // Predicated region
    $region49: #{spectral_transform2d.11} parent=5 // pred_check
      %p287 = pneg %p286
    $region50: #{spectral_transform2d.11} parent=5 // pred_check_branch
      %289 = sbr.rel (%p287) target = $region52
    $region51: #{spectral_transform2d.11} parent=5 // pred_region
      %s290 = ssub.s32 %s10, 2
    $region52: #{spectral_transform2d.11} parent=5 // pred_fallthru
      _
  $region6: #{spectral_transform2d.11} parent=0 // loop_footer
    %s14 = sadd.s32 1, %s10
  $region7: #{spectral_transform2d.11} parent=0 // loop_footer_branch
    %9 = sbr.rel target = $region3
  $region8: #{spectral_transform2d.11} parent=0 // loop_exit
    _

// kernel: spectral_transform2d.12
$region0: #{spectral_transform2d.12}
  #allocation0 [shape = 'u32[]', space=smem, size = 0x4, offset = 0x4, fixed_abs, tag = 'smem constant byte address 0x4 - core index']
  #allocation1 [shape = 'u32[144,128]{1,0:T(1,128)}', space=vmem, size = 0x12000, scoped, tag = 'internal scratch']
  %s0 = inlined_call_operand.vmem [shape: f32[2,8,40], index: 0, kind: input, shape index: {}]
  %s1 = inlined_call_operand.vmem [shape: f32[8,8], index: 1, kind: input, shape index: {}]
  %s2 = inlined_call_operand.vmem [shape: f32[8,1], index: 2, kind: input, shape index: {}]
  %s3 = inlined_call_operand.vmem [shape: f32[8,1], index: 3, kind: input, shape index: {}]
  %s4 = inlined_call_operand.vmem [shape: f32[8,1], index: 4, kind: input, shape index: {}]
  %s5 = inlined_call_operand.vmem [shape: f32[8,1], index: 5, kind: input, shape index: {}]
  %s6 = inlined_call_operand.vmem [shape: f32[2,8,40], index: 6, kind: output, shape index: {}]
  %s7 = sld [smem:[#allocation0]]
  $region57: #{spectral_transform2d.12} parent=0
    _
  %s9 = ssub.s32 1, %s7
  %s10 = scalar_select 0, %s9, %s7
  loop: start=0, step=1, limit=4
  $region2: #{spectral_transform2d.12} parent=0 // loop_pre_header
    _
  $region3: #{spectral_transform2d.12} parent=0 // loop_header
    %s12 = sphi 0, %s16
    %p13 = scmp.ge.s32.totalorder %s12, 4
    %s19 = sphi 0, %s31
    %s20 = sphi 0, %s27
    %s21 = sphi 0, %s19
    %s22 = sphi 0, %s20
    %s23 = sphi 0, %s21
    %s24 = sphi 0, %s22
    %s36 = sphi 0, %s38
    %s39 = sphi 0, %s36
    %s40 = sphi 0, %s39
    %s56 = sphi 0, %s40
    %s60 = sphi 0, %s60
    %s62 = sphi 0, %s60
    %s63 = sphi 0, %s62
    %s77 = sphi 0, %s63
    %s81 = sphi 0, %s81
    %s83 = sphi 0, %s81
    %s84 = sphi 0, %s83
    %s98 = sphi 0, %s84
    %s102 = sphi 0, %s102
    %s104 = sphi 0, %s102
    %s105 = sphi 0, %s104
    %s119 = sphi 0, %s105
    %s123 = sphi 0, %s123
    %s125 = sphi 0, %s123
    %s126 = sphi 0, %s125
    %s140 = sphi 0, %s126
    %s144 = sphi 0, %s144
    %s146 = sphi 0, %s144
    %s147 = sphi 0, %s146
    %s161 = sphi 0, %s147
    %s169 = sphi 0, %s171
    %s172 = sphi 0, %s169
    %s173 = sphi 0, %s172
    %s189 = sphi 0, %s173
  $region4: #{spectral_transform2d.12} parent=0 // loop_header_branch
    %15 = sbr.rel (%p13) target = $region8
  $region5: #{spectral_transform2d.12} parent=0 // loop_body
    %s17 = ssub.s32 %s12, 1
    %s18 = ssub.s32 %s12, 2
    %s25 = sadd.s32 1, %s20
    %p26 = scmp.ge.s32.totalorder %s25, 1
    %s27 = scalar_select %p26, 0, %s25
    %s28 = sadd.s32 1, %s19
    %s29 = scalar_select %p26, %s28, %s19
    %p30 = scmp.ge.s32.totalorder %s29, 2
    %s31 = scalar_select %p30, 0, %s29
    %s32 = ssub.s32 %s19, %s31
    %s33 = ssub.s32 %s20, %s27
    %s34 = sor.u32 %s32, %s33
    %p35 = scmp.eq.s32.totalorder %s34, 0
    %s37 = sadd.s32 %s36, 1
    %s38 = scalar_select %p35, %s36, %s37
    %p41 = pneg %p35
    %p42 = scmp.eq.s32.totalorder %s12, 1
    %p43 = por %p41, %p42
    %p44 = scmp.ne.s32.totalorder %s36, %s39
    %p45 = scmp.eq.s32.totalorder %s12, 0
    %p46 = por %p44, %p45
    %p47 = scmp.ne.s32.totalorder %s36, %s39
    %p48 = scmp.eq.s32.totalorder %s17, 1
    %p49 = por %p47, %p48
    %p50 = scmp.ne.s32.totalorder %s39, %s40
    %p51 = scmp.eq.s32.totalorder %s17, 0
    %p52 = por %p50, %p51
    %p53 = scmp.ne.s32.totalorder %s39, %s40
    %p54 = scmp.eq.s32.totalorder %s18, 1
    %p55 = por %p53, %p54
    %p57 = scmp.ne.s32.totalorder %s40, %s56
    %p58 = scmp.eq.s32.totalorder %s18, 0
    %p59 = por %p57, %p58
    %s61 = sadd.s32 %s60, 1
    %p64 = scmp.eq.s32.totalorder %s12, 1
    %p65 = scmp.ne.s32.totalorder %s60, %s62
    %p66 = scmp.eq.s32.totalorder %s12, 0
    %p67 = por %p65, %p66
    %p68 = scmp.ne.s32.totalorder %s60, %s62
    %p69 = scmp.eq.s32.totalorder %s17, 1
    %p70 = por %p68, %p69
    %p71 = scmp.ne.s32.totalorder %s62, %s63
    %p72 = scmp.eq.s32.totalorder %s17, 0
    %p73 = por %p71, %p72
    %p74 = scmp.ne.s32.totalorder %s62, %s63
    %p75 = scmp.eq.s32.totalorder %s18, 1
    %p76 = por %p74, %p75
    %p78 = scmp.ne.s32.totalorder %s63, %s77
    %p79 = scmp.eq.s32.totalorder %s18, 0
    %p80 = por %p78, %p79
    %s82 = sadd.s32 %s81, 1
    %p85 = scmp.eq.s32.totalorder %s12, 1
    %p86 = scmp.ne.s32.totalorder %s81, %s83
    %p87 = scmp.eq.s32.totalorder %s12, 0
    %p88 = por %p86, %p87
    %p89 = scmp.ne.s32.totalorder %s81, %s83
    %p90 = scmp.eq.s32.totalorder %s17, 1
    %p91 = por %p89, %p90
    %p92 = scmp.ne.s32.totalorder %s83, %s84
    %p93 = scmp.eq.s32.totalorder %s17, 0
    %p94 = por %p92, %p93
    %p95 = scmp.ne.s32.totalorder %s83, %s84
    %p96 = scmp.eq.s32.totalorder %s18, 1
    %p97 = por %p95, %p96
    %p99 = scmp.ne.s32.totalorder %s84, %s98
    %p100 = scmp.eq.s32.totalorder %s18, 0
    %p101 = por %p99, %p100
    %s103 = sadd.s32 %s102, 1
    %p106 = scmp.eq.s32.totalorder %s12, 1
    %p107 = scmp.ne.s32.totalorder %s102, %s104
    %p108 = scmp.eq.s32.totalorder %s12, 0
    %p109 = por %p107, %p108
    %p110 = scmp.ne.s32.totalorder %s102, %s104
    %p111 = scmp.eq.s32.totalorder %s17, 1
    %p112 = por %p110, %p111
    %p113 = scmp.ne.s32.totalorder %s104, %s105
    %p114 = scmp.eq.s32.totalorder %s17, 0
    %p115 = por %p113, %p114
    %p116 = scmp.ne.s32.totalorder %s104, %s105
    %p117 = scmp.eq.s32.totalorder %s18, 1
    %p118 = por %p116, %p117
    %p120 = scmp.ne.s32.totalorder %s105, %s119
    %p121 = scmp.eq.s32.totalorder %s18, 0
    %p122 = por %p120, %p121
    %s124 = sadd.s32 %s123, 1
    %p127 = scmp.eq.s32.totalorder %s12, 1
    %p128 = scmp.ne.s32.totalorder %s123, %s125
    %p129 = scmp.eq.s32.totalorder %s12, 0
    %p130 = por %p128, %p129
    %p131 = scmp.ne.s32.totalorder %s123, %s125
    %p132 = scmp.eq.s32.totalorder %s17, 1
    %p133 = por %p131, %p132
    %p134 = scmp.ne.s32.totalorder %s125, %s126
    %p135 = scmp.eq.s32.totalorder %s17, 0
    %p136 = por %p134, %p135
    %p137 = scmp.ne.s32.totalorder %s125, %s126
    %p138 = scmp.eq.s32.totalorder %s18, 1
    %p139 = por %p137, %p138
    %p141 = scmp.ne.s32.totalorder %s126, %s140
    %p142 = scmp.eq.s32.totalorder %s18, 0
    %p143 = por %p141, %p142
    %s145 = sadd.s32 %s144, 1
    %p148 = scmp.eq.s32.totalorder %s12, 1
    %p149 = scmp.ne.s32.totalorder %s144, %s146
    %p150 = scmp.eq.s32.totalorder %s12, 0
    %p151 = por %p149, %p150
    %p152 = scmp.ne.s32.totalorder %s144, %s146
    %p153 = scmp.eq.s32.totalorder %s17, 1
    %p154 = por %p152, %p153
    %p155 = scmp.ne.s32.totalorder %s146, %s147
    %p156 = scmp.eq.s32.totalorder %s17, 0
    %p157 = por %p155, %p156
    %p158 = scmp.ne.s32.totalorder %s146, %s147
    %p159 = scmp.eq.s32.totalorder %s18, 1
    %p160 = por %p158, %p159
    %p162 = scmp.ne.s32.totalorder %s147, %s161
    %p163 = scmp.eq.s32.totalorder %s18, 0
    %p164 = por %p162, %p163
    %s165 = ssub.s32 %s19, %s31
    %s166 = ssub.s32 %s20, %s27
    %s167 = sor.u32 %s165, %s166
    %p168 = scmp.eq.s32.totalorder %s167, 0
    %s170 = sadd.s32 %s169, 1
    %s171 = scalar_select %p168, %s169, %s170
    %p174 = pneg %p168
    %p175 = scmp.eq.s32.totalorder %s12, 1
    %p176 = por %p174, %p175
    %p177 = scmp.ne.s32.totalorder %s169, %s172
    %p178 = scmp.eq.s32.totalorder %s12, 0
    %p179 = por %p177, %p178
    %p180 = scmp.ne.s32.totalorder %s169, %s172
    %p181 = scmp.eq.s32.totalorder %s17, 1
    %p182 = por %p180, %p181
    %p183 = scmp.ne.s32.totalorder %s172, %s173
    %p184 = scmp.eq.s32.totalorder %s17, 0
    %p185 = por %p183, %p184
    %p186 = scmp.ne.s32.totalorder %s172, %s173
    %p187 = scmp.eq.s32.totalorder %s18, 1
    %p188 = por %p186, %p187
    %p190 = scmp.ne.s32.totalorder %s173, %s189
    %p191 = scmp.eq.s32.totalorder %s18, 0
    %p192 = por %p190, %p191
    %p193 = scmp.le.s32.totalorder 1, %s12
    %p194 = scmp.lt.s32.totalorder %s12, 3
    %p195 = pnand %p193, %p194
    %p196 = pneg %p195
    // Predicated region
    $region9: #{spectral_transform2d.12} parent=5 // pred_check
      _
    $region10: #{spectral_transform2d.12} parent=5 // pred_check_branch
      %198 = sbr.rel (%p195) target = $region12
    $region11: #{spectral_transform2d.12} parent=5 // pred_region
      %s199 = ssub.s32 %s12, 1
      // Predicated region
      $region13: #{spectral_transform2d.12} parent=11 // pred_check
        %p200 = pneg %p73
      $region14: #{spectral_transform2d.12} parent=11 // pred_check_branch
        %202 = sbr.rel (%p200) target = $region16
      $region15: #{spectral_transform2d.12} parent=11 // pred_region
        _
      $region16: #{spectral_transform2d.12} parent=11 // pred_fallthru
        _
      // Predicated region
      $region17: #{spectral_transform2d.12} parent=11 // pred_check
        %p203 = pneg %p94
      $region18: #{spectral_transform2d.12} parent=11 // pred_check_branch
        %205 = sbr.rel (%p203) target = $region20
      $region19: #{spectral_transform2d.12} parent=11 // pred_region
        _
      $region20: #{spectral_transform2d.12} parent=11 // pred_fallthru
        _
      // Predicated region
      $region21: #{spectral_transform2d.12} parent=11 // pred_check
        %p206 = pneg %p115
      $region22: #{spectral_transform2d.12} parent=11 // pred_check_branch
        %208 = sbr.rel (%p206) target = $region24
      $region23: #{spectral_transform2d.12} parent=11 // pred_region
        _
      $region24: #{spectral_transform2d.12} parent=11 // pred_fallthru
        _
      // Predicated region
      $region25: #{spectral_transform2d.12} parent=11 // pred_check
        %p209 = pneg %p136
      $region26: #{spectral_transform2d.12} parent=11 // pred_check_branch
        %211 = sbr.rel (%p209) target = $region28
      $region27: #{spectral_transform2d.12} parent=11 // pred_region
        _
      $region28: #{spectral_transform2d.12} parent=11 // pred_fallthru
        _
      // Predicated region
      $region29: #{spectral_transform2d.12} parent=11 // pred_check
        %p212 = pneg %p157
      $region30: #{spectral_transform2d.12} parent=11 // pred_check_branch
        %214 = sbr.rel (%p212) target = $region32
      $region31: #{spectral_transform2d.12} parent=11 // pred_region
        _
      $region32: #{spectral_transform2d.12} parent=11 // pred_fallthru
        _
    $region12: #{spectral_transform2d.12} parent=5 // pred_fallthru
      _
    %p215 = scmp.lt.s32.totalorder %s12, 2
    // Predicated region
    $region33: #{spectral_transform2d.12} parent=5 // pred_check
      %p216 = pneg %p215
    $region34: #{spectral_transform2d.12} parent=5 // pred_check_branch
      %218 = sbr.rel (%p216) target = $region36
    $region35: #{spectral_transform2d.12} parent=5 // pred_region
      // Predicated region
      $region37: #{spectral_transform2d.12} parent=35 // pred_check
        %p219 = pneg %p46
      $region38: #{spectral_transform2d.12} parent=35 // pred_check_branch
        %221 = sbr.rel (%p219) target = $region40
      $region39: #{spectral_transform2d.12} parent=35 // pred_region
        %p222 = scmp.lt.s32.totalorder %s19, 1
        %s223 = scalar_select %p222, %s19, 1
        %p224 = scmp.lt.s32.totalorder %s20, 0
        %s225 = scalar_select %p224, %s20, 0
        %s226 = sadd.s32 %s225, %s223
        %s227 = smul.addr %s226, 8
        %s228 = scalar_lea.vmem %s0, %s227
      $region40: #{spectral_transform2d.12} parent=35 // pred_fallthru
        _
    $region36: #{spectral_transform2d.12} parent=5 // pred_fallthru
      _
    %p229 = scmp.le.s32.totalorder 1, %s12
    %p230 = scmp.lt.s32.totalorder %s12, 3
    %p231 = pnand %p229, %p230
    %p232 = pneg %p231
    // Predicated region
    $region41: #{spectral_transform2d.12} parent=5 // pred_check
      _
    $region42: #{spectral_transform2d.12} parent=5 // pred_check_branch
      %234 = sbr.rel (%p231) target = $region44
    $region43: #{spectral_transform2d.12} parent=5 // pred_region
      %s235 = ssub.s32 %s12, 1
      %p236 = scmp.lt.s32.totalorder %s21, 1
      %s237 = scalar_select %p236, %s21, 1
      %p238 = scmp.lt.s32.totalorder %s22, 0
      %s239 = scalar_select %p238, %s22, 0
      %s240 = sadd.s32 %s239, %s237
      %s241 = smul.addr %s240, 8
      %s242 = scalar_lea.vmem %s0, %s241
      %p243 = pneg %p52
      %p244 = pneg %p49
      %p245 = pneg %p73
      %p246 = pneg %p70
      %p247 = pneg %p94
      %p248 = pneg %p91
      %p249 = pneg %p115
      %p250 = pneg %p112
      %p251 = pneg %p136
      %p252 = pneg %p133
      %p253 = pneg %p157
      %p254 = pneg %p154
      %p255 = pneg %p185
      %p256 = pneg %p182
      %p257 = scmp.lt.s32.totalorder %s21, 1
      %s258 = scalar_select %p257, %s21, 1
      %p259 = scmp.lt.s32.totalorder %s22, 0
      %s260 = scalar_select %p259, %s22, 0
      %s261 = sadd.s32 %s260, %s258
      %s262 = smul.addr %s261, 8
      %s263 = scalar_lea.vmem %s6, %s262
      %p264 = scmp.lt.s32.totalorder %s21, 1
      %s265 = scalar_select %p264, %s21, 1
      %p266 = scmp.lt.s32.totalorder %s22, 0
      %s267 = scalar_select %p266, %s22, 0
      %s268 = sadd.s32 %s267, %s265
      %s269 = smul.addr %s268, 8
      %s270 = scalar_lea.vmem %s0, %s269
      %p271 = scmp.lt.s32.totalorder %s21, 1
      %s272 = scalar_select %p271, %s21, 1
      %p273 = scmp.lt.s32.totalorder %s22, 0
      %s274 = scalar_select %p273, %s22, 0
      %s275 = sadd.s32 %s274, %s272
      %s276 = smul.addr %s275, 8
      %s277 = scalar_lea.vmem %s6, %s276
      %v278 = vld [vmem:[%s4] sm:$0xff]
      %v279 = vmul.f32 %v278, 0.0125
      %v280 = vld [vmem:[%s5] sm:$0xff]
      %v281 = vmul.f32 %v280, 0.0125
      %v282 = vmul.f32 %v279, %v279
      %v283 = vsub.f32 %v281, %v282
      %v284 = vmax.f32 %v283, 0.0
      %v285 = vadd.f32 %v284, 1e-05
      %v286 = vrsqrt.pop %v285
      %v287 = vld [vmem:[%s2] sm:$0xff]
      %v288 = vmul.f32 %v287, %v286
      %v289 = vld [vmem:[%s3] sm:$0xff]
      %v290 = vmul.f32 %v279, %v288
      %v291 = vsub.f32 %v289, %v290
      %v292 = vld [vmem:[%s1] sm:$0xff]
      %v293 = vld [vmem:[%s270] sm:$0xff]
      %vm294 = vcmask 64512
      %v296 = vsel %vm294, %v292, 0
      %298 = vmatprep.subr.mxu0 0.0
      %299 = vmatpush1.msra.mxu0 0.0
      %300 = vmatprep.subr.mxu0 0.0
      %301 = vmatpush1.msra.mxu0 0.0
      %302 = vmatprep.subr.mxu0 0.0
      %303 = vmatpush1.msra.mxu0 0.0
      %304 = vmatprep.subr.mxu0 0.0
      %305 = vmatpush1.msra.mxu0 0.0
      %306 = vmatprep.subr.mxu0 0.0
      %307 = vmatpush1.msra.mxu0 0.0
      %308 = vmatprep.subr.mxu0 0.0
      %309 = vmatpush1.msra.mxu0 0.0
      %310 = vmatprep.subr.mxu0 0.0
      %311 = vmatpush1.msra.mxu0 0.0
      %312 = vmatprep.subr.mxu0 0.0
      %313 = vmatpush1.msra.mxu0 0.0
      %314 = vmatprep.subr.mxu0 0.0
      %315 = vmatpush1.msra.mxu0 0.0
      %316 = vmatprep.subr.mxu0 0.0
      %317 = vmatpush1.msra.mxu0 0.0
      %318 = vmatprep.subr.mxu0 0.0
      %319 = vmatpush1.msra.mxu0 0.0
      %320 = vmatprep.subr.mxu0 0.0
      %321 = vmatpush1.msra.mxu0 0.0
      %322 = vmatprep.subr.mxu0 0.0
      %323 = vmatpush1.msra.mxu0 0.0
      %324 = vmatprep.subr.mxu0 0.0
      %325 = vmatpush1.msra.mxu0 0.0
      %326 = vmatprep.subr.mxu0 0.0
      %327 = vmatpush1.msra.mxu0 0.0
      %328 = vmatprep.subr.mxu0 0.0
      %329 = vmatpush1.msra.mxu0 %v293
      %330 = vmatprep.subr.mxu0 0.0
      %331 = vmatpush2.msra.mxu0 0.0
      %332 = vmatprep.subr.mxu0 0.0
      %333 = vmatpush2.msra.mxu0 0.0
      %334 = vmatprep.subr.mxu0 0.0
      %335 = vmatpush2.msra.mxu0 0.0
      %336 = vmatprep.subr.mxu0 0.0
      %337 = vmatpush2.msra.mxu0 0.0
      %338 = vmatprep.subr.mxu0 0.0
      %339 = vmatpush2.msra.mxu0 0.0
      %340 = vmatprep.subr.mxu0 0.0
      %341 = vmatpush2.msra.mxu0 0.0
      %342 = vmatprep.subr.mxu0 0.0
      %343 = vmatpush2.msra.mxu0 0.0
      %344 = vmatprep.subr.mxu0 0.0
      %345 = vmatpush2.msra.mxu0 0.0
      %346 = vmatprep.subr.mxu0 0.0
      %347 = vmatpush2.msra.mxu0 0.0
      %348 = vmatprep.subr.mxu0 0.0
      %349 = vmatpush2.msra.mxu0 0.0
      %350 = vmatprep.subr.mxu0 0.0
      %351 = vmatpush2.msra.mxu0 0.0
      %352 = vmatprep.subr.mxu0 0.0
      %353 = vmatpush2.msra.mxu0 0.0
      %354 = vmatprep.subr.mxu0 0.0
      %355 = vmatpush2.msra.mxu0 0.0
      %356 = vmatprep.subr.mxu0 0.0
      %357 = vmatpush2.msra.mxu0 0.0
      %358 = vmatprep.subr.mxu0 0.0
      %359 = vmatpush2.msra.mxu0 0.0
      %360 = vmatprep.subr.mxu0 0.0
      %361 = vmatpush2.msra.mxu0 0.0
      %362 = vmatprep.mubr.f32.mxu0 0.0
      %363 = vmatmul.mubr.f32.gmra.mxu0 %v296
      %v364 = vpop.f32.mrf.mxu0
      %v365 = vadd.f32 0.0, %v364
      %v366 = vpop.f32.mrf.mxu0
      %367 = vdwg.mxu0
      %369 = vset.pattern.permute.xlu0 0
      %370 = vperm.xlu0 %369, %v288
      %v371 = vpop.permute.xlu0 %370
      %v373 = vmul.f32 %v365, %v371
      %375 = vset.pattern.permute.xlu0 0
      %376 = vperm.xlu0 %375, %v291
      %v377 = vpop.permute.xlu0 %376
      %v379 = vadd.f32 %v373, %v377
      %v380 = vmax.f32 %v379, 0.0
      %vm381 = vcmask 326656
      %382 = vst.msk [vmem:[%s277] sm:$0xff] %vm381, %v380
      %p383 = scmp.lt.s32.totalorder %s21, 1
      %s384 = scalar_select %p383, %s21, 1
      %p385 = scmp.lt.s32.totalorder %s22, 0
      %s386 = scalar_select %p385, %s22, 0
      %s387 = sadd.s32 %s386, %s384
      %s388 = smul.addr %s387, 8
      %s389 = scalar_lea.vmem %s6, %s388
      // Predicated region
      $region45: #{spectral_transform2d.12} parent=43 // pred_check
        %p390 = pneg %p182
      $region46: #{spectral_transform2d.12} parent=43 // pred_check_branch
        %392 = sbr.rel (%p390) target = $region48
      $region47: #{spectral_transform2d.12} parent=43 // pred_region
        _
      $region48: #{spectral_transform2d.12} parent=43 // pred_fallthru
        _
    $region44: #{spectral_transform2d.12} parent=5 // pred_fallthru
      _
    %p393 = scmp.le.s32.totalorder 2, %s12
    // Predicated region
    $region49: #{spectral_transform2d.12} parent=5 // pred_check
      %p394 = pneg %p393
    $region50: #{spectral_transform2d.12} parent=5 // pred_check_branch
      %396 = sbr.rel (%p394) target = $region52
    $region51: #{spectral_transform2d.12} parent=5 // pred_region
      %s397 = ssub.s32 %s12, 2
      // Predicated region
      $region53: #{spectral_transform2d.12} parent=51 // pred_check
        %p398 = pneg %p188
      $region54: #{spectral_transform2d.12} parent=51 // pred_check_branch
        %400 = sbr.rel (%p398) target = $region56
      $region55: #{spectral_transform2d.12} parent=51 // pred_region
        %p401 = scmp.lt.s32.totalorder %s23, 1
        %s402 = scalar_select %p401, %s23, 1
        %p403 = scmp.lt.s32.totalorder %s24, 0
        %s404 = scalar_select %p403, %s24, 0
        %s405 = sadd.s32 %s404, %s402
        %s406 = smul.addr %s405, 8
        %s407 = scalar_lea.vmem %s6, %s406
      $region56: #{spectral_transform2d.12} parent=51 // pred_fallthru
        _
    $region52: #{spectral_transform2d.12} parent=5 // pred_fallthru
      _
  $region6: #{spectral_transform2d.12} parent=0 // loop_footer
    %s16 = sadd.s32 1, %s12
  $region7: #{spectral_transform2d.12} parent=0 // loop_footer_branch
    %11 = sbr.rel target = $region3
  $region8: #{spectral_transform2d.12} parent=0 // loop_exit
    _

// kernel: tile.9
$region0: #{tile.9}
  %s0 = inlined_call_operand.vmem [shape: f32[2,4,2,8,2,8], index: 0, kind: input, shape index: {}]
  %s1 = inlined_call_operand.vmem [shape: f32[2,4,256], index: 1, kind: output, shape index: {}]
  $region1: #{tile.9} parent=0
    #allocation0 [shape = 'u8[16384]{0}', space=vmem, size = 0x4000, scoped, tag = 'scoped mem for output reshape']
    #allocation1 [shape = 'u8[524288]{0}', space=vmem, size = 0x80000, scoped, tag = 'scoped mem for input reshape']
    %s3 = sshll.u32 1, 2
    %s4 = ssub.s32 %s3, 1
    %s5 = smul.addr 2, 127
    %s6 = scalar_lea.vmem %s0, %s5
    %v7 = vld [vmem:[%s6] sm:%s4]
    %s8 = scalar_lea.vmem [#allocation1], 1016
    %9 = vst [vmem:[%s8] sm:%s4] %v7
    %s10 = smul.addr 2, 126
    %s11 = scalar_lea.vmem %s0, %s10
    %v12 = vld [vmem:[%s11] sm:%s4]
    %s13 = scalar_lea.vmem [#allocation1], 1008
    %14 = vst [vmem:[%s13] sm:%s4] %v12
    %s15 = smul.addr 2, 125
    %s16 = scalar_lea.vmem %s0, %s15
    %v17 = vld [vmem:[%s16] sm:%s4]
    %s18 = scalar_lea.vmem [#allocation1], 1000
    %19 = vst [vmem:[%s18] sm:%s4] %v17
    %s20 = smul.addr 2, 124
    %s21 = scalar_lea.vmem %s0, %s20
    %v22 = vld [vmem:[%s21] sm:%s4]
    %s23 = scalar_lea.vmem [#allocation1], 992
    %24 = vst [vmem:[%s23] sm:%s4] %v22
    %s25 = smul.addr 2, 123
    %s26 = scalar_lea.vmem %s0, %s25
    %v27 = vld [vmem:[%s26] sm:%s4]
    %s28 = scalar_lea.vmem [#allocation1], 984
    %29 = vst [vmem:[%s28] sm:%s4] %v27
    %s30 = smul.addr 2, 122
    %s31 = scalar_lea.vmem %s0, %s30
    %v32 = vld [vmem:[%s31] sm:%s4]
    %s33 = scalar_lea.vmem [#allocation1], 976
    %34 = vst [vmem:[%s33] sm:%s4] %v32
    %s35 = smul.addr 2, 121
    %s36 = scalar_lea.vmem %s0, %s35
    %v37 = vld [vmem:[%s36] sm:%s4]
    %s38 = scalar_lea.vmem [#allocation1], 968
    %39 = vst [vmem:[%s38] sm:%s4] %v37
    %s40 = smul.addr 2, 120
    %s41 = scalar_lea.vmem %s0, %s40
    %v42 = vld [vmem:[%s41] sm:%s4]
    %s43 = scalar_lea.vmem [#allocation1], 960
    %44 = vst [vmem:[%s43] sm:%s4] %v42
    %s45 = smul.addr 2, 119
    %s46 = scalar_lea.vmem %s0, %s45
    %v47 = vld [vmem:[%s46] sm:%s4]
    %s48 = scalar_lea.vmem [#allocation1], 952
    %49 = vst [vmem:[%s48] sm:%s4] %v47
    %s50 = smul.addr 2, 118
    %s51 = scalar_lea.vmem %s0, %s50
    %v52 = vld [vmem:[%s51] sm:%s4]
    %s53 = scalar_lea.vmem [#allocation1], 944
    %54 = vst [vmem:[%s53] sm:%s4] %v52
    %s55 = smul.addr 2, 117
    %s56 = scalar_lea.vmem %s0, %s55
    %v57 = vld [vmem:[%s56] sm:%s4]
    %s58 = scalar_lea.vmem [#allocation1], 936
    %59 = vst [vmem:[%s58] sm:%s4] %v57
    %s60 = smul.addr 2, 116
    %s61 = scalar_lea.vmem %s0, %s60
    %v62 = vld [vmem:[%s61] sm:%s4]
    %s63 = scalar_lea.vmem [#allocation1], 928
    %64 = vst [vmem:[%s63] sm:%s4] %v62
    %s65 = smul.addr 2, 115
    %s66 = scalar_lea.vmem %s0, %s65
    %v67 = vld [vmem:[%s66] sm:%s4]
    %s68 = scalar_lea.vmem [#allocation1], 920
    %69 = vst [vmem:[%s68] sm:%s4] %v67
    %s70 = smul.addr 2, 114
    %s71 = scalar_lea.vmem %s0, %s70
    %v72 = vld [vmem:[%s71] sm:%s4]
    %s73 = scalar_lea.vmem [#allocation1], 912
    %74 = vst [vmem:[%s73] sm:%s4] %v72
    %s75 = smul.addr 2, 113
    %s76 = scalar_lea.vmem %s0, %s75
    %v77 = vld [vmem:[%s76] sm:%s4]
    %s78 = scalar_lea.vmem [#allocation1], 904
    %79 = vst [vmem:[%s78] sm:%s4] %v77
    %s80 = smul.addr 2, 112
    %s81 = scalar_lea.vmem %s0, %s80
    %v82 = vld [vmem:[%s81] sm:%s4]
    %s83 = scalar_lea.vmem [#allocation1], 896
    %84 = vst [vmem:[%s83] sm:%s4] %v82
    %s85 = smul.addr 2, 111
    %s86 = scalar_lea.vmem %s0, %s85
    %v87 = vld [vmem:[%s86] sm:%s4]
    %s88 = scalar_lea.vmem [#allocation1], 888
    %89 = vst [vmem:[%s88] sm:%s4] %v87
    %s90 = smul.addr 2, 110
    %s91 = scalar_lea.vmem %s0, %s90
    %v92 = vld [vmem:[%s91] sm:%s4]
    %s93 = scalar_lea.vmem [#allocation1], 880
    %94 = vst [vmem:[%s93] sm:%s4] %v92
    %s95 = smul.addr 2, 109
    %s96 = scalar_lea.vmem %s0, %s95
    %v97 = vld [vmem:[%s96] sm:%s4]
    %s98 = scalar_lea.vmem [#allocation1], 872
    %99 = vst [vmem:[%s98] sm:%s4] %v97
    %s100 = smul.addr 2, 108
    %s101 = scalar_lea.vmem %s0, %s100
    %v102 = vld [vmem:[%s101] sm:%s4]
    %s103 = scalar_lea.vmem [#allocation1], 864
    %104 = vst [vmem:[%s103] sm:%s4] %v102
    %s105 = smul.addr 2, 107
    %s106 = scalar_lea.vmem %s0, %s105
    %v107 = vld [vmem:[%s106] sm:%s4]
    %s108 = scalar_lea.vmem [#allocation1], 856
    %109 = vst [vmem:[%s108] sm:%s4] %v107
    %s110 = smul.addr 2, 106
    %s111 = scalar_lea.vmem %s0, %s110
    %v112 = vld [vmem:[%s111] sm:%s4]
    %s113 = scalar_lea.vmem [#allocation1], 848
    %114 = vst [vmem:[%s113] sm:%s4] %v112
    %s115 = smul.addr 2, 105
    %s116 = scalar_lea.vmem %s0, %s115
    %v117 = vld [vmem:[%s116] sm:%s4]
    %s118 = scalar_lea.vmem [#allocation1], 840
    %119 = vst [vmem:[%s118] sm:%s4] %v117
    %s120 = smul.addr 2, 104
    %s121 = scalar_lea.vmem %s0, %s120
    %v122 = vld [vmem:[%s121] sm:%s4]
    %s123 = scalar_lea.vmem [#allocation1], 832
    %124 = vst [vmem:[%s123] sm:%s4] %v122
    %s125 = smul.addr 2, 103
    %s126 = scalar_lea.vmem %s0, %s125
    %v127 = vld [vmem:[%s126] sm:%s4]
    %s128 = scalar_lea.vmem [#allocation1], 824
    %129 = vst [vmem:[%s128] sm:%s4] %v127
    %s130 = smul.addr 2, 102
    %s131 = scalar_lea.vmem %s0, %s130
    %v132 = vld [vmem:[%s131] sm:%s4]
    %s133 = scalar_lea.vmem [#allocation1], 816
    %134 = vst [vmem:[%s133] sm:%s4] %v132
    %s135 = smul.addr 2, 101
    %s136 = scalar_lea.vmem %s0, %s135
    %v137 = vld [vmem:[%s136] sm:%s4]
    %s138 = scalar_lea.vmem [#allocation1], 808
    %139 = vst [vmem:[%s138] sm:%s4] %v137
    %s140 = smul.addr 2, 100
    %s141 = scalar_lea.vmem %s0, %s140
    %v142 = vld [vmem:[%s141] sm:%s4]
    %s143 = scalar_lea.vmem [#allocation1], 800
    %144 = vst [vmem:[%s143] sm:%s4] %v142
    %s145 = smul.addr 2, 99
    %s146 = scalar_lea.vmem %s0, %s145
    %v147 = vld [vmem:[%s146] sm:%s4]
    %s148 = scalar_lea.vmem [#allocation1], 792
    %149 = vst [vmem:[%s148] sm:%s4] %v147
    %s150 = smul.addr 2, 98
    %s151 = scalar_lea.vmem %s0, %s150
    %v152 = vld [vmem:[%s151] sm:%s4]
    %s153 = scalar_lea.vmem [#allocation1], 784
    %154 = vst [vmem:[%s153] sm:%s4] %v152
    %s155 = smul.addr 2, 97
    %s156 = scalar_lea.vmem %s0, %s155
    %v157 = vld [vmem:[%s156] sm:%s4]
    %s158 = scalar_lea.vmem [#allocation1], 776
    %159 = vst [vmem:[%s158] sm:%s4] %v157
    %s160 = smul.addr 2, 96
    %s161 = scalar_lea.vmem %s0, %s160
    %v162 = vld [vmem:[%s161] sm:%s4]
    %s163 = scalar_lea.vmem [#allocation1], 768
    %164 = vst [vmem:[%s163] sm:%s4] %v162
    %s165 = smul.addr 2, 95
    %s166 = scalar_lea.vmem %s0, %s165
    %v167 = vld [vmem:[%s166] sm:%s4]
    %s168 = scalar_lea.vmem [#allocation1], 760
    %169 = vst [vmem:[%s168] sm:%s4] %v167
    %s170 = smul.addr 2, 94
    %s171 = scalar_lea.vmem %s0, %s170
    %v172 = vld [vmem:[%s171] sm:%s4]
    %s173 = scalar_lea.vmem [#allocation1], 752
    %174 = vst [vmem:[%s173] sm:%s4] %v172
    %s175 = smul.addr 2, 93
    %s176 = scalar_lea.vmem %s0, %s175
    %v177 = vld [vmem:[%s176] sm:%s4]
    %s178 = scalar_lea.vmem [#allocation1], 744
    %179 = vst [vmem:[%s178] sm:%s4] %v177
    %s180 = smul.addr 2, 92
    %s181 = scalar_lea.vmem %s0, %s180
    %v182 = vld [vmem:[%s181] sm:%s4]
    %s183 = scalar_lea.vmem [#allocation1], 736
    %184 = vst [vmem:[%s183] sm:%s4] %v182
    %s185 = smul.addr 2, 91
    %s186 = scalar_lea.vmem %s0, %s185
    %v187 = vld [vmem:[%s186] sm:%s4]
    %s188 = scalar_lea.vmem [#allocation1], 728
    %189 = vst [vmem:[%s188] sm:%s4] %v187
    %s190 = smul.addr 2, 90
    %s191 = scalar_lea.vmem %s0, %s190
    %v192 = vld [vmem:[%s191] sm:%s4]
    %s193 = scalar_lea.vmem [#allocation1], 720
    %194 = vst [vmem:[%s193] sm:%s4] %v192
    %s195 = smul.addr 2, 89
    %s196 = scalar_lea.vmem %s0, %s195
    %v197 = vld [vmem:[%s196] sm:%s4]
    %s198 = scalar_lea.vmem [#allocation1], 712
    %199 = vst [vmem:[%s198] sm:%s4] %v197
    %s200 = smul.addr 2, 88
    %s201 = scalar_lea.vmem %s0, %s200
    %v202 = vld [vmem:[%s201] sm:%s4]
    %s203 = scalar_lea.vmem [#allocation1], 704
    %204 = vst [vmem:[%s203] sm:%s4] %v202
    %s205 = smul.addr 2, 87
    %s206 = scalar_lea.vmem %s0, %s205
    %v207 = vld [vmem:[%s206] sm:%s4]
    %s208 = scalar_lea.vmem [#allocation1], 696
    %209 = vst [vmem:[%s208] sm:%s4] %v207
    %s210 = smul.addr 2, 86
    %s211 = scalar_lea.vmem %s0, %s210
    %v212 = vld [vmem:[%s211] sm:%s4]
    %s213 = scalar_lea.vmem [#allocation1], 688
    %214 = vst [vmem:[%s213] sm:%s4] %v212
    %s215 = smul.addr 2, 85
    %s216 = scalar_lea.vmem %s0, %s215
    %v217 = vld [vmem:[%s216] sm:%s4]
    %s218 = scalar_lea.vmem [#allocation1], 680
    %219 = vst [vmem:[%s218] sm:%s4] %v217
    %s220 = smul.addr 2, 84
    %s221 = scalar_lea.vmem %s0, %s220
    %v222 = vld [vmem:[%s221] sm:%s4]
    %s223 = scalar_lea.vmem [#allocation1], 672
    %224 = vst [vmem:[%s223] sm:%s4] %v222
    %s225 = smul.addr 2, 83
    %s226 = scalar_lea.vmem %s0, %s225
    %v227 = vld [vmem:[%s226] sm:%s4]
    %s228 = scalar_lea.vmem [#allocation1], 664
    %229 = vst [vmem:[%s228] sm:%s4] %v227
    %s230 = smul.addr 2, 82
    %s231 = scalar_lea.vmem %s0, %s230
    %v232 = vld [vmem:[%s231] sm:%s4]
    %s233 = scalar_lea.vmem [#allocation1], 656
    %234 = vst [vmem:[%s233] sm:%s4] %v232
    %s235 = smul.addr 2, 81
    %s236 = scalar_lea.vmem %s0, %s235
    %v237 = vld [vmem:[%s236] sm:%s4]
    %s238 = scalar_lea.vmem [#allocation1], 648
    %239 = vst [vmem:[%s238] sm:%s4] %v237
    %s240 = smul.addr 2, 80
    %s241 = scalar_lea.vmem %s0, %s240
    %v242 = vld [vmem:[%s241] sm:%s4]
    %s243 = scalar_lea.vmem [#allocation1], 640
    %244 = vst [vmem:[%s243] sm:%s4] %v242
    %s245 = smul.addr 2, 79
    %s246 = scalar_lea.vmem %s0, %s245
    %v247 = vld [vmem:[%s246] sm:%s4]
    %s248 = scalar_lea.vmem [#allocation1], 632
    %249 = vst [vmem:[%s248] sm:%s4] %v247
    %s250 = smul.addr 2, 78
    %s251 = scalar_lea.vmem %s0, %s250
    %v252 = vld [vmem:[%s251] sm:%s4]
    %s253 = scalar_lea.vmem [#allocation1], 624
    %254 = vst [vmem:[%s253] sm:%s4] %v252
    %s255 = smul.addr 2, 77
    %s256 = scalar_lea.vmem %s0, %s255
    %v257 = vld [vmem:[%s256] sm:%s4]
    %s258 = scalar_lea.vmem [#allocation1], 616
    %259 = vst [vmem:[%s258] sm:%s4] %v257
    %s260 = smul.addr 2, 76
    %s261 = scalar_lea.vmem %s0, %s260
    %v262 = vld [vmem:[%s261] sm:%s4]
    %s263 = scalar_lea.vmem [#allocation1], 608
    %264 = vst [vmem:[%s263] sm:%s4] %v262
    %s265 = smul.addr 2, 75
    %s266 = scalar_lea.vmem %s0, %s265
    %v267 = vld [vmem:[%s266] sm:%s4]
    %s268 = scalar_lea.vmem [#allocation1], 600
    %269 = vst [vmem:[%s268] sm:%s4] %v267
    %s270 = smul.addr 2, 74
    %s271 = scalar_lea.vmem %s0, %s270
    %v272 = vld [vmem:[%s271] sm:%s4]
    %s273 = scalar_lea.vmem [#allocation1], 592
    %274 = vst [vmem:[%s273] sm:%s4] %v272
    %s275 = smul.addr 2, 73
    %s276 = scalar_lea.vmem %s0, %s275
    %v277 = vld [vmem:[%s276] sm:%s4]
    %s278 = scalar_lea.vmem [#allocation1], 584
    %279 = vst [vmem:[%s278] sm:%s4] %v277
    %s280 = smul.addr 2, 72
    %s281 = scalar_lea.vmem %s0, %s280
    %v282 = vld [vmem:[%s281] sm:%s4]
    %s283 = scalar_lea.vmem [#allocation1], 576
    %284 = vst [vmem:[%s283] sm:%s4] %v282
    %s285 = smul.addr 2, 71
    %s286 = scalar_lea.vmem %s0, %s285
    %v287 = vld [vmem:[%s286] sm:%s4]
    %s288 = scalar_lea.vmem [#allocation1], 568
    %289 = vst [vmem:[%s288] sm:%s4] %v287
    %s290 = smul.addr 2, 70
    %s291 = scalar_lea.vmem %s0, %s290
    %v292 = vld [vmem:[%s291] sm:%s4]
    %s293 = scalar_lea.vmem [#allocation1], 560
    %294 = vst [vmem:[%s293] sm:%s4] %v292
    %s295 = smul.addr 2, 69
    %s296 = scalar_lea.vmem %s0, %s295
    %v297 = vld [vmem:[%s296] sm:%s4]
    %s298 = scalar_lea.vmem [#allocation1], 552
    %299 = vst [vmem:[%s298] sm:%s4] %v297
    %s300 = smul.addr 2, 68
    %s301 = scalar_lea.vmem %s0, %s300
    %v302 = vld [vmem:[%s301] sm:%s4]
    %s303 = scalar_lea.vmem [#allocation1], 544
    %304 = vst [vmem:[%s303] sm:%s4] %v302
    %s305 = smul.addr 2, 67
    %s306 = scalar_lea.vmem %s0, %s305
    %v307 = vld [vmem:[%s306] sm:%s4]
    %s308 = scalar_lea.vmem [#allocation1], 536
    %309 = vst [vmem:[%s308] sm:%s4] %v307
    %s310 = smul.addr 2, 66
    %s311 = scalar_lea.vmem %s0, %s310
    %v312 = vld [vmem:[%s311] sm:%s4]
    %s313 = scalar_lea.vmem [#allocation1], 528
    %314 = vst [vmem:[%s313] sm:%s4] %v312
    %s315 = smul.addr 2, 65
    %s316 = scalar_lea.vmem %s0, %s315
    %v317 = vld [vmem:[%s316] sm:%s4]
    %s318 = scalar_lea.vmem [#allocation1], 520
    %319 = vst [vmem:[%s318] sm:%s4] %v317
    %s320 = smul.addr 2, 64
    %s321 = scalar_lea.vmem %s0, %s320
    %v322 = vld [vmem:[%s321] sm:%s4]
    %s323 = scalar_lea.vmem [#allocation1], 512
    %324 = vst [vmem:[%s323] sm:%s4] %v322
    %s325 = smul.addr 2, 63
    %s326 = scalar_lea.vmem %s0, %s325
    %v327 = vld [vmem:[%s326] sm:%s4]
    %s328 = scalar_lea.vmem [#allocation1], 504
    %329 = vst [vmem:[%s328] sm:%s4] %v327
    %s330 = smul.addr 2, 62
    %s331 = scalar_lea.vmem %s0, %s330
    %v332 = vld [vmem:[%s331] sm:%s4]
    %s333 = scalar_lea.vmem [#allocation1], 496
    %334 = vst [vmem:[%s333] sm:%s4] %v332
    %s335 = smul.addr 2, 61
    %s336 = scalar_lea.vmem %s0, %s335
    %v337 = vld [vmem:[%s336] sm:%s4]
    %s338 = scalar_lea.vmem [#allocation1], 488
    %339 = vst [vmem:[%s338] sm:%s4] %v337
    %s340 = smul.addr 2, 60
    %s341 = scalar_lea.vmem %s0, %s340
    %v342 = vld [vmem:[%s341] sm:%s4]
    %s343 = scalar_lea.vmem [#allocation1], 480
    %344 = vst [vmem:[%s343] sm:%s4] %v342
    %s345 = smul.addr 2, 59
    %s346 = scalar_lea.vmem %s0, %s345
    %v347 = vld [vmem:[%s346] sm:%s4]
    %s348 = scalar_lea.vmem [#allocation1], 472
    %349 = vst [vmem:[%s348] sm:%s4] %v347
    %s350 = smul.addr 2, 58
    %s351 = scalar_lea.vmem %s0, %s350
    %v352 = vld [vmem:[%s351] sm:%s4]
    %s353 = scalar_lea.vmem [#allocation1], 464
    %354 = vst [vmem:[%s353] sm:%s4] %v352
    %s355 = smul.addr 2, 57
    %s356 = scalar_lea.vmem %s0, %s355
    %v357 = vld [vmem:[%s356] sm:%s4]
    %s358 = scalar_lea.vmem [#allocation1], 456
    %359 = vst [vmem:[%s358] sm:%s4] %v357
    %s360 = smul.addr 2, 56
    %s361 = scalar_lea.vmem %s0, %s360
    %v362 = vld [vmem:[%s361] sm:%s4]
    %s363 = scalar_lea.vmem [#allocation1], 448
    %364 = vst [vmem:[%s363] sm:%s4] %v362
    %s365 = smul.addr 2, 55
    %s366 = scalar_lea.vmem %s0, %s365
    %v367 = vld [vmem:[%s366] sm:%s4]
    %s368 = scalar_lea.vmem [#allocation1], 440
    %369 = vst [vmem:[%s368] sm:%s4] %v367
    %s370 = smul.addr 2, 54
    %s371 = scalar_lea.vmem %s0, %s370
    %v372 = vld [vmem:[%s371] sm:%s4]
    %s373 = scalar_lea.vmem [#allocation1], 432
    %374 = vst [vmem:[%s373] sm:%s4] %v372
    %s375 = smul.addr 2, 53
    %s376 = scalar_lea.vmem %s0, %s375
    %v377 = vld [vmem:[%s376] sm:%s4]
    %s378 = scalar_lea.vmem [#allocation1], 424
    %379 = vst [vmem:[%s378] sm:%s4] %v377
    %s380 = smul.addr 2, 52
    %s381 = scalar_lea.vmem %s0, %s380
    %v382 = vld [vmem:[%s381] sm:%s4]
    %s383 = scalar_lea.vmem [#allocation1], 416
    %384 = vst [vmem:[%s383] sm:%s4] %v382
    %s385 = smul.addr 2, 51
    %s386 = scalar_lea.vmem %s0, %s385
    %v387 = vld [vmem:[%s386] sm:%s4]
    %s388 = scalar_lea.vmem [#allocation1], 408
    %389 = vst [vmem:[%s388] sm:%s4] %v387
    %s390 = smul.addr 2, 50
    %s391 = scalar_lea.vmem %s0, %s390
    %v392 = vld [vmem:[%s391] sm:%s4]
    %s393 = scalar_lea.vmem [#allocation1], 400
    %394 = vst [vmem:[%s393] sm:%s4] %v392
    %s395 = smul.addr 2, 49
    %s396 = scalar_lea.vmem %s0, %s395
    %v397 = vld [vmem:[%s396] sm:%s4]
    %s398 = scalar_lea.vmem [#allocation1], 392
    %399 = vst [vmem:[%s398] sm:%s4] %v397
    %s400 = smul.addr 2, 48
    %s401 = scalar_lea.vmem %s0, %s400
    %v402 = vld [vmem:[%s401] sm:%s4]
    %s403 = scalar_lea.vmem [#allocation1], 384
    %404 = vst [vmem:[%s403] sm:%s4] %v402
    %s405 = smul.addr 2, 47
    %s406 = scalar_lea.vmem %s0, %s405
    %v407 = vld [vmem:[%s406] sm:%s4]
    %s408 = scalar_lea.vmem [#allocation1], 376
    %409 = vst [vmem:[%s408] sm:%s4] %v407
    %s410 = smul.addr 2, 46
    %s411 = scalar_lea.vmem %s0, %s410
    %v412 = vld [vmem:[%s411] sm:%s4]
    %s413 = scalar_lea.vmem [#allocation1], 368
    %414 = vst [vmem:[%s413] sm:%s4] %v412
    %s415 = smul.addr 2, 45
    %s416 = scalar_lea.vmem %s0, %s415
    %v417 = vld [vmem:[%s416] sm:%s4]
    %s418 = scalar_lea.vmem [#allocation1], 360
    %419 = vst [vmem:[%s418] sm:%s4] %v417
    %s420 = smul.addr 2, 44
    %s421 = scalar_lea.vmem %s0, %s420
    %v422 = vld [vmem:[%s421] sm:%s4]
    %s423 = scalar_lea.vmem [#allocation1], 352
    %424 = vst [vmem:[%s423] sm:%s4] %v422
    %s425 = smul.addr 2, 43
    %s426 = scalar_lea.vmem %s0, %s425
    %v427 = vld [vmem:[%s426] sm:%s4]
    %s428 = scalar_lea.vmem [#allocation1], 344
    %429 = vst [vmem:[%s428] sm:%s4] %v427
    %s430 = smul.addr 2, 42
    %s431 = scalar_lea.vmem %s0, %s430
    %v432 = vld [vmem:[%s431] sm:%s4]
    %s433 = scalar_lea.vmem [#allocation1], 336
    %434 = vst [vmem:[%s433] sm:%s4] %v432
    %s435 = smul.addr 2, 41
    %s436 = scalar_lea.vmem %s0, %s435
    %v437 = vld [vmem:[%s436] sm:%s4]
    %s438 = scalar_lea.vmem [#allocation1], 328
    %439 = vst [vmem:[%s438] sm:%s4] %v437
    %s440 = smul.addr 2, 40
    %s441 = scalar_lea.vmem %s0, %s440
    %v442 = vld [vmem:[%s441] sm:%s4]
    %s443 = scalar_lea.vmem [#allocation1], 320
    %444 = vst [vmem:[%s443] sm:%s4] %v442
    %s445 = smul.addr 2, 39
    %s446 = scalar_lea.vmem %s0, %s445
    %v447 = vld [vmem:[%s446] sm:%s4]
    %s448 = scalar_lea.vmem [#allocation1], 312
    %449 = vst [vmem:[%s448] sm:%s4] %v447
    %s450 = smul.addr 2, 38
    %s451 = scalar_lea.vmem %s0, %s450
    %v452 = vld [vmem:[%s451] sm:%s4]
    %s453 = scalar_lea.vmem [#allocation1], 304
    %454 = vst [vmem:[%s453] sm:%s4] %v452
    %s455 = smul.addr 2, 37
    %s456 = scalar_lea.vmem %s0, %s455
    %v457 = vld [vmem:[%s456] sm:%s4]
    %s458 = scalar_lea.vmem [#allocation1], 296
    %459 = vst [vmem:[%s458] sm:%s4] %v457
    %s460 = smul.addr 2, 36
    %s461 = scalar_lea.vmem %s0, %s460
    %v462 = vld [vmem:[%s461] sm:%s4]
    %s463 = scalar_lea.vmem [#allocation1], 288
    %464 = vst [vmem:[%s463] sm:%s4] %v462
    %s465 = smul.addr 2, 35
    %s466 = scalar_lea.vmem %s0, %s465
    %v467 = vld [vmem:[%s466] sm:%s4]
    %s468 = scalar_lea.vmem [#allocation1], 280
    %469 = vst [vmem:[%s468] sm:%s4] %v467
    %s470 = smul.addr 2, 34
    %s471 = scalar_lea.vmem %s0, %s470
    %v472 = vld [vmem:[%s471] sm:%s4]
    %s473 = scalar_lea.vmem [#allocation1], 272
    %474 = vst [vmem:[%s473] sm:%s4] %v472
    %s475 = smul.addr 2, 33
    %s476 = scalar_lea.vmem %s0, %s475
    %v477 = vld [vmem:[%s476] sm:%s4]
    %s478 = scalar_lea.vmem [#allocation1], 264
    %479 = vst [vmem:[%s478] sm:%s4] %v477
    %s480 = smul.addr 2, 32
    %s481 = scalar_lea.vmem %s0, %s480
    %v482 = vld [vmem:[%s481] sm:%s4]
    %s483 = scalar_lea.vmem [#allocation1], 256
    %484 = vst [vmem:[%s483] sm:%s4] %v482
    %s485 = smul.addr 2, 31
    %s486 = scalar_lea.vmem %s0, %s485
    %v487 = vld [vmem:[%s486] sm:%s4]
    %s488 = scalar_lea.vmem [#allocation1], 248
    %489 = vst [vmem:[%s488] sm:%s4] %v487
    %s490 = smul.addr 2, 30
    %s491 = scalar_lea.vmem %s0, %s490
    %v492 = vld [vmem:[%s491] sm:%s4]
    %s493 = scalar_lea.vmem [#allocation1], 240
    %494 = vst [vmem:[%s493] sm:%s4] %v492
    %s495 = smul.addr 2, 29
    %s496 = scalar_lea.vmem %s0, %s495
    %v497 = vld [vmem:[%s496] sm:%s4]
    %s498 = scalar_lea.vmem [#allocation1], 232
    %499 = vst [vmem:[%s498] sm:%s4] %v497
    %s500 = smul.addr 2, 28
    %s501 = scalar_lea.vmem %s0, %s500
    %v502 = vld [vmem:[%s501] sm:%s4]
    %s503 = scalar_lea.vmem [#allocation1], 224
    %504 = vst [vmem:[%s503] sm:%s4] %v502
    %s505 = smul.addr 2, 27
    %s506 = scalar_lea.vmem %s0, %s505
    %v507 = vld [vmem:[%s506] sm:%s4]
    %s508 = scalar_lea.vmem [#allocation1], 216
    %509 = vst [vmem:[%s508] sm:%s4] %v507
    %s510 = smul.addr 2, 26
    %s511 = scalar_lea.vmem %s0, %s510
    %v512 = vld [vmem:[%s511] sm:%s4]
    %s513 = scalar_lea.vmem [#allocation1], 208
    %514 = vst [vmem:[%s513] sm:%s4] %v512
    %s515 = smul.addr 2, 25
    %s516 = scalar_lea.vmem %s0, %s515
    %v517 = vld [vmem:[%s516] sm:%s4]
    %s518 = scalar_lea.vmem [#allocation1], 200
    %519 = vst [vmem:[%s518] sm:%s4] %v517
    %s520 = smul.addr 2, 24
    %s521 = scalar_lea.vmem %s0, %s520
    %v522 = vld [vmem:[%s521] sm:%s4]
    %s523 = scalar_lea.vmem [#allocation1], 192
    %524 = vst [vmem:[%s523] sm:%s4] %v522
    %s525 = smul.addr 2, 23
    %s526 = scalar_lea.vmem %s0, %s525
    %v527 = vld [vmem:[%s526] sm:%s4]
    %s528 = scalar_lea.vmem [#allocation1], 184
    %529 = vst [vmem:[%s528] sm:%s4] %v527
    %s530 = smul.addr 2, 22
    %s531 = scalar_lea.vmem %s0, %s530
    %v532 = vld [vmem:[%s531] sm:%s4]
    %s533 = scalar_lea.vmem [#allocation1], 176
    %534 = vst [vmem:[%s533] sm:%s4] %v532
    %s535 = smul.addr 2, 21
    %s536 = scalar_lea.vmem %s0, %s535
    %v537 = vld [vmem:[%s536] sm:%s4]
    %s538 = scalar_lea.vmem [#allocation1], 168
    %539 = vst [vmem:[%s538] sm:%s4] %v537
    %s540 = smul.addr 2, 20
    %s541 = scalar_lea.vmem %s0, %s540
    %v542 = vld [vmem:[%s541] sm:%s4]
    %s543 = scalar_lea.vmem [#allocation1], 160
    %544 = vst [vmem:[%s543] sm:%s4] %v542
    %s545 = smul.addr 2, 19
    %s546 = scalar_lea.vmem %s0, %s545
    %v547 = vld [vmem:[%s546] sm:%s4]
    %s548 = scalar_lea.vmem [#allocation1], 152
    %549 = vst [vmem:[%s548] sm:%s4] %v547
    %s550 = smul.addr 2, 18
    %s551 = scalar_lea.vmem %s0, %s550
    %v552 = vld [vmem:[%s551] sm:%s4]
    %s553 = scalar_lea.vmem [#allocation1], 144
    %554 = vst [vmem:[%s553] sm:%s4] %v552
    %s555 = smul.addr 2, 17
    %s556 = scalar_lea.vmem %s0, %s555
    %v557 = vld [vmem:[%s556] sm:%s4]
    %s558 = scalar_lea.vmem [#allocation1], 136
    %559 = vst [vmem:[%s558] sm:%s4] %v557
    %s560 = smul.addr 2, 16
    %s561 = scalar_lea.vmem %s0, %s560
    %v562 = vld [vmem:[%s561] sm:%s4]
    %s563 = scalar_lea.vmem [#allocation1], 128
    %564 = vst [vmem:[%s563] sm:%s4] %v562
    %s565 = smul.addr 2, 15
    %s566 = scalar_lea.vmem %s0, %s565
    %v567 = vld [vmem:[%s566] sm:%s4]
    %s568 = scalar_lea.vmem [#allocation1], 120
    %569 = vst [vmem:[%s568] sm:%s4] %v567
    %s570 = smul.addr 2, 14
    %s571 = scalar_lea.vmem %s0, %s570
    %v572 = vld [vmem:[%s571] sm:%s4]
    %s573 = scalar_lea.vmem [#allocation1], 112
    %574 = vst [vmem:[%s573] sm:%s4] %v572
    %s575 = smul.addr 2, 13
    %s576 = scalar_lea.vmem %s0, %s575
    %v577 = vld [vmem:[%s576] sm:%s4]
    %s578 = scalar_lea.vmem [#allocation1], 104
    %579 = vst [vmem:[%s578] sm:%s4] %v577
    %s580 = smul.addr 2, 12
    %s581 = scalar_lea.vmem %s0, %s580
    %v582 = vld [vmem:[%s581] sm:%s4]
    %s583 = scalar_lea.vmem [#allocation1], 96
    %584 = vst [vmem:[%s583] sm:%s4] %v582
    %s585 = smul.addr 2, 11
    %s586 = scalar_lea.vmem %s0, %s585
    %v587 = vld [vmem:[%s586] sm:%s4]
    %s588 = scalar_lea.vmem [#allocation1], 88
    %589 = vst [vmem:[%s588] sm:%s4] %v587
    %s590 = smul.addr 2, 10
    %s591 = scalar_lea.vmem %s0, %s590
    %v592 = vld [vmem:[%s591] sm:%s4]
    %s593 = scalar_lea.vmem [#allocation1], 80
    %594 = vst [vmem:[%s593] sm:%s4] %v592
    %s595 = smul.addr 2, 9
    %s596 = scalar_lea.vmem %s0, %s595
    %v597 = vld [vmem:[%s596] sm:%s4]
    %s598 = scalar_lea.vmem [#allocation1], 72
    %599 = vst [vmem:[%s598] sm:%s4] %v597
    %s600 = smul.addr 2, 8
    %s601 = scalar_lea.vmem %s0, %s600
    %v602 = vld [vmem:[%s601] sm:%s4]
    %s603 = scalar_lea.vmem [#allocation1], 64
    %604 = vst [vmem:[%s603] sm:%s4] %v602
    %s605 = smul.addr 2, 7
    %s606 = scalar_lea.vmem %s0, %s605
    %v607 = vld [vmem:[%s606] sm:%s4]
    %s608 = scalar_lea.vmem [#allocation1], 56
    %609 = vst [vmem:[%s608] sm:%s4] %v607
    %s610 = smul.addr 2, 6
    %s611 = scalar_lea.vmem %s0, %s610
    %v612 = vld [vmem:[%s611] sm:%s4]
    %s613 = scalar_lea.vmem [#allocation1], 48
    %614 = vst [vmem:[%s613] sm:%s4] %v612
    %s615 = smul.addr 2, 5
    %s616 = scalar_lea.vmem %s0, %s615
    %v617 = vld [vmem:[%s616] sm:%s4]
    %s618 = scalar_lea.vmem [#allocation1], 40
    %619 = vst [vmem:[%s618] sm:%s4] %v617
    %s620 = smul.addr 2, 4
    %s621 = scalar_lea.vmem %s0, %s620
    %v622 = vld [vmem:[%s621] sm:%s4]
    %s623 = scalar_lea.vmem [#allocation1], 32
    %624 = vst [vmem:[%s623] sm:%s4] %v622
    %s625 = smul.addr 2, 3
    %s626 = scalar_lea.vmem %s0, %s625
    %v627 = vld [vmem:[%s626] sm:%s4]
    %s628 = scalar_lea.vmem [#allocation1], 24
    %629 = vst [vmem:[%s628] sm:%s4] %v627
    %s630 = smul.addr 2, 2
    %s631 = scalar_lea.vmem %s0, %s630
    %v632 = vld [vmem:[%s631] sm:%s4]
    %s633 = scalar_lea.vmem [#allocation1], 16
    %634 = vst [vmem:[%s633] sm:%s4] %v632
    %s635 = scalar_lea.vmem %s0, 2
    %v636 = vld [vmem:[%s635] sm:%s4]
    %s637 = scalar_lea.vmem [#allocation1], 8
    %638 = vst [vmem:[%s637] sm:%s4] %v636
    %v639 = vld [vmem:[%s0] sm:%s4]
    %640 = vst [vmem:[#allocation1] sm:%s4] %v639
    %v641 = vld [vmem:[#allocation1] sm:$0x1]
    %s642 = scalar_lea.vmem [#allocation1], 63
    %v643 = vld [vmem:[%s642] sm:$0x2]
    %vm644 = vcmask 1041409
    %v645 = vsel %vm644, %v643, %v641
    %s646 = scalar_lea.vmem [#allocation1], 126
    %v647 = vld [vmem:[%s646] sm:$0x4]
    %vm648 = vcmask 1042434
    %v649 = vsel %vm648, %v647, %v645
    %s650 = scalar_lea.vmem [#allocation1], 189
    %v651 = vld [vmem:[%s650] sm:$0x8]
    %vm652 = vcmask 1043459
    %v653 = vsel %vm652, %v651, %v649
    %s654 = scalar_lea.vmem [#allocation1], 252
    %v655 = vld [vmem:[%s654] sm:$0x10]
    %vm656 = vcmask 1044484
    %v657 = vsel %vm656, %v655, %v653
    %s658 = scalar_lea.vmem [#allocation1], 315
    %v659 = vld [vmem:[%s658] sm:$0x20]
    %vm660 = vcmask 1045509
    %v661 = vsel %vm660, %v659, %v657
    %s662 = scalar_lea.vmem [#allocation1], 378
    %v663 = vld [vmem:[%s662] sm:$0x40]
    %vm664 = vcmask 1046534
    %v665 = vsel %vm664, %v663, %v661
    %s666 = scalar_lea.vmem [#allocation1], 441
    %v667 = vld [vmem:[%s666] sm:$0x80]
    %vm668 = vcmask 1047559
    %v669 = vsel %vm668, %v667, %v665
    %vm670 = vcmask 64512
    %671 = vst.msk [vmem:[#allocation0] ss:$8 sm:$0x3] %vm670, %v669
    %s672 = scalar_lea.vmem [#allocation0], 4294967281
    %673 = vst.msk [vmem:[%s672] ss:$8 sm:$0xc] %vm670, %v669
    %s674 = scalar_lea.vmem [#allocation0], 4294967266
    %675 = vst.msk [vmem:[%s674] ss:$8 sm:$0x30] %vm670, %v669
    %s676 = scalar_lea.vmem [#allocation0], 4294967251
    %677 = vst.msk [vmem:[%s676] ss:$8 sm:$0xc0] %vm670, %v669
    %s678 = scalar_lea.vmem [#allocation1], 512
    %v679 = vld [vmem:[%s678] sm:$0x1]
    %s680 = scalar_lea.vmem [#allocation1], 575
    %v681 = vld [vmem:[%s680] sm:$0x2]
    %vm682 = vcmask 1041409
    %v683 = vsel %vm682, %v681, %v679
    %s684 = scalar_lea.vmem [#allocation1], 638
    %v685 = vld [vmem:[%s684] sm:$0x4]
    %vm686 = vcmask 1042434
    %v687 = vsel %vm686, %v685, %v683
    %s688 = scalar_lea.vmem [#allocation1], 701
    %v689 = vld [vmem:[%s688] sm:$0x8]
    %vm690 = vcmask 1043459
    %v691 = vsel %vm690, %v689, %v687
    %s692 = scalar_lea.vmem [#allocation1], 764
    %v693 = vld [vmem:[%s692] sm:$0x10]
    %vm694 = vcmask 1044484
    %v695 = vsel %vm694, %v693, %v691
    %s696 = scalar_lea.vmem [#allocation1], 827
    %v697 = vld [vmem:[%s696] sm:$0x20]
    %vm698 = vcmask 1045509
    %v699 = vsel %vm698, %v697, %v695
    %s700 = scalar_lea.vmem [#allocation1], 890
    %v701 = vld [vmem:[%s700] sm:$0x40]
    %vm702 = vcmask 1046534
    %v703 = vsel %vm702, %v701, %v699
    %s704 = scalar_lea.vmem [#allocation1], 953
    %v705 = vld [vmem:[%s704] sm:$0x80]
    %vm706 = vcmask 1047559
    %v707 = vsel %vm706, %v705, %v703
    %vm708 = vcmask 64512
    %s709 = scalar_lea.vmem [#allocation0], 16
    %710 = vst.msk [vmem:[%s709] ss:$8 sm:$0x3] %vm708, %v707
    %s711 = scalar_lea.vmem [#allocation0], 1
    %712 = vst.msk [vmem:[%s711] ss:$8 sm:$0xc] %vm708, %v707
    %s713 = scalar_lea.vmem [#allocation0], 4294967282
    %714 = vst.msk [vmem:[%s713] ss:$8 sm:$0x30] %vm708, %v707
    %s715 = scalar_lea.vmem [#allocation0], 4294967267
    %716 = vst.msk [vmem:[%s715] ss:$8 sm:$0xc0] %vm708, %v707
    %s717 = scalar_lea.vmem [#allocation1], 57
    %v718 = vld [vmem:[%s717] sm:$0x1]
    %s719 = scalar_lea.vmem [#allocation1], 184
    %v720 = vld [vmem:[%s719] sm:$0x2]
    %vm721 = vcmask 1041409
    %v722 = vsel %vm721, %v720, %v718
    %s723 = scalar_lea.vmem [#allocation1], 311
    %v724 = vld [vmem:[%s723] sm:$0x4]
    %vm725 = vcmask 1042434
    %v726 = vsel %vm725, %v724, %v722
    %s727 = scalar_lea.vmem [#allocation1], 438
    %v728 = vld [vmem:[%s727] sm:$0x8]
    %vm729 = vcmask 1043459
    %v730 = vsel %vm729, %v728, %v726
    %s731 = scalar_lea.vmem [#allocation1], 117
    %v732 = vld [vmem:[%s731] sm:$0x10]
    %vm733 = vcmask 1044484
    %v734 = vsel %vm733, %v732, %v730
    %s735 = scalar_lea.vmem [#allocation1], 244
    %v736 = vld [vmem:[%s735] sm:$0x20]
    %vm737 = vcmask 1045509
    %v738 = vsel %vm737, %v736, %v734
    %s739 = scalar_lea.vmem [#allocation1], 371
    %v740 = vld [vmem:[%s739] sm:$0x40]
    %vm741 = vcmask 1046534
    %v742 = vsel %vm741, %v740, %v738
    %s743 = scalar_lea.vmem [#allocation1], 498
    %v744 = vld [vmem:[%s743] sm:$0x80]
    %vm745 = vcmask 1047559
    %v746 = vsel %vm745, %v744, %v742
    %747 = vrot.lane.b32.xlu0 %v746, 120
    %v748 = vpop.permute.xlu0 %747
    %vm749 = vcmask 1048512
    %750 = vst.msk [vmem:[#allocation0] sm:$0xf] %vm749, %v748
    %s751 = scalar_lea.vmem [#allocation0], 4
    %752 = vst.msk [vmem:[%s751] sm:$0xf0] %vm749, %v748
    %s753 = scalar_lea.vmem [#allocation1], 569
    %v754 = vld [vmem:[%s753] sm:$0x1]
    %s755 = scalar_lea.vmem [#allocation1], 696
    %v756 = vld [vmem:[%s755] sm:$0x2]
    %vm757 = vcmask 1041409
    %v758 = vsel %vm757, %v756, %v754
    %s759 = scalar_lea.vmem [#allocation1], 823
    %v760 = vld [vmem:[%s759] sm:$0x4]
    %vm761 = vcmask 1042434
    %v762 = vsel %vm761, %v760, %v758
    %s763 = scalar_lea.vmem [#allocation1], 950
    %v764 = vld [vmem:[%s763] sm:$0x8]
    %vm765 = vcmask 1043459
    %v766 = vsel %vm765, %v764, %v762
    %s767 = scalar_lea.vmem [#allocation1], 629
    %v768 = vld [vmem:[%s767] sm:$0x10]
    %vm769 = vcmask 1044484
    %v770 = vsel %vm769, %v768, %v766
    %s771 = scalar_lea.vmem [#allocation1], 756
    %v772 = vld [vmem:[%s771] sm:$0x20]
    %vm773 = vcmask 1045509
    %v774 = vsel %vm773, %v772, %v770
    %s775 = scalar_lea.vmem [#allocation1], 883
    %v776 = vld [vmem:[%s775] sm:$0x40]
    %vm777 = vcmask 1046534
    %v778 = vsel %vm777, %v776, %v774
    %s779 = scalar_lea.vmem [#allocation1], 1010
    %v780 = vld [vmem:[%s779] sm:$0x80]
    %vm781 = vcmask 1047559
    %v782 = vsel %vm781, %v780, %v778
    %783 = vrot.lane.b32.xlu0 %v782, 120
    %v784 = vpop.permute.xlu0 %783
    %vm785 = vcmask 1048512
    %s786 = scalar_lea.vmem [#allocation0], 16
    %787 = vst.msk [vmem:[%s786] sm:$0xf] %vm785, %v784
    %s788 = scalar_lea.vmem [#allocation0], 20
    %789 = vst.msk [vmem:[%s788] sm:$0xf0] %vm785, %v784
    %s790 = scalar_lea.vmem [#allocation1], 56
    %v791 = vld [vmem:[%s790] sm:$0x1]
    %s792 = scalar_lea.vmem [#allocation1], 183
    %v793 = vld [vmem:[%s792] sm:$0x2]
    %vm794 = vcmask 1041409
    %v795 = vsel %vm794, %v793, %v791
    %s796 = scalar_lea.vmem [#allocation1], 310
    %v797 = vld [vmem:[%s796] sm:$0x4]
    %vm798 = vcmask 1042434
    %v799 = vsel %vm798, %v797, %v795
    %s800 = scalar_lea.vmem [#allocation1], 437
    %v801 = vld [vmem:[%s800] sm:$0x8]
    %vm802 = vcmask 1043459
    %v803 = vsel %vm802, %v801, %v799
    %s804 = scalar_lea.vmem [#allocation1], 116
    %v805 = vld [vmem:[%s804] sm:$0x10]
    %vm806 = vcmask 1044484
    %v807 = vsel %vm806, %v805, %v803
    %s808 = scalar_lea.vmem [#allocation1], 243
    %v809 = vld [vmem:[%s808] sm:$0x20]
    %vm810 = vcmask 1045509
    %v811 = vsel %vm810, %v809, %v807
    %s812 = scalar_lea.vmem [#allocation1], 370
    %v813 = vld [vmem:[%s812] sm:$0x40]
    %vm814 = vcmask 1046534
    %v815 = vsel %vm814, %v813, %v811
    %s816 = scalar_lea.vmem [#allocation1], 497
    %v817 = vld [vmem:[%s816] sm:$0x80]
    %vm818 = vcmask 1047559
    %v819 = vsel %vm818, %v817, %v815
    %820 = vrot.lane.b32.xlu0 %v819, 112
    %v821 = vpop.permute.xlu0 %820
    %vm822 = vcmask 982912
    %823 = vst.msk [vmem:[#allocation0] sm:$0xf] %vm822, %v821
    %s824 = scalar_lea.vmem [#allocation0], 4
    %825 = vst.msk [vmem:[%s824] sm:$0xf0] %vm822, %v821
    %s826 = scalar_lea.vmem [#allocation1], 568
    %v827 = vld [vmem:[%s826] sm:$0x1]
    %s828 = scalar_lea.vmem [#allocation1], 695
    %v829 = vld [vmem:[%s828] sm:$0x2]
    %vm830 = vcmask 1041409
    %v831 = vsel %vm830, %v829, %v827
    %s832 = scalar_lea.vmem [#allocation1], 822
    %v833 = vld [vmem:[%s832] sm:$0x4]
    %vm834 = vcmask 1042434
    %v835 = vsel %vm834, %v833, %v831
    %s836 = scalar_lea.vmem [#allocation1], 949
    %v837 = vld [vmem:[%s836] sm:$0x8]
    %vm838 = vcmask 1043459
    %v839 = vsel %vm838, %v837, %v835
    %s840 = scalar_lea.vmem [#allocation1], 628
    %v841 = vld [vmem:[%s840] sm:$0x10]
    %vm842 = vcmask 1044484
    %v843 = vsel %vm842, %v841, %v839
    %s844 = scalar_lea.vmem [#allocation1], 755
    %v845 = vld [vmem:[%s844] sm:$0x20]
    %vm846 = vcmask 1045509
    %v847 = vsel %vm846, %v845, %v843
    %s848 = scalar_lea.vmem [#allocation1], 882
    %v849 = vld [vmem:[%s848] sm:$0x40]
    %vm850 = vcmask 1046534
    %v851 = vsel %vm850, %v849, %v847
    %s852 = scalar_lea.vmem [#allocation1], 1009
    %v853 = vld [vmem:[%s852] sm:$0x80]
    %vm854 = vcmask 1047559
    %v855 = vsel %vm854, %v853, %v851
    %856 = vrot.lane.b32.xlu0 %v855, 112
    %v857 = vpop.permute.xlu0 %856
    %vm858 = vcmask 982912
    %s859 = scalar_lea.vmem [#allocation0], 16
    %860 = vst.msk [vmem:[%s859] sm:$0xf] %vm858, %v857
    %s861 = scalar_lea.vmem [#allocation0], 20
    %862 = vst.msk [vmem:[%s861] sm:$0xf0] %vm858, %v857
    %s863 = scalar_lea.vmem [#allocation1], 49
    %v864 = vld [vmem:[%s863] sm:$0x1]
    %s865 = scalar_lea.vmem [#allocation1], 176
    %v866 = vld [vmem:[%s865] sm:$0x2]
    %vm867 = vcmask 1041409
    %v868 = vsel %vm867, %v866, %v864
    %s869 = scalar_lea.vmem [#allocation1], 303
    %v870 = vld [vmem:[%s869] sm:$0x4]
    %vm871 = vcmask 1042434
    %v872 = vsel %vm871, %v870, %v868
    %s873 = scalar_lea.vmem [#allocation1], 430
    %v874 = vld [vmem:[%s873] sm:$0x8]
    %vm875 = vcmask 1043459
    %v876 = vsel %vm875, %v874, %v872
    %s877 = scalar_lea.vmem [#allocation1], 109
    %v878 = vld [vmem:[%s877] sm:$0x10]
    %vm879 = vcmask 1044484
    %v880 = vsel %vm879, %v878, %v876
    %s881 = scalar_lea.vmem [#allocation1], 236
    %v882 = vld [vmem:[%s881] sm:$0x20]
    %vm883 = vcmask 1045509
    %v884 = vsel %vm883, %v882, %v880
    %s885 = scalar_lea.vmem [#allocation1], 363
    %v886 = vld [vmem:[%s885] sm:$0x40]
    %vm887 = vcmask 1046534
    %v888 = vsel %vm887, %v886, %v884
    %s889 = scalar_lea.vmem [#allocation1], 490
    %v890 = vld [vmem:[%s889] sm:$0x80]
    %vm891 = vcmask 1047559
    %v892 = vsel %vm891, %v890, %v888
    %893 = vrot.lane.b32.xlu0 %v892, 104
    %v894 = vpop.permute.xlu0 %893
    %vm895 = vcmask 917312
    %896 = vst.msk [vmem:[#allocation0] sm:$0xf] %vm895, %v894
    %s897 = scalar_lea.vmem [#allocation0], 4
    %898 = vst.msk [vmem:[%s897] sm:$0xf0] %vm895, %v894
    %s899 = scalar_lea.vmem [#allocation1], 561
    %v900 = vld [vmem:[%s899] sm:$0x1]
    %s901 = scalar_lea.vmem [#allocation1], 688
    %v902 = vld [vmem:[%s901] sm:$0x2]
    %vm903 = vcmask 1041409
    %v904 = vsel %vm903, %v902, %v900
    %s905 = scalar_lea.vmem [#allocation1], 815
    %v906 = vld [vmem:[%s905] sm:$0x4]
    %vm907 = vcmask 1042434
    %v908 = vsel %vm907, %v906, %v904
    %s909 = scalar_lea.vmem [#allocation1], 942
    %v910 = vld [vmem:[%s909] sm:$0x8]
    %vm911 = vcmask 1043459
    %v912 = vsel %vm911, %v910, %v908
    %s913 = scalar_lea.vmem [#allocation1], 621
    %v914 = vld [vmem:[%s913] sm:$0x10]
    %vm915 = vcmask 1044484
    %v916 = vsel %vm915, %v914, %v912
    %s917 = scalar_lea.vmem [#allocation1], 748
    %v918 = vld [vmem:[%s917] sm:$0x20]
    %vm919 = vcmask 1045509
    %v920 = vsel %vm919, %v918, %v916
    %s921 = scalar_lea.vmem [#allocation1], 875
    %v922 = vld [vmem:[%s921] sm:$0x40]
    %vm923 = vcmask 1046534
    %v924 = vsel %vm923, %v922, %v920
    %s925 = scalar_lea.vmem [#allocation1], 1002
    %v926 = vld [vmem:[%s925] sm:$0x80]
    %vm927 = vcmask 1047559
    %v928 = vsel %vm927, %v926, %v924
    %929 = vrot.lane.b32.xlu0 %v928, 104
    %v930 = vpop.permute.xlu0 %929
    %vm931 = vcmask 917312
    %s932 = scalar_lea.vmem [#allocation0], 16
    %933 = vst.msk [vmem:[%s932] sm:$0xf] %vm931, %v930
    %s934 = scalar_lea.vmem [#allocation0], 20
    %935 = vst.msk [vmem:[%s934] sm:$0xf0] %vm931, %v930
    %s936 = scalar_lea.vmem [#allocation1], 48
    %v937 = vld [vmem:[%s936] sm:$0x1]
    %s938 = scalar_lea.vmem [#allocation1], 175
    %v939 = vld [vmem:[%s938] sm:$0x2]
    %vm940 = vcmask 1041409
    %v941 = vsel %vm940, %v939, %v937
    %s942 = scalar_lea.vmem [#allocation1], 302
    %v943 = vld [vmem:[%s942] sm:$0x4]
    %vm944 = vcmask 1042434
    %v945 = vsel %vm944, %v943, %v941
    %s946 = scalar_lea.vmem [#allocation1], 429
    %v947 = vld [vmem:[%s946] sm:$0x8]
    %vm948 = vcmask 1043459
    %v949 = vsel %vm948, %v947, %v945
    %s950 = scalar_lea.vmem [#allocation1], 108
    %v951 = vld [vmem:[%s950] sm:$0x10]
    %vm952 = vcmask 1044484
    %v953 = vsel %vm952, %v951, %v949
    %s954 = scalar_lea.vmem [#allocation1], 235
    %v955 = vld [vmem:[%s954] sm:$0x20]
    %vm956 = vcmask 1045509
    %v957 = vsel %vm956, %v955, %v953
    %s958 = scalar_lea.vmem [#allocation1], 362
    %v959 = vld [vmem:[%s958] sm:$0x40]
    %vm960 = vcmask 1046534
    %v961 = vsel %vm960, %v959, %v957
    %s962 = scalar_lea.vmem [#allocation1], 489
    %v963 = vld [vmem:[%s962] sm:$0x80]
    %vm964 = vcmask 1047559
    %v965 = vsel %vm964, %v963, %v961
    %966 = vrot.lane.b32.xlu0 %v965, 96
    %v967 = vpop.permute.xlu0 %966
    %vm968 = vcmask 851712
    %969 = vst.msk [vmem:[#allocation0] sm:$0xf] %vm968, %v967
    %s970 = scalar_lea.vmem [#allocation0], 4
    %971 = vst.msk [vmem:[%s970] sm:$0xf0] %vm968, %v967
    %s972 = scalar_lea.vmem [#allocation1], 560
    %v973 = vld [vmem:[%s972] sm:$0x1]
    %s974 = scalar_lea.vmem [#allocation1], 687
    %v975 = vld [vmem:[%s974] sm:$0x2]
    %vm976 = vcmask 1041409
    %v977 = vsel %vm976, %v975, %v973
    %s978 = scalar_lea.vmem [#allocation1], 814
    %v979 = vld [vmem:[%s978] sm:$0x4]
    %vm980 = vcmask 1042434
    %v981 = vsel %vm980, %v979, %v977
    %s982 = scalar_lea.vmem [#allocation1], 941
    %v983 = vld [vmem:[%s982] sm:$0x8]
    %vm984 = vcmask 1043459
    %v985 = vsel %vm984, %v983, %v981
    %s986 = scalar_lea.vmem [#allocation1], 620
    %v987 = vld [vmem:[%s986] sm:$0x10]
    %vm988 = vcmask 1044484
    %v989 = vsel %vm988, %v987, %v985
    %s990 = scalar_lea.vmem [#allocation1], 747
    %v991 = vld [vmem:[%s990] sm:$0x20]
    %vm992 = vcmask 1045509
    %v993 = vsel %vm992, %v991, %v989
    %s994 = scalar_lea.vmem [#allocation1], 874
    %v995 = vld [vmem:[%s994] sm:$0x40]
    %vm996 = vcmask 1046534
    %v997 = vsel %vm996, %v995, %v993
    %s998 = scalar_lea.vmem [#allocation1], 1001
    %v999 = vld [vmem:[%s998] sm:$0x80]
    %vm1000 = vcmask 1047559
    %v1001 = vsel %vm1000, %v999, %v997
    %1002 = vrot.lane.b32.xlu0 %v1001, 96
    %v1003 = vpop.permute.xlu0 %1002
    %vm1004 = vcmask 851712
    %s1005 = scalar_lea.vmem [#allocation0], 16
    %1006 = vst.msk [vmem:[%s1005] sm:$0xf] %vm1004, %v1003
    %s1007 = scalar_lea.vmem [#allocation0], 20
    %1008 = vst.msk [vmem:[%s1007] sm:$0xf0] %vm1004, %v1003
    %s1009 = scalar_lea.vmem [#allocation1], 41
    %v1010 = vld [vmem:[%s1009] sm:$0x1]
    %s1011 = scalar_lea.vmem [#allocation1], 168
    %v1012 = vld [vmem:[%s1011] sm:$0x2]
    %vm1013 = vcmask 1041409
    %v1014 = vsel %vm1013, %v1012, %v1010
    %s1015 = scalar_lea.vmem [#allocation1], 295
    %v1016 = vld [vmem:[%s1015] sm:$0x4]
    %vm1017 = vcmask 1042434
    %v1018 = vsel %vm1017, %v1016, %v1014
    %s1019 = scalar_lea.vmem [#allocation1], 422
    %v1020 = vld [vmem:[%s1019] sm:$0x8]
    %vm1021 = vcmask 1043459
    %v1022 = vsel %vm1021, %v1020, %v1018
    %s1023 = scalar_lea.vmem [#allocation1], 101
    %v1024 = vld [vmem:[%s1023] sm:$0x10]
    %vm1025 = vcmask 1044484
    %v1026 = vsel %vm1025, %v1024, %v1022
    %s1027 = scalar_lea.vmem [#allocation1], 228
    %v1028 = vld [vmem:[%s1027] sm:$0x20]
    %vm1029 = vcmask 1045509
    %v1030 = vsel %vm1029, %v1028, %v1026
    %s1031 = scalar_lea.vmem [#allocation1], 355
    %v1032 = vld [vmem:[%s1031] sm:$0x40]
    %vm1033 = vcmask 1046534
    %v1034 = vsel %vm1033, %v1032, %v1030
    %s1035 = scalar_lea.vmem [#allocation1], 482
    %v1036 = vld [vmem:[%s1035] sm:$0x80]
    %vm1037 = vcmask 1047559
    %v1038 = vsel %vm1037, %v1036, %v1034
    %1039 = vrot.lane.b32.xlu0 %v1038, 88
    %v1040 = vpop.permute.xlu0 %1039
    %vm1041 = vcmask 786112
    %1042 = vst.msk [vmem:[#allocation0] sm:$0xf] %vm1041, %v1040
    %s1043 = scalar_lea.vmem [#allocation0], 4
    %1044 = vst.msk [vmem:[%s1043] sm:$0xf0] %vm1041, %v1040
    %s1045 = scalar_lea.vmem [#allocation1], 553
    %v1046 = vld [vmem:[%s1045] sm:$0x1]
    %s1047 = scalar_lea.vmem [#allocation1], 680
    %v1048 = vld [vmem:[%s1047] sm:$0x2]
    %vm1049 = vcmask 1041409
    %v1050 = vsel %vm1049, %v1048, %v1046
    %s1051 = scalar_lea.vmem [#allocation1], 807
    %v1052 = vld [vmem:[%s1051] sm:$0x4]
    %vm1053 = vcmask 1042434
    %v1054 = vsel %vm1053, %v1052, %v1050
    %s1055 = scalar_lea.vmem [#allocation1], 934
    %v1056 = vld [vmem:[%s1055] sm:$0x8]
    %vm1057 = vcmask 1043459
    %v1058 = vsel %vm1057, %v1056, %v1054
    %s1059 = scalar_lea.vmem [#allocation1], 613
    %v1060 = vld [vmem:[%s1059] sm:$0x10]
    %vm1061 = vcmask 1044484
    %v1062 = vsel %vm1061, %v1060, %v1058
    %s1063 = scalar_lea.vmem [#allocation1], 740
    %v1064 = vld [vmem:[%s1063] sm:$0x20]
    %vm1065 = vcmask 1045509
    %v1066 = vsel %vm1065, %v1064, %v1062
    %s1067 = scalar_lea.vmem [#allocation1], 867
    %v1068 = vld [vmem:[%s1067] sm:$0x40]
    %vm1069 = vcmask 1046534
    %v1070 = vsel %vm1069, %v1068, %v1066
    %s1071 = scalar_lea.vmem [#allocation1], 994
    %v1072 = vld [vmem:[%s1071] sm:$0x80]
    %vm1073 = vcmask 1047559
    %v1074 = vsel %vm1073, %v1072, %v1070
    %1075 = vrot.lane.b32.xlu0 %v1074, 88
    %v1076 = vpop.permute.xlu0 %1075
    %vm1077 = vcmask 786112
    %s1078 = scalar_lea.vmem [#allocation0], 16
    %1079 = vst.msk [vmem:[%s1078] sm:$0xf] %vm1077, %v1076
    %s1080 = scalar_lea.vmem [#allocation0], 20
    %1081 = vst.msk [vmem:[%s1080] sm:$0xf0] %vm1077, %v1076
    %s1082 = scalar_lea.vmem [#allocation1], 40
    %v1083 = vld [vmem:[%s1082] sm:$0x1]
    %s1084 = scalar_lea.vmem [#allocation1], 167
    %v1085 = vld [vmem:[%s1084] sm:$0x2]
    %vm1086 = vcmask 1041409
    %v1087 = vsel %vm1086, %v1085, %v1083
    %s1088 = scalar_lea.vmem [#allocation1], 294
    %v1089 = vld [vmem:[%s1088] sm:$0x4]
    %vm1090 = vcmask 1042434
    %v1091 = vsel %vm1090, %v1089, %v1087
    %s1092 = scalar_lea.vmem [#allocation1], 421
    %v1093 = vld [vmem:[%s1092] sm:$0x8]
    %vm1094 = vcmask 1043459
    %v1095 = vsel %vm1094, %v1093, %v1091
    %s1096 = scalar_lea.vmem [#allocation1], 100
    %v1097 = vld [vmem:[%s1096] sm:$0x10]
    %vm1098 = vcmask 1044484
    %v1099 = vsel %vm1098, %v1097, %v1095
    %s1100 = scalar_lea.vmem [#allocation1], 227
    %v1101 = vld [vmem:[%s1100] sm:$0x20]
    %vm1102 = vcmask 1045509
    %v1103 = vsel %vm1102, %v1101, %v1099
    %s1104 = scalar_lea.vmem [#allocation1], 354
    %v1105 = vld [vmem:[%s1104] sm:$0x40]
    %vm1106 = vcmask 1046534
    %v1107 = vsel %vm1106, %v1105, %v1103
    %s1108 = scalar_lea.vmem [#allocation1], 481
    %v1109 = vld [vmem:[%s1108] sm:$0x80]
    %vm1110 = vcmask 1047559
    %v1111 = vsel %vm1110, %v1109, %v1107
    %1112 = vrot.lane.b32.xlu0 %v1111, 80
    %v1113 = vpop.permute.xlu0 %1112
    %vm1114 = vcmask 720512
    %1115 = vst.msk [vmem:[#allocation0] sm:$0xf] %vm1114, %v1113
    %s1116 = scalar_lea.vmem [#allocation0], 4
    %1117 = vst.msk [vmem:[%s1116] sm:$0xf0] %vm1114, %v1113
    %s1118 = scalar_lea.vmem [#allocation1], 552
    %v1119 = vld [vmem:[%s1118] sm:$0x1]
    %s1120 = scalar_lea.vmem [#allocation1], 679
    %v1121 = vld [vmem:[%s1120] sm:$0x2]
    %vm1122 = vcmask 1041409
    %v1123 = vsel %vm1122, %v1121, %v1119
    %s1124 = scalar_lea.vmem [#allocation1], 806
    %v1125 = vld [vmem:[%s1124] sm:$0x4]
    %vm1126 = vcmask 1042434
    %v1127 = vsel %vm1126, %v1125, %v1123
    %s1128 = scalar_lea.vmem [#allocation1], 933
    %v1129 = vld [vmem:[%s1128] sm:$0x8]
    %vm1130 = vcmask 1043459
    %v1131 = vsel %vm1130, %v1129, %v1127
    %s1132 = scalar_lea.vmem [#allocation1], 612
    %v1133 = vld [vmem:[%s1132] sm:$0x10]
    %vm1134 = vcmask 1044484
    %v1135 = vsel %vm1134, %v1133, %v1131
    %s1136 = scalar_lea.vmem [#allocation1], 739
    %v1137 = vld [vmem:[%s1136] sm:$0x20]
    %vm1138 = vcmask 1045509
    %v1139 = vsel %vm1138, %v1137, %v1135
    %s1140 = scalar_lea.vmem [#allocation1], 866
    %v1141 = vld [vmem:[%s1140] sm:$0x40]
    %vm1142 = vcmask 1046534
    %v1143 = vsel %vm1142, %v1141, %v1139
    %s1144 = scalar_lea.vmem [#allocation1], 993
    %v1145 = vld [vmem:[%s1144] sm:$0x80]
    %vm1146 = vcmask 1047559
    %v1147 = vsel %vm1146, %v1145, %v1143
    %1148 = vrot.lane.b32.xlu0 %v1147, 80
    %v1149 = vpop.permute.xlu0 %1148
    %vm1150 = vcmask 720512
    %s1151 = scalar_lea.vmem [#allocation0], 16
    %1152 = vst.msk [vmem:[%s1151] sm:$0xf] %vm1150, %v1149
    %s1153 = scalar_lea.vmem [#allocation0], 20
    %1154 = vst.msk [vmem:[%s1153] sm:$0xf0] %vm1150, %v1149
    %s1155 = scalar_lea.vmem [#allocation1], 33
    %v1156 = vld [vmem:[%s1155] sm:$0x1]
    %s1157 = scalar_lea.vmem [#allocation1], 160
    %v1158 = vld [vmem:[%s1157] sm:$0x2]
    %vm1159 = vcmask 1041409
    %v1160 = vsel %vm1159, %v1158, %v1156
    %s1161 = scalar_lea.vmem [#allocation1], 287
    %v1162 = vld [vmem:[%s1161] sm:$0x4]
    %vm1163 = vcmask 1042434
    %v1164 = vsel %vm1163, %v1162, %v1160
    %s1165 = scalar_lea.vmem [#allocation1], 414
    %v1166 = vld [vmem:[%s1165] sm:$0x8]
    %vm1167 = vcmask 1043459
    %v1168 = vsel %vm1167, %v1166, %v1164
    %s1169 = scalar_lea.vmem [#allocation1], 93
    %v1170 = vld [vmem:[%s1169] sm:$0x10]
    %vm1171 = vcmask 1044484
    %v1172 = vsel %vm1171, %v1170, %v1168
    %s1173 = scalar_lea.vmem [#allocation1], 220
    %v1174 = vld [vmem:[%s1173] sm:$0x20]
    %vm1175 = vcmask 1045509
    %v1176 = vsel %vm1175, %v1174, %v1172
    %s1177 = scalar_lea.vmem [#allocation1], 347
    %v1178 = vld [vmem:[%s1177] sm:$0x40]
    %vm1179 = vcmask 1046534
    %v1180 = vsel %vm1179, %v1178, %v1176
    %s1181 = scalar_lea.vmem [#allocation1], 474
    %v1182 = vld [vmem:[%s1181] sm:$0x80]
    %vm1183 = vcmask 1047559
    %v1184 = vsel %vm1183, %v1182, %v1180
    %1185 = vrot.lane.b32.xlu0 %v1184, 72
    %v1186 = vpop.permute.xlu0 %1185
    %vm1187 = vcmask 654912
    %1188 = vst.msk [vmem:[#allocation0] sm:$0xf] %vm1187, %v1186
    %s1189 = scalar_lea.vmem [#allocation0], 4
    %1190 = vst.msk [vmem:[%s1189] sm:$0xf0] %vm1187, %v1186
    %s1191 = scalar_lea.vmem [#allocation1], 545
    %v1192 = vld [vmem:[%s1191] sm:$0x1]
    %s1193 = scalar_lea.vmem [#allocation1], 672
    %v1194 = vld [vmem:[%s1193] sm:$0x2]
    %vm1195 = vcmask 1041409
    %v1196 = vsel %vm1195, %v1194, %v1192
    %s1197 = scalar_lea.vmem [#allocation1], 799
    %v1198 = vld [vmem:[%s1197] sm:$0x4]
    %vm1199 = vcmask 1042434
    %v1200 = vsel %vm1199, %v1198, %v1196
    %s1201 = scalar_lea.vmem [#allocation1], 926
    %v1202 = vld [vmem:[%s1201] sm:$0x8]
    %vm1203 = vcmask 1043459
    %v1204 = vsel %vm1203, %v1202, %v1200
    %s1205 = scalar_lea.vmem [#allocation1], 605
    %v1206 = vld [vmem:[%s1205] sm:$0x10]
    %vm1207 = vcmask 1044484
    %v1208 = vsel %vm1207, %v1206, %v1204
    %s1209 = scalar_lea.vmem [#allocation1], 732
    %v1210 = vld [vmem:[%s1209] sm:$0x20]
    %vm1211 = vcmask 1045509
    %v1212 = vsel %vm1211, %v1210, %v1208
    %s1213 = scalar_lea.vmem [#allocation1], 859
    %v1214 = vld [vmem:[%s1213] sm:$0x40]
    %vm1215 = vcmask 1046534
    %v1216 = vsel %vm1215, %v1214, %v1212
    %s1217 = scalar_lea.vmem [#allocation1], 986
    %v1218 = vld [vmem:[%s1217] sm:$0x80]
    %vm1219 = vcmask 1047559
    %v1220 = vsel %vm1219, %v1218, %v1216
    %1221 = vrot.lane.b32.xlu0 %v1220, 72
    %v1222 = vpop.permute.xlu0 %1221
    %vm1223 = vcmask 654912
    %s1224 = scalar_lea.vmem [#allocation0], 16
    %1225 = vst.msk [vmem:[%s1224] sm:$0xf] %vm1223, %v1222
    %s1226 = scalar_lea.vmem [#allocation0], 20
    %1227 = vst.msk [vmem:[%s1226] sm:$0xf0] %vm1223, %v1222
    %s1228 = scalar_lea.vmem [#allocation1], 32
    %v1229 = vld [vmem:[%s1228] sm:$0x1]
    %s1230 = scalar_lea.vmem [#allocation1], 159
    %v1231 = vld [vmem:[%s1230] sm:$0x2]
    %vm1232 = vcmask 1041409
    %v1233 = vsel %vm1232, %v1231, %v1229
    %s1234 = scalar_lea.vmem [#allocation1], 286
    %v1235 = vld [vmem:[%s1234] sm:$0x4]
    %vm1236 = vcmask 1042434
    %v1237 = vsel %vm1236, %v1235, %v1233
    %s1238 = scalar_lea.vmem [#allocation1], 413
    %v1239 = vld [vmem:[%s1238] sm:$0x8]
    %vm1240 = vcmask 1043459
    %v1241 = vsel %vm1240, %v1239, %v1237
    %s1242 = scalar_lea.vmem [#allocation1], 92
    %v1243 = vld [vmem:[%s1242] sm:$0x10]
    %vm1244 = vcmask 1044484
    %v1245 = vsel %vm1244, %v1243, %v1241
    %s1246 = scalar_lea.vmem [#allocation1], 219
    %v1247 = vld [vmem:[%s1246] sm:$0x20]
    %vm1248 = vcmask 1045509
    %v1249 = vsel %vm1248, %v1247, %v1245
    %s1250 = scalar_lea.vmem [#allocation1], 346
    %v1251 = vld [vmem:[%s1250] sm:$0x40]
    %vm1252 = vcmask 1046534
    %v1253 = vsel %vm1252, %v1251, %v1249
    %s1254 = scalar_lea.vmem [#allocation1], 473
    %v1255 = vld [vmem:[%s1254] sm:$0x80]
    %vm1256 = vcmask 1047559
    %v1257 = vsel %vm1256, %v1255, %v1253
    %1258 = vrot.lane.b32.xlu0 %v1257, 64
    %v1259 = vpop.permute.xlu0 %1258
    %vm1260 = vcmask 589312
    %1261 = vst.msk [vmem:[#allocation0] sm:$0xf] %vm1260, %v1259
    %s1262 = scalar_lea.vmem [#allocation0], 4
    %1263 = vst.msk [vmem:[%s1262] sm:$0xf0] %vm1260, %v1259
    %s1264 = scalar_lea.vmem [#allocation1], 544
    %v1265 = vld [vmem:[%s1264] sm:$0x1]
    %s1266 = scalar_lea.vmem [#allocation1], 671
    %v1267 = vld [vmem:[%s1266] sm:$0x2]
    %vm1268 = vcmask 1041409
    %v1269 = vsel %vm1268, %v1267, %v1265
    %s1270 = scalar_lea.vmem [#allocation1], 798
    %v1271 = vld [vmem:[%s1270] sm:$0x4]
    %vm1272 = vcmask 1042434
    %v1273 = vsel %vm1272, %v1271, %v1269
    %s1274 = scalar_lea.vmem [#allocation1], 925
    %v1275 = vld [vmem:[%s1274] sm:$0x8]
    %vm1276 = vcmask 1043459
    %v1277 = vsel %vm1276, %v1275, %v1273
    %s1278 = scalar_lea.vmem [#allocation1], 604
    %v1279 = vld [vmem:[%s1278] sm:$0x10]
    %vm1280 = vcmask 1044484
    %v1281 = vsel %vm1280, %v1279, %v1277
    %s1282 = scalar_lea.vmem [#allocation1], 731
    %v1283 = vld [vmem:[%s1282] sm:$0x20]
    %vm1284 = vcmask 1045509
    %v1285 = vsel %vm1284, %v1283, %v1281
    %s1286 = scalar_lea.vmem [#allocation1], 858
    %v1287 = vld [vmem:[%s1286] sm:$0x40]
    %vm1288 = vcmask 1046534
    %v1289 = vsel %vm1288, %v1287, %v1285
    %s1290 = scalar_lea.vmem [#allocation1], 985
    %v1291 = vld [vmem:[%s1290] sm:$0x80]
    %vm1292 = vcmask 1047559
    %v1293 = vsel %vm1292, %v1291, %v1289
    %1294 = vrot.lane.b32.xlu0 %v1293, 64
    %v1295 = vpop.permute.xlu0 %1294
    %vm1296 = vcmask 589312
    %s1297 = scalar_lea.vmem [#allocation0], 16
    %1298 = vst.msk [vmem:[%s1297] sm:$0xf] %vm1296, %v1295
    %s1299 = scalar_lea.vmem [#allocation0], 20
    %1300 = vst.msk [vmem:[%s1299] sm:$0xf0] %vm1296, %v1295
    %s1301 = scalar_lea.vmem [#allocation1], 25
    %v1302 = vld [vmem:[%s1301] sm:$0x1]
    %s1303 = scalar_lea.vmem [#allocation1], 152
    %v1304 = vld [vmem:[%s1303] sm:$0x2]
    %vm1305 = vcmask 1041409
    %v1306 = vsel %vm1305, %v1304, %v1302
    %s1307 = scalar_lea.vmem [#allocation1], 279
    %v1308 = vld [vmem:[%s1307] sm:$0x4]
    %vm1309 = vcmask 1042434
    %v1310 = vsel %vm1309, %v1308, %v1306
    %s1311 = scalar_lea.vmem [#allocation1], 406
    %v1312 = vld [vmem:[%s1311] sm:$0x8]
    %vm1313 = vcmask 1043459
    %v1314 = vsel %vm1313, %v1312, %v1310
    %s1315 = scalar_lea.vmem [#allocation1], 85
    %v1316 = vld [vmem:[%s1315] sm:$0x10]
    %vm1317 = vcmask 1044484
    %v1318 = vsel %vm1317, %v1316, %v1314
    %s1319 = scalar_lea.vmem [#allocation1], 212
    %v1320 = vld [vmem:[%s1319] sm:$0x20]
    %vm1321 = vcmask 1045509
    %v1322 = vsel %vm1321, %v1320, %v1318
    %s1323 = scalar_lea.vmem [#allocation1], 339
    %v1324 = vld [vmem:[%s1323] sm:$0x40]
    %vm1325 = vcmask 1046534
    %v1326 = vsel %vm1325, %v1324, %v1322
    %s1327 = scalar_lea.vmem [#allocation1], 466
    %v1328 = vld [vmem:[%s1327] sm:$0x80]
    %vm1329 = vcmask 1047559
    %v1330 = vsel %vm1329, %v1328, %v1326
    %1331 = vrot.lane.b32.xlu0 %v1330, 56
    %v1332 = vpop.permute.xlu0 %1331
    %vm1333 = vcmask 523712
    %1334 = vst.msk [vmem:[#allocation0] sm:$0xf] %vm1333, %v1332
    %s1335 = scalar_lea.vmem [#allocation0], 4
    %1336 = vst.msk [vmem:[%s1335] sm:$0xf0] %vm1333, %v1332
    %s1337 = scalar_lea.vmem [#allocation1], 537
    %v1338 = vld [vmem:[%s1337] sm:$0x1]
    %s1339 = scalar_lea.vmem [#allocation1], 664
    %v1340 = vld [vmem:[%s1339] sm:$0x2]
    %vm1341 = vcmask 1041409
    %v1342 = vsel %vm1341, %v1340, %v1338
    %s1343 = scalar_lea.vmem [#allocation1], 791
    %v1344 = vld [vmem:[%s1343] sm:$0x4]
    %vm1345 = vcmask 1042434
    %v1346 = vsel %vm1345, %v1344, %v1342
    %s1347 = scalar_lea.vmem [#allocation1], 918
    %v1348 = vld [vmem:[%s1347] sm:$0x8]
    %vm1349 = vcmask 1043459
    %v1350 = vsel %vm1349, %v1348, %v1346
    %s1351 = scalar_lea.vmem [#allocation1], 597
    %v1352 = vld [vmem:[%s1351] sm:$0x10]
    %vm1353 = vcmask 1044484
    %v1354 = vsel %vm1353, %v1352, %v1350
    %s1355 = scalar_lea.vmem [#allocation1], 724
    %v1356 = vld [vmem:[%s1355] sm:$0x20]
    %vm1357 = vcmask 1045509
    %v1358 = vsel %vm1357, %v1356, %v1354
    %s1359 = scalar_lea.vmem [#allocation1], 851
    %v1360 = vld [vmem:[%s1359] sm:$0x40]
    %vm1361 = vcmask 1046534
    %v1362 = vsel %vm1361, %v1360, %v1358
    %s1363 = scalar_lea.vmem [#allocation1], 978
    %v1364 = vld [vmem:[%s1363] sm:$0x80]
    %vm1365 = vcmask 1047559
    %v1366 = vsel %vm1365, %v1364, %v1362
    %1367 = vrot.lane.b32.xlu0 %v1366, 56
    %v1368 = vpop.permute.xlu0 %1367
    %vm1369 = vcmask 523712
    %s1370 = scalar_lea.vmem [#allocation0], 16
    %1371 = vst.msk [vmem:[%s1370] sm:$0xf] %vm1369, %v1368
    %s1372 = scalar_lea.vmem [#allocation0], 20
    %1373 = vst.msk [vmem:[%s1372] sm:$0xf0] %vm1369, %v1368
    %s1374 = scalar_lea.vmem [#allocation1], 24
    %v1375 = vld [vmem:[%s1374] sm:$0x1]
    %s1376 = scalar_lea.vmem [#allocation1], 151
    %v1377 = vld [vmem:[%s1376] sm:$0x2]
    %vm1378 = vcmask 1041409
    %v1379 = vsel %vm1378, %v1377, %v1375
    %s1380 = scalar_lea.vmem [#allocation1], 278
    %v1381 = vld [vmem:[%s1380] sm:$0x4]
    %vm1382 = vcmask 1042434
    %v1383 = vsel %vm1382, %v1381, %v1379
    %s1384 = scalar_lea.vmem [#allocation1], 405
    %v1385 = vld [vmem:[%s1384] sm:$0x8]
    %vm1386 = vcmask 1043459
    %v1387 = vsel %vm1386, %v1385, %v1383
    %s1388 = scalar_lea.vmem [#allocation1], 84
    %v1389 = vld [vmem:[%s1388] sm:$0x10]
    %vm1390 = vcmask 1044484
    %v1391 = vsel %vm1390, %v1389, %v1387
    %s1392 = scalar_lea.vmem [#allocation1], 211
    %v1393 = vld [vmem:[%s1392] sm:$0x20]
    %vm1394 = vcmask 1045509
    %v1395 = vsel %vm1394, %v1393, %v1391
    %s1396 = scalar_lea.vmem [#allocation1], 338
    %v1397 = vld [vmem:[%s1396] sm:$0x40]
    %vm1398 = vcmask 1046534
    %v1399 = vsel %vm1398, %v1397, %v1395
    %s1400 = scalar_lea.vmem [#allocation1], 465
    %v1401 = vld [vmem:[%s1400] sm:$0x80]
    %vm1402 = vcmask 1047559
    %v1403 = vsel %vm1402, %v1401, %v1399
    %1404 = vrot.lane.b32.xlu0 %v1403, 48
    %v1405 = vpop.permute.xlu0 %1404
    %vm1406 = vcmask 458112
    %1407 = vst.msk [vmem:[#allocation0] sm:$0xf] %vm1406, %v1405
    %s1408 = scalar_lea.vmem [#allocation0], 4
    %1409 = vst.msk [vmem:[%s1408] sm:$0xf0] %vm1406, %v1405
    %s1410 = scalar_lea.vmem [#allocation1], 536
    %v1411 = vld [vmem:[%s1410] sm:$0x1]
    %s1412 = scalar_lea.vmem [#allocation1], 663
    %v1413 = vld [vmem:[%s1412] sm:$0x2]
    %vm1414 = vcmask 1041409
    %v1415 = vsel %vm1414, %v1413, %v1411
    %s1416 = scalar_lea.vmem [#allocation1], 790
    %v1417 = vld [vmem:[%s1416] sm:$0x4]
    %vm1418 = vcmask 1042434
    %v1419 = vsel %vm1418, %v1417, %v1415
    %s1420 = scalar_lea.vmem [#allocation1], 917
    %v1421 = vld [vmem:[%s1420] sm:$0x8]
    %vm1422 = vcmask 1043459
    %v1423 = vsel %vm1422, %v1421, %v1419
    %s1424 = scalar_lea.vmem [#allocation1], 596
    %v1425 = vld [vmem:[%s1424] sm:$0x10]
    %vm1426 = vcmask 1044484
    %v1427 = vsel %vm1426, %v1425, %v1423
    %s1428 = scalar_lea.vmem [#allocation1], 723
    %v1429 = vld [vmem:[%s1428] sm:$0x20]
    %vm1430 = vcmask 1045509
    %v1431 = vsel %vm1430, %v1429, %v1427
    %s1432 = scalar_lea.vmem [#allocation1], 850
    %v1433 = vld [vmem:[%s1432] sm:$0x40]
    %vm1434 = vcmask 1046534
    %v1435 = vsel %vm1434, %v1433, %v1431
    %s1436 = scalar_lea.vmem [#allocation1], 977
    %v1437 = vld [vmem:[%s1436] sm:$0x80]
    %vm1438 = vcmask 1047559
    %v1439 = vsel %vm1438, %v1437, %v1435
    %1440 = vrot.lane.b32.xlu0 %v1439, 48
    %v1441 = vpop.permute.xlu0 %1440
    %vm1442 = vcmask 458112
    %s1443 = scalar_lea.vmem [#allocation0], 16
    %1444 = vst.msk [vmem:[%s1443] sm:$0xf] %vm1442, %v1441
    %s1445 = scalar_lea.vmem [#allocation0], 20
    %1446 = vst.msk [vmem:[%s1445] sm:$0xf0] %vm1442, %v1441
    %s1447 = scalar_lea.vmem [#allocation1], 17
    %v1448 = vld [vmem:[%s1447] sm:$0x1]
    %s1449 = scalar_lea.vmem [#allocation1], 144
    %v1450 = vld [vmem:[%s1449] sm:$0x2]
    %vm1451 = vcmask 1041409
    %v1452 = vsel %vm1451, %v1450, %v1448
    %s1453 = scalar_lea.vmem [#allocation1], 271
    %v1454 = vld [vmem:[%s1453] sm:$0x4]
    %vm1455 = vcmask 1042434
    %v1456 = vsel %vm1455, %v1454, %v1452
    %s1457 = scalar_lea.vmem [#allocation1], 398
    %v1458 = vld [vmem:[%s1457] sm:$0x8]
    %vm1459 = vcmask 1043459
    %v1460 = vsel %vm1459, %v1458, %v1456
    %s1461 = scalar_lea.vmem [#allocation1], 77
    %v1462 = vld [vmem:[%s1461] sm:$0x10]
    %vm1463 = vcmask 1044484
    %v1464 = vsel %vm1463, %v1462, %v1460
    %s1465 = scalar_lea.vmem [#allocation1], 204
    %v1466 = vld [vmem:[%s1465] sm:$0x20]
    %vm1467 = vcmask 1045509
    %v1468 = vsel %vm1467, %v1466, %v1464
    %s1469 = scalar_lea.vmem [#allocation1], 331
    %v1470 = vld [vmem:[%s1469] sm:$0x40]
    %vm1471 = vcmask 1046534
    %v1472 = vsel %vm1471, %v1470, %v1468
    %s1473 = scalar_lea.vmem [#allocation1], 458
    %v1474 = vld [vmem:[%s1473] sm:$0x80]
    %vm1475 = vcmask 1047559
    %v1476 = vsel %vm1475, %v1474, %v1472
    %1477 = vrot.lane.b32.xlu0 %v1476, 40
    %v1478 = vpop.permute.xlu0 %1477
    %vm1479 = vcmask 392512
    %1480 = vst.msk [vmem:[#allocation0] sm:$0xf] %vm1479, %v1478
    %s1481 = scalar_lea.vmem [#allocation0], 4
    %1482 = vst.msk [vmem:[%s1481] sm:$0xf0] %vm1479, %v1478
    %s1483 = scalar_lea.vmem [#allocation1], 529
    %v1484 = vld [vmem:[%s1483] sm:$0x1]
    %s1485 = scalar_lea.vmem [#allocation1], 656
    %v1486 = vld [vmem:[%s1485] sm:$0x2]
    %vm1487 = vcmask 1041409
    %v1488 = vsel %vm1487, %v1486, %v1484
    %s1489 = scalar_lea.vmem [#allocation1], 783
    %v1490 = vld [vmem:[%s1489] sm:$0x4]
    %vm1491 = vcmask 1042434
    %v1492 = vsel %vm1491, %v1490, %v1488
    %s1493 = scalar_lea.vmem [#allocation1], 910
    %v1494 = vld [vmem:[%s1493] sm:$0x8]
    %vm1495 = vcmask 1043459
    %v1496 = vsel %vm1495, %v1494, %v1492
    %s1497 = scalar_lea.vmem [#allocation1], 589
    %v1498 = vld [vmem:[%s1497] sm:$0x10]
    %vm1499 = vcmask 1044484
    %v1500 = vsel %vm1499, %v1498, %v1496
    %s1501 = scalar_lea.vmem [#allocation1], 716
    %v1502 = vld [vmem:[%s1501] sm:$0x20]
    %vm1503 = vcmask 1045509
    %v1504 = vsel %vm1503, %v1502, %v1500
    %s1505 = scalar_lea.vmem [#allocation1], 843
    %v1506 = vld [vmem:[%s1505] sm:$0x40]
    %vm1507 = vcmask 1046534
    %v1508 = vsel %vm1507, %v1506, %v1504
    %s1509 = scalar_lea.vmem [#allocation1], 970
    %v1510 = vld [vmem:[%s1509] sm:$0x80]
    %vm1511 = vcmask 1047559
    %v1512 = vsel %vm1511, %v1510, %v1508
    %1513 = vrot.lane.b32.xlu0 %v1512, 40
    %v1514 = vpop.permute.xlu0 %1513
    %vm1515 = vcmask 392512
    %s1516 = scalar_lea.vmem [#allocation0], 16
    %1517 = vst.msk [vmem:[%s1516] sm:$0xf] %vm1515, %v1514
    %s1518 = scalar_lea.vmem [#allocation0], 20
    %1519 = vst.msk [vmem:[%s1518] sm:$0xf0] %vm1515, %v1514
    %s1520 = scalar_lea.vmem [#allocation1], 16
    %v1521 = vld [vmem:[%s1520] sm:$0x1]
    %s1522 = scalar_lea.vmem [#allocation1], 143
    %v1523 = vld [vmem:[%s1522] sm:$0x2]
    %vm1524 = vcmask 1041409
    %v1525 = vsel %vm1524, %v1523, %v1521
    %s1526 = scalar_lea.vmem [#allocation1], 270
    %v1527 = vld [vmem:[%s1526] sm:$0x4]
    %vm1528 = vcmask 1042434
    %v1529 = vsel %vm1528, %v1527, %v1525
    %s1530 = scalar_lea.vmem [#allocation1], 397
    %v1531 = vld [vmem:[%s1530] sm:$0x8]
    %vm1532 = vcmask 1043459
    %v1533 = vsel %vm1532, %v1531, %v1529
    %s1534 = scalar_lea.vmem [#allocation1], 76
    %v1535 = vld [vmem:[%s1534] sm:$0x10]
    %vm1536 = vcmask 1044484
    %v1537 = vsel %vm1536, %v1535, %v1533
    %s1538 = scalar_lea.vmem [#allocation1], 203
    %v1539 = vld [vmem:[%s1538] sm:$0x20]
    %vm1540 = vcmask 1045509
    %v1541 = vsel %vm1540, %v1539, %v1537
    %s1542 = scalar_lea.vmem [#allocation1], 330
    %v1543 = vld [vmem:[%s1542] sm:$0x40]
    %vm1544 = vcmask 1046534
    %v1545 = vsel %vm1544, %v1543, %v1541
    %s1546 = scalar_lea.vmem [#allocation1], 457
    %v1547 = vld [vmem:[%s1546] sm:$0x80]
    %vm1548 = vcmask 1047559
    %v1549 = vsel %vm1548, %v1547, %v1545
    %1550 = vrot.lane.b32.xlu0 %v1549, 32
    %v1551 = vpop.permute.xlu0 %1550
    %vm1552 = vcmask 326912
    %1553 = vst.msk [vmem:[#allocation0] sm:$0xf] %vm1552, %v1551
    %s1554 = scalar_lea.vmem [#allocation0], 4
    %1555 = vst.msk [vmem:[%s1554] sm:$0xf0] %vm1552, %v1551
    %s1556 = scalar_lea.vmem [#allocation1], 528
    %v1557 = vld [vmem:[%s1556] sm:$0x1]
    %s1558 = scalar_lea.vmem [#allocation1], 655
    %v1559 = vld [vmem:[%s1558] sm:$0x2]
    %vm1560 = vcmask 1041409
    %v1561 = vsel %vm1560, %v1559, %v1557
    %s1562 = scalar_lea.vmem [#allocation1], 782
    %v1563 = vld [vmem:[%s1562] sm:$0x4]
    %vm1564 = vcmask 1042434
    %v1565 = vsel %vm1564, %v1563, %v1561
    %s1566 = scalar_lea.vmem [#allocation1], 909
    %v1567 = vld [vmem:[%s1566] sm:$0x8]
    %vm1568 = vcmask 1043459
    %v1569 = vsel %vm1568, %v1567, %v1565
    %s1570 = scalar_lea.vmem [#allocation1], 588
    %v1571 = vld [vmem:[%s1570] sm:$0x10]
    %vm1572 = vcmask 1044484
    %v1573 = vsel %vm1572, %v1571, %v1569
    %s1574 = scalar_lea.vmem [#allocation1], 715
    %v1575 = vld [vmem:[%s1574] sm:$0x20]
    %vm1576 = vcmask 1045509
    %v1577 = vsel %vm1576, %v1575, %v1573
    %s1578 = scalar_lea.vmem [#allocation1], 842
    %v1579 = vld [vmem:[%s1578] sm:$0x40]
    %vm1580 = vcmask 1046534
    %v1581 = vsel %vm1580, %v1579, %v1577
    %s1582 = scalar_lea.vmem [#allocation1], 969
    %v1583 = vld [vmem:[%s1582] sm:$0x80]
    %vm1584 = vcmask 1047559
    %v1585 = vsel %vm1584, %v1583, %v1581
    %1586 = vrot.lane.b32.xlu0 %v1585, 32
    %v1587 = vpop.permute.xlu0 %1586
    %vm1588 = vcmask 326912
    %s1589 = scalar_lea.vmem [#allocation0], 16
    %1590 = vst.msk [vmem:[%s1589] sm:$0xf] %vm1588, %v1587
    %s1591 = scalar_lea.vmem [#allocation0], 20
    %1592 = vst.msk [vmem:[%s1591] sm:$0xf0] %vm1588, %v1587
    %s1593 = scalar_lea.vmem [#allocation1], 9
    %v1594 = vld [vmem:[%s1593] sm:$0x1]
    %s1595 = scalar_lea.vmem [#allocation1], 136
    %v1596 = vld [vmem:[%s1595] sm:$0x2]
    %vm1597 = vcmask 1041409
    %v1598 = vsel %vm1597, %v1596, %v1594
    %s1599 = scalar_lea.vmem [#allocation1], 263
    %v1600 = vld [vmem:[%s1599] sm:$0x4]
    %vm1601 = vcmask 1042434
    %v1602 = vsel %vm1601, %v1600, %v1598
    %s1603 = scalar_lea.vmem [#allocation1], 390
    %v1604 = vld [vmem:[%s1603] sm:$0x8]
    %vm1605 = vcmask 1043459
    %v1606 = vsel %vm1605, %v1604, %v1602
    %s1607 = scalar_lea.vmem [#allocation1], 69
    %v1608 = vld [vmem:[%s1607] sm:$0x10]
    %vm1609 = vcmask 1044484
    %v1610 = vsel %vm1609, %v1608, %v1606
    %s1611 = scalar_lea.vmem [#allocation1], 196
    %v1612 = vld [vmem:[%s1611] sm:$0x20]
    %vm1613 = vcmask 1045509
    %v1614 = vsel %vm1613, %v1612, %v1610
    %s1615 = scalar_lea.vmem [#allocation1], 323
    %v1616 = vld [vmem:[%s1615] sm:$0x40]
    %vm1617 = vcmask 1046534
    %v1618 = vsel %vm1617, %v1616, %v1614
    %s1619 = scalar_lea.vmem [#allocation1], 450
    %v1620 = vld [vmem:[%s1619] sm:$0x80]
    %vm1621 = vcmask 1047559
    %v1622 = vsel %vm1621, %v1620, %v1618
    %1623 = vrot.lane.b32.xlu0 %v1622, 24
    %v1624 = vpop.permute.xlu0 %1623
    %vm1625 = vcmask 261312
    %1626 = vst.msk [vmem:[#allocation0] sm:$0xf] %vm1625, %v1624
    %s1627 = scalar_lea.vmem [#allocation0], 4
    %1628 = vst.msk [vmem:[%s1627] sm:$0xf0] %vm1625, %v1624
    %s1629 = scalar_lea.vmem [#allocation1], 521
    %v1630 = vld [vmem:[%s1629] sm:$0x1]
    %s1631 = scalar_lea.vmem [#allocation1], 648
    %v1632 = vld [vmem:[%s1631] sm:$0x2]
    %vm1633 = vcmask 1041409
    %v1634 = vsel %vm1633, %v1632, %v1630
    %s1635 = scalar_lea.vmem [#allocation1], 775
    %v1636 = vld [vmem:[%s1635] sm:$0x4]
    %vm1637 = vcmask 1042434
    %v1638 = vsel %vm1637, %v1636, %v1634
    %s1639 = scalar_lea.vmem [#allocation1], 902
    %v1640 = vld [vmem:[%s1639] sm:$0x8]
    %vm1641 = vcmask 1043459
    %v1642 = vsel %vm1641, %v1640, %v1638
    %s1643 = scalar_lea.vmem [#allocation1], 581
    %v1644 = vld [vmem:[%s1643] sm:$0x10]
    %vm1645 = vcmask 1044484
    %v1646 = vsel %vm1645, %v1644, %v1642
    %s1647 = scalar_lea.vmem [#allocation1], 708
    %v1648 = vld [vmem:[%s1647] sm:$0x20]
    %vm1649 = vcmask 1045509
    %v1650 = vsel %vm1649, %v1648, %v1646
    %s1651 = scalar_lea.vmem [#allocation1], 835
    %v1652 = vld [vmem:[%s1651] sm:$0x40]
    %vm1653 = vcmask 1046534
    %v1654 = vsel %vm1653, %v1652, %v1650
    %s1655 = scalar_lea.vmem [#allocation1], 962
    %v1656 = vld [vmem:[%s1655] sm:$0x80]
    %vm1657 = vcmask 1047559
    %v1658 = vsel %vm1657, %v1656, %v1654
    %1659 = vrot.lane.b32.xlu0 %v1658, 24
    %v1660 = vpop.permute.xlu0 %1659
    %vm1661 = vcmask 261312
    %s1662 = scalar_lea.vmem [#allocation0], 16
    %1663 = vst.msk [vmem:[%s1662] sm:$0xf] %vm1661, %v1660
    %s1664 = scalar_lea.vmem [#allocation0], 20
    %1665 = vst.msk [vmem:[%s1664] sm:$0xf0] %vm1661, %v1660
    %s1666 = scalar_lea.vmem [#allocation1], 8
    %v1667 = vld [vmem:[%s1666] sm:$0x1]
    %s1668 = scalar_lea.vmem [#allocation1], 135
    %v1669 = vld [vmem:[%s1668] sm:$0x2]
    %vm1670 = vcmask 1041409
    %v1671 = vsel %vm1670, %v1669, %v1667
    %s1672 = scalar_lea.vmem [#allocation1], 262
    %v1673 = vld [vmem:[%s1672] sm:$0x4]
    %vm1674 = vcmask 1042434
    %v1675 = vsel %vm1674, %v1673, %v1671
    %s1676 = scalar_lea.vmem [#allocation1], 389
    %v1677 = vld [vmem:[%s1676] sm:$0x8]
    %vm1678 = vcmask 1043459
    %v1679 = vsel %vm1678, %v1677, %v1675
    %s1680 = scalar_lea.vmem [#allocation1], 68
    %v1681 = vld [vmem:[%s1680] sm:$0x10]
    %vm1682 = vcmask 1044484
    %v1683 = vsel %vm1682, %v1681, %v1679
    %s1684 = scalar_lea.vmem [#allocation1], 195
    %v1685 = vld [vmem:[%s1684] sm:$0x20]
    %vm1686 = vcmask 1045509
    %v1687 = vsel %vm1686, %v1685, %v1683
    %s1688 = scalar_lea.vmem [#allocation1], 322
    %v1689 = vld [vmem:[%s1688] sm:$0x40]
    %vm1690 = vcmask 1046534
    %v1691 = vsel %vm1690, %v1689, %v1687
    %s1692 = scalar_lea.vmem [#allocation1], 449
    %v1693 = vld [vmem:[%s1692] sm:$0x80]
    %vm1694 = vcmask 1047559
    %v1695 = vsel %vm1694, %v1693, %v1691
    %1696 = vrot.lane.b32.xlu0 %v1695, 16
    %v1697 = vpop.permute.xlu0 %1696
    %vm1698 = vcmask 195712
    %1699 = vst.msk [vmem:[#allocation0] sm:$0xf] %vm1698, %v1697
    %s1700 = scalar_lea.vmem [#allocation0], 4
    %1701 = vst.msk [vmem:[%s1700] sm:$0xf0] %vm1698, %v1697
    %s1702 = scalar_lea.vmem [#allocation1], 520
    %v1703 = vld [vmem:[%s1702] sm:$0x1]
    %s1704 = scalar_lea.vmem [#allocation1], 647
    %v1705 = vld [vmem:[%s1704] sm:$0x2]
    %vm1706 = vcmask 1041409
    %v1707 = vsel %vm1706, %v1705, %v1703
    %s1708 = scalar_lea.vmem [#allocation1], 774
    %v1709 = vld [vmem:[%s1708] sm:$0x4]
    %vm1710 = vcmask 1042434
    %v1711 = vsel %vm1710, %v1709, %v1707
    %s1712 = scalar_lea.vmem [#allocation1], 901
    %v1713 = vld [vmem:[%s1712] sm:$0x8]
    %vm1714 = vcmask 1043459
    %v1715 = vsel %vm1714, %v1713, %v1711
    %s1716 = scalar_lea.vmem [#allocation1], 580
    %v1717 = vld [vmem:[%s1716] sm:$0x10]
    %vm1718 = vcmask 1044484
    %v1719 = vsel %vm1718, %v1717, %v1715
    %s1720 = scalar_lea.vmem [#allocation1], 707
    %v1721 = vld [vmem:[%s1720] sm:$0x20]
    %vm1722 = vcmask 1045509
    %v1723 = vsel %vm1722, %v1721, %v1719
    %s1724 = scalar_lea.vmem [#allocation1], 834
    %v1725 = vld [vmem:[%s1724] sm:$0x40]
    %vm1726 = vcmask 1046534
    %v1727 = vsel %vm1726, %v1725, %v1723
    %s1728 = scalar_lea.vmem [#allocation1], 961
    %v1729 = vld [vmem:[%s1728] sm:$0x80]
    %vm1730 = vcmask 1047559
    %v1731 = vsel %vm1730, %v1729, %v1727
    %1732 = vrot.lane.b32.xlu0 %v1731, 16
    %v1733 = vpop.permute.xlu0 %1732
    %vm1734 = vcmask 195712
    %s1735 = scalar_lea.vmem [#allocation0], 16
    %1736 = vst.msk [vmem:[%s1735] sm:$0xf] %vm1734, %v1733
    %s1737 = scalar_lea.vmem [#allocation0], 20
    %1738 = vst.msk [vmem:[%s1737] sm:$0xf0] %vm1734, %v1733
    %s1739 = scalar_lea.vmem [#allocation1], 1
    %v1740 = vld [vmem:[%s1739] sm:$0x1]
    %s1741 = scalar_lea.vmem [#allocation1], 128
    %v1742 = vld [vmem:[%s1741] sm:$0x2]
    %vm1743 = vcmask 1041409
    %v1744 = vsel %vm1743, %v1742, %v1740
    %s1745 = scalar_lea.vmem [#allocation1], 255
    %v1746 = vld [vmem:[%s1745] sm:$0x4]
    %vm1747 = vcmask 1042434
    %v1748 = vsel %vm1747, %v1746, %v1744
    %s1749 = scalar_lea.vmem [#allocation1], 382
    %v1750 = vld [vmem:[%s1749] sm:$0x8]
    %vm1751 = vcmask 1043459
    %v1752 = vsel %vm1751, %v1750, %v1748
    %s1753 = scalar_lea.vmem [#allocation1], 61
    %v1754 = vld [vmem:[%s1753] sm:$0x10]
    %vm1755 = vcmask 1044484
    %v1756 = vsel %vm1755, %v1754, %v1752
    %s1757 = scalar_lea.vmem [#allocation1], 188
    %v1758 = vld [vmem:[%s1757] sm:$0x20]
    %vm1759 = vcmask 1045509
    %v1760 = vsel %vm1759, %v1758, %v1756
    %s1761 = scalar_lea.vmem [#allocation1], 315
    %v1762 = vld [vmem:[%s1761] sm:$0x40]
    %vm1763 = vcmask 1046534
    %v1764 = vsel %vm1763, %v1762, %v1760
    %s1765 = scalar_lea.vmem [#allocation1], 442
    %v1766 = vld [vmem:[%s1765] sm:$0x80]
    %vm1767 = vcmask 1047559
    %v1768 = vsel %vm1767, %v1766, %v1764
    %1769 = vrot.lane.b32.xlu0 %v1768, 8
    %v1770 = vpop.permute.xlu0 %1769
    %vm1771 = vcmask 130112
    %1772 = vst.msk [vmem:[#allocation0] sm:$0xf] %vm1771, %v1770
    %s1773 = scalar_lea.vmem [#allocation0], 4
    %1774 = vst.msk [vmem:[%s1773] sm:$0xf0] %vm1771, %v1770
    %s1775 = scalar_lea.vmem [#allocation1], 513
    %v1776 = vld [vmem:[%s1775] sm:$0x1]
    %s1777 = scalar_lea.vmem [#allocation1], 640
    %v1778 = vld [vmem:[%s1777] sm:$0x2]
    %vm1779 = vcmask 1041409
    %v1780 = vsel %vm1779, %v1778, %v1776
    %s1781 = scalar_lea.vmem [#allocation1], 767
    %v1782 = vld [vmem:[%s1781] sm:$0x4]
    %vm1783 = vcmask 1042434
    %v1784 = vsel %vm1783, %v1782, %v1780
    %s1785 = scalar_lea.vmem [#allocation1], 894
    %v1786 = vld [vmem:[%s1785] sm:$0x8]
    %vm1787 = vcmask 1043459
    %v1788 = vsel %vm1787, %v1786, %v1784
    %s1789 = scalar_lea.vmem [#allocation1], 573
    %v1790 = vld [vmem:[%s1789] sm:$0x10]
    %vm1791 = vcmask 1044484
    %v1792 = vsel %vm1791, %v1790, %v1788
    %s1793 = scalar_lea.vmem [#allocation1], 700
    %v1794 = vld [vmem:[%s1793] sm:$0x20]
    %vm1795 = vcmask 1045509
    %v1796 = vsel %vm1795, %v1794, %v1792
    %s1797 = scalar_lea.vmem [#allocation1], 827
    %v1798 = vld [vmem:[%s1797] sm:$0x40]
    %vm1799 = vcmask 1046534
    %v1800 = vsel %vm1799, %v1798, %v1796
    %s1801 = scalar_lea.vmem [#allocation1], 954
    %v1802 = vld [vmem:[%s1801] sm:$0x80]
    %vm1803 = vcmask 1047559
    %v1804 = vsel %vm1803, %v1802, %v1800
    %1805 = vrot.lane.b32.xlu0 %v1804, 8
    %v1806 = vpop.permute.xlu0 %1805
    %vm1807 = vcmask 130112
    %s1808 = scalar_lea.vmem [#allocation0], 16
    %1809 = vst.msk [vmem:[%s1808] sm:$0xf] %vm1807, %v1806
    %s1810 = scalar_lea.vmem [#allocation0], 20
    %1811 = vst.msk [vmem:[%s1810] sm:$0xf0] %vm1807, %v1806
    %s1813 = sshll.u32 1, 4
    %s1814 = ssub.s32 %s1813, 1
    %v1816 = vld [vmem:[#allocation0] sm:%s1814]
    %s1817 = sshll.u32 1, 4
    %s1818 = ssub.s32 %s1817, 1
    %1819 = vst [vmem:[%s1] sm:%s1818] %v1816
    %s1820 = scalar_lea.vmem [#allocation0], 8
    %v1821 = vld [vmem:[%s1820] sm:%s1814]
    %s1822 = sshll.u32 1, 4
    %s1823 = ssub.s32 %s1822, 1
    %s1824 = scalar_lea.vmem %s1, 4
    %1825 = vst [vmem:[%s1824] sm:%s1823] %v1821
    %s1826 = scalar_lea.vmem [#allocation0], 16
    %v1827 = vld [vmem:[%s1826] sm:%s1814]
    %s1828 = sshll.u32 1, 4
    %s1829 = ssub.s32 %s1828, 1
    %s1830 = smul.addr 4, 2
    %s1831 = scalar_lea.vmem %s1, %s1830
    %1832 = vst [vmem:[%s1831] sm:%s1829] %v1827
    %s1833 = scalar_lea.vmem [#allocation0], 24
    %v1834 = vld [vmem:[%s1833] sm:%s1814]
    %s1835 = sshll.u32 1, 4
    %s1836 = ssub.s32 %s1835, 1
    %s1837 = smul.addr 4, 3
    %s1838 = scalar_lea.vmem %s1, %s1837
    %1839 = vst [vmem:[%s1838] sm:%s1836] %v1834

// kernel: spectral_transform2d.9
$region0: #{spectral_transform2d.9}
  #allocation0 [shape = 'u32[]', space=smem, size = 0x4, offset = 0x4, fixed_abs, tag = 'smem constant byte address 0x4 - core index']
  #allocation1 [shape = 'u32[144,128]{1,0:T(1,128)}', space=vmem, size = 0x12000, scoped, tag = 'internal scratch']
  %s0 = inlined_call_operand.vmem [shape: f32[2,8,144], index: 0, kind: input, shape index: {}]
  %s1 = inlined_call_operand.vmem [shape: f32[8,8], index: 1, kind: input, shape index: {}]
  %s2 = inlined_call_operand.vmem [shape: f32[8,1], index: 2, kind: output, shape index: {0}]
  %s3 = inlined_call_operand.vmem [shape: f32[8,1], index: 3, kind: output, shape index: {1}]
  %4 = xla_tuple %s2, %s3
  %s5 = sld [smem:[#allocation0]]
  $region53: #{spectral_transform2d.9} parent=0
    _
  %s7 = ssub.s32 1, %s5
  %s8 = scalar_select 0, %s7, %s5
  loop: start=0, step=1, limit=4
  $region2: #{spectral_transform2d.9} parent=0 // loop_pre_header
    _
  $region3: #{spectral_transform2d.9} parent=0 // loop_header
    %s10 = sphi 0, %s14
    %p11 = scmp.ge.s32.totalorder %s10, 4
    %s17 = sphi 0, %s29
    %s18 = sphi 0, %s25
    %s19 = sphi 0, %s17
    %s20 = sphi 0, %s18
    %s21 = sphi 0, %s19
    %s22 = sphi 0, %s20
    %s34 = sphi 0, %s36
    %s37 = sphi 0, %s34
    %s38 = sphi 0, %s37
    %s54 = sphi 0, %s38
    %s58 = sphi 0, %s58
    %s60 = sphi 0, %s58
    %s61 = sphi 0, %s60
    %s75 = sphi 0, %s61
    %s79 = sphi 0, %s79
    %s81 = sphi 0, %s79
    %s82 = sphi 0, %s81
    %s96 = sphi 0, %s82
    %s100 = sphi 0, %s100
    %s102 = sphi 0, %s100
    %s103 = sphi 0, %s102
    %s117 = sphi 0, %s103
  $region4: #{spectral_transform2d.9} parent=0 // loop_header_branch
    %13 = sbr.rel (%p11) target = $region8
  $region5: #{spectral_transform2d.9} parent=0 // loop_body
    %s15 = ssub.s32 %s10, 1
    %s16 = ssub.s32 %s10, 2
    %s23 = sadd.s32 1, %s18
    %p24 = scmp.ge.s32.totalorder %s23, 1
    %s25 = scalar_select %p24, 0, %s23
    %s26 = sadd.s32 1, %s17
    %s27 = scalar_select %p24, %s26, %s17
    %p28 = scmp.ge.s32.totalorder %s27, 2
    %s29 = scalar_select %p28, 0, %s27
    %s30 = ssub.s32 %s17, %s29
    %s31 = ssub.s32 %s18, %s25
    %s32 = sor.u32 %s30, %s31
    %p33 = scmp.eq.s32.totalorder %s32, 0
    %s35 = sadd.s32 %s34, 1
    %s36 = scalar_select %p33, %s34, %s35
    %p39 = pneg %p33
    %p40 = scmp.eq.s32.totalorder %s10, 1
    %p41 = por %p39, %p40
    %p42 = scmp.ne.s32.totalorder %s34, %s37
    %p43 = scmp.eq.s32.totalorder %s10, 0
    %p44 = por %p42, %p43
    %p45 = scmp.ne.s32.totalorder %s34, %s37
    %p46 = scmp.eq.s32.totalorder %s15, 1
    %p47 = por %p45, %p46
    %p48 = scmp.ne.s32.totalorder %s37, %s38
    %p49 = scmp.eq.s32.totalorder %s15, 0
    %p50 = por %p48, %p49
    %p51 = scmp.ne.s32.totalorder %s37, %s38
    %p52 = scmp.eq.s32.totalorder %s16, 1
    %p53 = por %p51, %p52
    %p55 = scmp.ne.s32.totalorder %s38, %s54
    %p56 = scmp.eq.s32.totalorder %s16, 0
    %p57 = por %p55, %p56
    %s59 = sadd.s32 %s58, 1
    %p62 = scmp.eq.s32.totalorder %s10, 1
    %p63 = scmp.ne.s32.totalorder %s58, %s60
    %p64 = scmp.eq.s32.totalorder %s10, 0
    %p65 = por %p63, %p64
    %p66 = scmp.ne.s32.totalorder %s58, %s60
    %p67 = scmp.eq.s32.totalorder %s15, 1
    %p68 = por %p66, %p67
    %p69 = scmp.ne.s32.totalorder %s60, %s61
    %p70 = scmp.eq.s32.totalorder %s15, 0
    %p71 = por %p69, %p70
    %p72 = scmp.ne.s32.totalorder %s60, %s61
    %p73 = scmp.eq.s32.totalorder %s16, 1
    %p74 = por %p72, %p73
    %p76 = scmp.ne.s32.totalorder %s61, %s75
    %p77 = scmp.eq.s32.totalorder %s16, 0
    %p78 = por %p76, %p77
    %s80 = sadd.s32 %s79, 1
    %p83 = scmp.eq.s32.totalorder %s10, 1
    %p84 = scmp.ne.s32.totalorder %s79, %s81
    %p85 = scmp.eq.s32.totalorder %s10, 0
    %p86 = por %p84, %p85
    %p87 = scmp.ne.s32.totalorder %s79, %s81
    %p88 = scmp.eq.s32.totalorder %s15, 1
    %p89 = por %p87, %p88
    %p90 = scmp.ne.s32.totalorder %s81, %s82
    %p91 = scmp.eq.s32.totalorder %s15, 0
    %p92 = por %p90, %p91
    %p93 = scmp.ne.s32.totalorder %s81, %s82
    %p94 = scmp.eq.s32.totalorder %s16, 1
    %p95 = por %p93, %p94
    %p97 = scmp.ne.s32.totalorder %s82, %s96
    %p98 = scmp.eq.s32.totalorder %s16, 0
    %p99 = por %p97, %p98
    %s101 = sadd.s32 %s100, 1
    %p104 = scmp.eq.s32.totalorder %s10, 1
    %p105 = scmp.ne.s32.totalorder %s100, %s102
    %p106 = scmp.eq.s32.totalorder %s10, 0
    %p107 = por %p105, %p106
    %p108 = scmp.ne.s32.totalorder %s100, %s102
    %p109 = scmp.eq.s32.totalorder %s15, 1
    %p110 = por %p108, %p109
    %p111 = scmp.ne.s32.totalorder %s102, %s103
    %p112 = scmp.eq.s32.totalorder %s15, 0
    %p113 = por %p111, %p112
    %p114 = scmp.ne.s32.totalorder %s102, %s103
    %p115 = scmp.eq.s32.totalorder %s16, 1
    %p116 = por %p114, %p115
    %p118 = scmp.ne.s32.totalorder %s103, %s117
    %p119 = scmp.eq.s32.totalorder %s16, 0
    %p120 = por %p118, %p119
    %p121 = scmp.le.s32.totalorder 1, %s10
    %p122 = scmp.lt.s32.totalorder %s10, 3
    %p123 = pnand %p121, %p122
    %p124 = pneg %p123
    // Predicated region
    $region9: #{spectral_transform2d.9} parent=5 // pred_check
      _
    $region10: #{spectral_transform2d.9} parent=5 // pred_check_branch
      %126 = sbr.rel (%p123) target = $region12
    $region11: #{spectral_transform2d.9} parent=5 // pred_region
      %s127 = ssub.s32 %s10, 1
      // Predicated region
      $region13: #{spectral_transform2d.9} parent=11 // pred_check
        %p128 = pneg %p71
      $region14: #{spectral_transform2d.9} parent=11 // pred_check_branch
        %130 = sbr.rel (%p128) target = $region16
      $region15: #{spectral_transform2d.9} parent=11 // pred_region
        _
      $region16: #{spectral_transform2d.9} parent=11 // pred_fallthru
        _
    $region12: #{spectral_transform2d.9} parent=5 // pred_fallthru
      _
    %p131 = scmp.lt.s32.totalorder %s10, 2
    // Predicated region
    $region17: #{spectral_transform2d.9} parent=5 // pred_check
      %p132 = pneg %p131
    $region18: #{spectral_transform2d.9} parent=5 // pred_check_branch
      %134 = sbr.rel (%p132) target = $region20
    $region19: #{spectral_transform2d.9} parent=5 // pred_region
      // Predicated region
      $region21: #{spectral_transform2d.9} parent=19 // pred_check
        %p135 = pneg %p44
      $region22: #{spectral_transform2d.9} parent=19 // pred_check_branch
        %137 = sbr.rel (%p135) target = $region24
      $region23: #{spectral_transform2d.9} parent=19 // pred_region
        %s138 = smul.u32 2, %s18
        %p139 = scmp.lt.s32.totalorder %s17, 1
        %s140 = scalar_select %p139, %s17, 1
        %p141 = scmp.lt.s32.totalorder %s138, 1
        %s142 = scalar_select %p141, %s138, 1
        %s143 = smul.addr %s140, 2
        %s144 = sadd.s32 %s142, %s143
        %s145 = smul.addr %s144, 8
        %s146 = scalar_lea.vmem %s0, %s145
        %s147 = smul.u32 2, %s18
      $region24: #{spectral_transform2d.9} parent=19 // pred_fallthru
        _
    $region20: #{spectral_transform2d.9} parent=5 // pred_fallthru
      _
    %p148 = scmp.le.s32.totalorder 1, %s10
    %p149 = scmp.lt.s32.totalorder %s10, 3
    %p150 = pnand %p148, %p149
    %p151 = pneg %p150
    // Predicated region
    $region25: #{spectral_transform2d.9} parent=5 // pred_check
      _
    $region26: #{spectral_transform2d.9} parent=5 // pred_check_branch
      %153 = sbr.rel (%p150) target = $region28
    $region27: #{spectral_transform2d.9} parent=5 // pred_region
      %s154 = ssub.s32 %s10, 1
      %s155 = smul.u32 2, %s20
      %p156 = scmp.lt.s32.totalorder %s19, 1
      %s157 = scalar_select %p156, %s19, 1
      %p158 = scmp.lt.s32.totalorder %s155, 1
      %s159 = scalar_select %p158, %s155, 1
      %s160 = smul.addr %s157, 2
      %s161 = sadd.s32 %s159, %s160
      %s162 = smul.addr %s161, 8
      %s163 = scalar_lea.vmem %s0, %s162
      %p164 = pneg %p50
      %p165 = pneg %p47
      %p166 = pneg %p71
      %p167 = pneg %p68
      %p168 = pneg %p92
      %p169 = pneg %p89
      %p170 = pneg %p113
      %p171 = pneg %p110
      %s172 = smul.u32 2, %s20
      %p173 = scmp.lt.s32.totalorder %s19, 1
      %s174 = scalar_select %p173, %s19, 1
      %p175 = scmp.lt.s32.totalorder %s172, 1
      %s176 = scalar_select %p175, %s172, 1
      %s177 = smul.addr %s174, 2
      %s178 = sadd.s32 %s176, %s177
      %s179 = smul.addr %s178, 8
      %s180 = scalar_lea.vmem %s0, %s179
      %s181 = smul.u32 2, %s20
      %p182 = scmp.eq.s32.totalorder %s19, 0
      %p183 = scmp.eq.s32.totalorder %s20, 0
      %p184 = pnand %p182, %p183
      %p185 = pneg %p184
      // Predicated region
      $region29: #{spectral_transform2d.9} parent=27 // pred_check
        _
      $region30: #{spectral_transform2d.9} parent=27 // pred_check_branch
        %187 = sbr.rel (%p184) target = $region32
      $region31: #{spectral_transform2d.9} parent=27 // pred_region
        %vm188 = vcmask 7168
        %189 = vst.msk [vmem:[%s2] sm:$0xff] %vm188, 0.0
        %190 = vst.msk [vmem:[%s3] sm:$0xff] %vm188, 0.0
      $region32: #{spectral_transform2d.9} parent=27 // pred_fallthru
        _
      %v191 = vld [vmem:[%s180] sm:$0xff]
      %v192 = vld [vmem:[%s180 + $0x8] sm:$0xff]
      %v193 = vld [vmem:[%s1] sm:$0xff]
      %vm194 = vcmask 64512
      %v196 = vsel %vm194, %v193, 0
      %198 = vmatprep.subr.mxu0 0.0
      %199 = vmatpush1.msra.mxu0 0.0
      %200 = vmatprep.subr.mxu0 0.0
      %201 = vmatpush1.msra.mxu0 0.0
      %202 = vmatprep.subr.mxu0 0.0
      %203 = vmatpush1.msra.mxu0 0.0
      %204 = vmatprep.subr.mxu0 0.0
      %205 = vmatpush1.msra.mxu0 0.0
      %206 = vmatprep.subr.mxu0 0.0
      %207 = vmatpush1.msra.mxu0 0.0
      %208 = vmatprep.subr.mxu0 0.0
      %209 = vmatpush1.msra.mxu0 0.0
      %210 = vmatprep.subr.mxu0 0.0
      %211 = vmatpush1.msra.mxu0 0.0
      %212 = vmatprep.subr.mxu0 0.0
      %213 = vmatpush1.msra.mxu0 0.0
      %214 = vmatprep.subr.mxu0 0.0
      %215 = vmatpush1.msra.mxu0 0.0
      %216 = vmatprep.subr.mxu0 0.0
      %217 = vmatpush1.msra.mxu0 0.0
      %218 = vmatprep.subr.mxu0 0.0
      %219 = vmatpush1.msra.mxu0 0.0
      %220 = vmatprep.subr.mxu0 0.0
      %221 = vmatpush1.msra.mxu0 0.0
      %222 = vmatprep.subr.mxu0 0.0
      %223 = vmatpush1.msra.mxu0 0.0
      %224 = vmatprep.subr.mxu0 0.0
      %225 = vmatpush1.msra.mxu0 0.0
      %226 = vmatprep.subr.mxu0 0.0
      %227 = vmatpush1.msra.mxu0 0.0
      %228 = vmatprep.subr.mxu0 %v192
      %229 = vmatpush1.msra.mxu0 %v191
      %230 = vmatprep.subr.mxu0 0.0
      %231 = vmatpush2.msra.mxu0 0.0
      %232 = vmatprep.subr.mxu0 0.0
      %233 = vmatpush2.msra.mxu0 0.0
      %234 = vmatprep.subr.mxu0 0.0
      %235 = vmatpush2.msra.mxu0 0.0
      %236 = vmatprep.subr.mxu0 0.0
      %237 = vmatpush2.msra.mxu0 0.0
      %238 = vmatprep.subr.mxu0 0.0
      %239 = vmatpush2.msra.mxu0 0.0
      %240 = vmatprep.subr.mxu0 0.0
      %241 = vmatpush2.msra.mxu0 0.0
      %242 = vmatprep.subr.mxu0 0.0
      %243 = vmatpush2.msra.mxu0 0.0
      %244 = vmatprep.subr.mxu0 0.0
      %245 = vmatpush2.msra.mxu0 0.0
      %246 = vmatprep.subr.mxu0 0.0
      %247 = vmatpush2.msra.mxu0 0.0
      %248 = vmatprep.subr.mxu0 0.0
      %249 = vmatpush2.msra.mxu0 0.0
      %250 = vmatprep.subr.mxu0 0.0
      %251 = vmatpush2.msra.mxu0 0.0
      %252 = vmatprep.subr.mxu0 0.0
      %253 = vmatpush2.msra.mxu0 0.0
      %254 = vmatprep.subr.mxu0 0.0
      %255 = vmatpush2.msra.mxu0 0.0
      %256 = vmatprep.subr.mxu0 0.0
      %257 = vmatpush2.msra.mxu0 0.0
      %258 = vmatprep.subr.mxu0 0.0
      %259 = vmatpush2.msra.mxu0 0.0
      %260 = vmatprep.subr.mxu0 0.0
      %261 = vmatpush2.msra.mxu0 0.0
      %262 = vmatprep.mubr.f32.mxu0 0.0
      %263 = vmatmul.mubr.f32.gmra.mxu0 %v196
      %v264 = vpop.f32.mrf.mxu0
      %v265 = vadd.f32 0.0, %v264
      %v266 = vpop.f32.mrf.mxu0
      %v267 = vadd.f32 0.0, %v266
      %268 = vdwg.mxu0
      %v269 = vld [vmem:[%s2] sm:$0xff]
      %vm270 = vcmask 130048
      %v271 = vsel %vm270, %v267, 0.0
      %v272 = vadd.f32 %v265, %v271
      %273 = vadd.xlane.f32.xlu0 %v272
      %v274 = vpop.xlane.xlu0 %273
      %v275 = vadd.f32 %v269, %v274
      %vm276 = vcmask 7168
      %277 = vst.msk [vmem:[%s2] sm:$0xff] %vm276, %v275
      %v278 = vld [vmem:[%s3] sm:$0xff]
      %v279 = vmul.f32 %v265, %v265
      %v280 = vmul.f32 %v267, %v267
      %v281 = vsel %vm270, %v280, 0.0
      %v282 = vadd.f32 %v279, %v281
      %283 = vadd.xlane.f32.xlu0 %v282
      %v284 = vpop.xlane.xlu0 %283
      %v285 = vadd.f32 %v278, %v284
      %286 = vst.msk [vmem:[%s3] sm:$0xff] %vm276, %v285
      // Predicated region
      $region33: #{spectral_transform2d.9} parent=27 // pred_check
        %p287 = pneg %p89
      $region34: #{spectral_transform2d.9} parent=27 // pred_check_branch
        %289 = sbr.rel (%p287) target = $region36
      $region35: #{spectral_transform2d.9} parent=27 // pred_region
        _
      $region36: #{spectral_transform2d.9} parent=27 // pred_fallthru
        _
      // Predicated region
      $region37: #{spectral_transform2d.9} parent=27 // pred_check
        %p290 = pneg %p110
      $region38: #{spectral_transform2d.9} parent=27 // pred_check_branch
        %292 = sbr.rel (%p290) target = $region40
      $region39: #{spectral_transform2d.9} parent=27 // pred_region
        _
      $region40: #{spectral_transform2d.9} parent=27 // pred_fallthru
        _
      // Predicated region
      $region41: #{spectral_transform2d.9} parent=27 // pred_check
        %p293 = pneg %p89
      $region42: #{spectral_transform2d.9} parent=27 // pred_check_branch
        %295 = sbr.rel (%p293) target = $region44
      $region43: #{spectral_transform2d.9} parent=27 // pred_region
        _
      $region44: #{spectral_transform2d.9} parent=27 // pred_fallthru
        _
      // Predicated region
      $region45: #{spectral_transform2d.9} parent=27 // pred_check
        %p296 = pneg %p110
      $region46: #{spectral_transform2d.9} parent=27 // pred_check_branch
        %298 = sbr.rel (%p296) target = $region48
      $region47: #{spectral_transform2d.9} parent=27 // pred_region
        _
      $region48: #{spectral_transform2d.9} parent=27 // pred_fallthru
        _
    $region28: #{spectral_transform2d.9} parent=5 // pred_fallthru
      _
    %p299 = scmp.le.s32.totalorder 2, %s10
    // Predicated region
    $region49: #{spectral_transform2d.9} parent=5 // pred_check
      %p300 = pneg %p299
    $region50: #{spectral_transform2d.9} parent=5 // pred_check_branch
      %302 = sbr.rel (%p300) target = $region52
    $region51: #{spectral_transform2d.9} parent=5 // pred_region
      %s303 = ssub.s32 %s10, 2
    $region52: #{spectral_transform2d.9} parent=5 // pred_fallthru
      _
  $region6: #{spectral_transform2d.9} parent=0 // loop_footer
    %s14 = sadd.s32 1, %s10
  $region7: #{spectral_transform2d.9} parent=0 // loop_footer_branch
    %9 = sbr.rel target = $region3
  $region8: #{spectral_transform2d.9} parent=0 // loop_exit
    _

// kernel: spectral_transform2d.10
$region0: #{spectral_transform2d.10}
  #allocation0 [shape = 'u32[]', space=smem, size = 0x4, offset = 0x4, fixed_abs, tag = 'smem constant byte address 0x4 - core index']
  #allocation1 [shape = 'u32[144,128]{1,0:T(1,128)}', space=vmem, size = 0x12000, scoped, tag = 'internal scratch']
  %s0 = inlined_call_operand.vmem [shape: f32[2,8,144], index: 0, kind: input, shape index: {}]
  %s1 = inlined_call_operand.vmem [shape: f32[8,8], index: 1, kind: input, shape index: {}]
  %s2 = inlined_call_operand.vmem [shape: f32[8,1], index: 2, kind: input, shape index: {}]
  %s3 = inlined_call_operand.vmem [shape: f32[8,1], index: 3, kind: input, shape index: {}]
  %s4 = inlined_call_operand.vmem [shape: f32[8,1], index: 4, kind: input, shape index: {}]
  %s5 = inlined_call_operand.vmem [shape: f32[8,1], index: 5, kind: input, shape index: {}]
  %s6 = inlined_call_operand.vmem [shape: f32[2,8,144], index: 6, kind: output, shape index: {}]
  %s7 = sld [smem:[#allocation0]]
  $region57: #{spectral_transform2d.10} parent=0
    _
  %s9 = ssub.s32 1, %s7
  %s10 = scalar_select 0, %s9, %s7
  loop: start=0, step=1, limit=4
  $region2: #{spectral_transform2d.10} parent=0 // loop_pre_header
    _
  $region3: #{spectral_transform2d.10} parent=0 // loop_header
    %s12 = sphi 0, %s16
    %p13 = scmp.ge.s32.totalorder %s12, 4
    %s19 = sphi 0, %s31
    %s20 = sphi 0, %s27
    %s21 = sphi 0, %s19
    %s22 = sphi 0, %s20
    %s23 = sphi 0, %s21
    %s24 = sphi 0, %s22
    %s36 = sphi 0, %s38
    %s39 = sphi 0, %s36
    %s40 = sphi 0, %s39
    %s56 = sphi 0, %s40
    %s60 = sphi 0, %s60
    %s62 = sphi 0, %s60
    %s63 = sphi 0, %s62
    %s77 = sphi 0, %s63
    %s81 = sphi 0, %s81
    %s83 = sphi 0, %s81
    %s84 = sphi 0, %s83
    %s98 = sphi 0, %s84
    %s102 = sphi 0, %s102
    %s104 = sphi 0, %s102
    %s105 = sphi 0, %s104
    %s119 = sphi 0, %s105
    %s123 = sphi 0, %s123
    %s125 = sphi 0, %s123
    %s126 = sphi 0, %s125
    %s140 = sphi 0, %s126
    %s144 = sphi 0, %s144
    %s146 = sphi 0, %s144
    %s147 = sphi 0, %s146
    %s161 = sphi 0, %s147
    %s169 = sphi 0, %s171
    %s172 = sphi 0, %s169
    %s173 = sphi 0, %s172
    %s189 = sphi 0, %s173
  $region4: #{spectral_transform2d.10} parent=0 // loop_header_branch
    %15 = sbr.rel (%p13) target = $region8
  $region5: #{spectral_transform2d.10} parent=0 // loop_body
    %s17 = ssub.s32 %s12, 1
    %s18 = ssub.s32 %s12, 2
    %s25 = sadd.s32 1, %s20
    %p26 = scmp.ge.s32.totalorder %s25, 1
    %s27 = scalar_select %p26, 0, %s25
    %s28 = sadd.s32 1, %s19
    %s29 = scalar_select %p26, %s28, %s19
    %p30 = scmp.ge.s32.totalorder %s29, 2
    %s31 = scalar_select %p30, 0, %s29
    %s32 = ssub.s32 %s19, %s31
    %s33 = ssub.s32 %s20, %s27
    %s34 = sor.u32 %s32, %s33
    %p35 = scmp.eq.s32.totalorder %s34, 0
    %s37 = sadd.s32 %s36, 1
    %s38 = scalar_select %p35, %s36, %s37
    %p41 = pneg %p35
    %p42 = scmp.eq.s32.totalorder %s12, 1
    %p43 = por %p41, %p42
    %p44 = scmp.ne.s32.totalorder %s36, %s39
    %p45 = scmp.eq.s32.totalorder %s12, 0
    %p46 = por %p44, %p45
    %p47 = scmp.ne.s32.totalorder %s36, %s39
    %p48 = scmp.eq.s32.totalorder %s17, 1
    %p49 = por %p47, %p48
    %p50 = scmp.ne.s32.totalorder %s39, %s40
    %p51 = scmp.eq.s32.totalorder %s17, 0
    %p52 = por %p50, %p51
    %p53 = scmp.ne.s32.totalorder %s39, %s40
    %p54 = scmp.eq.s32.totalorder %s18, 1
    %p55 = por %p53, %p54
    %p57 = scmp.ne.s32.totalorder %s40, %s56
    %p58 = scmp.eq.s32.totalorder %s18, 0
    %p59 = por %p57, %p58
    %s61 = sadd.s32 %s60, 1
    %p64 = scmp.eq.s32.totalorder %s12, 1
    %p65 = scmp.ne.s32.totalorder %s60, %s62
    %p66 = scmp.eq.s32.totalorder %s12, 0
    %p67 = por %p65, %p66
    %p68 = scmp.ne.s32.totalorder %s60, %s62
    %p69 = scmp.eq.s32.totalorder %s17, 1
    %p70 = por %p68, %p69
    %p71 = scmp.ne.s32.totalorder %s62, %s63
    %p72 = scmp.eq.s32.totalorder %s17, 0
    %p73 = por %p71, %p72
    %p74 = scmp.ne.s32.totalorder %s62, %s63
    %p75 = scmp.eq.s32.totalorder %s18, 1
    %p76 = por %p74, %p75
    %p78 = scmp.ne.s32.totalorder %s63, %s77
    %p79 = scmp.eq.s32.totalorder %s18, 0
    %p80 = por %p78, %p79
    %s82 = sadd.s32 %s81, 1
    %p85 = scmp.eq.s32.totalorder %s12, 1
    %p86 = scmp.ne.s32.totalorder %s81, %s83
    %p87 = scmp.eq.s32.totalorder %s12, 0
    %p88 = por %p86, %p87
    %p89 = scmp.ne.s32.totalorder %s81, %s83
    %p90 = scmp.eq.s32.totalorder %s17, 1
    %p91 = por %p89, %p90
    %p92 = scmp.ne.s32.totalorder %s83, %s84
    %p93 = scmp.eq.s32.totalorder %s17, 0
    %p94 = por %p92, %p93
    %p95 = scmp.ne.s32.totalorder %s83, %s84
    %p96 = scmp.eq.s32.totalorder %s18, 1
    %p97 = por %p95, %p96
    %p99 = scmp.ne.s32.totalorder %s84, %s98
    %p100 = scmp.eq.s32.totalorder %s18, 0
    %p101 = por %p99, %p100
    %s103 = sadd.s32 %s102, 1
    %p106 = scmp.eq.s32.totalorder %s12, 1
    %p107 = scmp.ne.s32.totalorder %s102, %s104
    %p108 = scmp.eq.s32.totalorder %s12, 0
    %p109 = por %p107, %p108
    %p110 = scmp.ne.s32.totalorder %s102, %s104
    %p111 = scmp.eq.s32.totalorder %s17, 1
    %p112 = por %p110, %p111
    %p113 = scmp.ne.s32.totalorder %s104, %s105
    %p114 = scmp.eq.s32.totalorder %s17, 0
    %p115 = por %p113, %p114
    %p116 = scmp.ne.s32.totalorder %s104, %s105
    %p117 = scmp.eq.s32.totalorder %s18, 1
    %p118 = por %p116, %p117
    %p120 = scmp.ne.s32.totalorder %s105, %s119
    %p121 = scmp.eq.s32.totalorder %s18, 0
    %p122 = por %p120, %p121
    %s124 = sadd.s32 %s123, 1
    %p127 = scmp.eq.s32.totalorder %s12, 1
    %p128 = scmp.ne.s32.totalorder %s123, %s125
    %p129 = scmp.eq.s32.totalorder %s12, 0
    %p130 = por %p128, %p129
    %p131 = scmp.ne.s32.totalorder %s123, %s125
    %p132 = scmp.eq.s32.totalorder %s17, 1
    %p133 = por %p131, %p132
    %p134 = scmp.ne.s32.totalorder %s125, %s126
    %p135 = scmp.eq.s32.totalorder %s17, 0
    %p136 = por %p134, %p135
    %p137 = scmp.ne.s32.totalorder %s125, %s126
    %p138 = scmp.eq.s32.totalorder %s18, 1
    %p139 = por %p137, %p138
    %p141 = scmp.ne.s32.totalorder %s126, %s140
    %p142 = scmp.eq.s32.totalorder %s18, 0
    %p143 = por %p141, %p142
    %s145 = sadd.s32 %s144, 1
    %p148 = scmp.eq.s32.totalorder %s12, 1
    %p149 = scmp.ne.s32.totalorder %s144, %s146
    %p150 = scmp.eq.s32.totalorder %s12, 0
    %p151 = por %p149, %p150
    %p152 = scmp.ne.s32.totalorder %s144, %s146
    %p153 = scmp.eq.s32.totalorder %s17, 1
    %p154 = por %p152, %p153
    %p155 = scmp.ne.s32.totalorder %s146, %s147
    %p156 = scmp.eq.s32.totalorder %s17, 0
    %p157 = por %p155, %p156
    %p158 = scmp.ne.s32.totalorder %s146, %s147
    %p159 = scmp.eq.s32.totalorder %s18, 1
    %p160 = por %p158, %p159
    %p162 = scmp.ne.s32.totalorder %s147, %s161
    %p163 = scmp.eq.s32.totalorder %s18, 0
    %p164 = por %p162, %p163
    %s165 = ssub.s32 %s19, %s31
    %s166 = ssub.s32 %s20, %s27
    %s167 = sor.u32 %s165, %s166
    %p168 = scmp.eq.s32.totalorder %s167, 0
    %s170 = sadd.s32 %s169, 1
    %s171 = scalar_select %p168, %s169, %s170
    %p174 = pneg %p168
    %p175 = scmp.eq.s32.totalorder %s12, 1
    %p176 = por %p174, %p175
    %p177 = scmp.ne.s32.totalorder %s169, %s172
    %p178 = scmp.eq.s32.totalorder %s12, 0
    %p179 = por %p177, %p178
    %p180 = scmp.ne.s32.totalorder %s169, %s172
    %p181 = scmp.eq.s32.totalorder %s17, 1
    %p182 = por %p180, %p181
    %p183 = scmp.ne.s32.totalorder %s172, %s173
    %p184 = scmp.eq.s32.totalorder %s17, 0
    %p185 = por %p183, %p184
    %p186 = scmp.ne.s32.totalorder %s172, %s173
    %p187 = scmp.eq.s32.totalorder %s18, 1
    %p188 = por %p186, %p187
    %p190 = scmp.ne.s32.totalorder %s173, %s189
    %p191 = scmp.eq.s32.totalorder %s18, 0
    %p192 = por %p190, %p191
    %p193 = scmp.le.s32.totalorder 1, %s12
    %p194 = scmp.lt.s32.totalorder %s12, 3
    %p195 = pnand %p193, %p194
    %p196 = pneg %p195
    // Predicated region
    $region9: #{spectral_transform2d.10} parent=5 // pred_check
      _
    $region10: #{spectral_transform2d.10} parent=5 // pred_check_branch
      %198 = sbr.rel (%p195) target = $region12
    $region11: #{spectral_transform2d.10} parent=5 // pred_region
      %s199 = ssub.s32 %s12, 1
      // Predicated region
      $region13: #{spectral_transform2d.10} parent=11 // pred_check
        %p200 = pneg %p73
      $region14: #{spectral_transform2d.10} parent=11 // pred_check_branch
        %202 = sbr.rel (%p200) target = $region16
      $region15: #{spectral_transform2d.10} parent=11 // pred_region
        _
      $region16: #{spectral_transform2d.10} parent=11 // pred_fallthru
        _
      // Predicated region
      $region17: #{spectral_transform2d.10} parent=11 // pred_check
        %p203 = pneg %p94
      $region18: #{spectral_transform2d.10} parent=11 // pred_check_branch
        %205 = sbr.rel (%p203) target = $region20
      $region19: #{spectral_transform2d.10} parent=11 // pred_region
        _
      $region20: #{spectral_transform2d.10} parent=11 // pred_fallthru
        _
      // Predicated region
      $region21: #{spectral_transform2d.10} parent=11 // pred_check
        %p206 = pneg %p115
      $region22: #{spectral_transform2d.10} parent=11 // pred_check_branch
        %208 = sbr.rel (%p206) target = $region24
      $region23: #{spectral_transform2d.10} parent=11 // pred_region
        _
      $region24: #{spectral_transform2d.10} parent=11 // pred_fallthru
        _
      // Predicated region
      $region25: #{spectral_transform2d.10} parent=11 // pred_check
        %p209 = pneg %p136
      $region26: #{spectral_transform2d.10} parent=11 // pred_check_branch
        %211 = sbr.rel (%p209) target = $region28
      $region27: #{spectral_transform2d.10} parent=11 // pred_region
        _
      $region28: #{spectral_transform2d.10} parent=11 // pred_fallthru
        _
      // Predicated region
      $region29: #{spectral_transform2d.10} parent=11 // pred_check
        %p212 = pneg %p157
      $region30: #{spectral_transform2d.10} parent=11 // pred_check_branch
        %214 = sbr.rel (%p212) target = $region32
      $region31: #{spectral_transform2d.10} parent=11 // pred_region
        _
      $region32: #{spectral_transform2d.10} parent=11 // pred_fallthru
        _
    $region12: #{spectral_transform2d.10} parent=5 // pred_fallthru
      _
    %p215 = scmp.lt.s32.totalorder %s12, 2
    // Predicated region
    $region33: #{spectral_transform2d.10} parent=5 // pred_check
      %p216 = pneg %p215
    $region34: #{spectral_transform2d.10} parent=5 // pred_check_branch
      %218 = sbr.rel (%p216) target = $region36
    $region35: #{spectral_transform2d.10} parent=5 // pred_region
      // Predicated region
      $region37: #{spectral_transform2d.10} parent=35 // pred_check
        %p219 = pneg %p46
      $region38: #{spectral_transform2d.10} parent=35 // pred_check_branch
        %221 = sbr.rel (%p219) target = $region40
      $region39: #{spectral_transform2d.10} parent=35 // pred_region
        %s222 = smul.u32 2, %s20
        %p223 = scmp.lt.s32.totalorder %s19, 1
        %s224 = scalar_select %p223, %s19, 1
        %p225 = scmp.lt.s32.totalorder %s222, 1
        %s226 = scalar_select %p225, %s222, 1
        %s227 = smul.addr %s224, 2
        %s228 = sadd.s32 %s226, %s227
        %s229 = smul.addr %s228, 8
        %s230 = scalar_lea.vmem %s0, %s229
        %s231 = smul.u32 2, %s20
      $region40: #{spectral_transform2d.10} parent=35 // pred_fallthru
        _
    $region36: #{spectral_transform2d.10} parent=5 // pred_fallthru
      _
    %p232 = scmp.le.s32.totalorder 1, %s12
    %p233 = scmp.lt.s32.totalorder %s12, 3
    %p234 = pnand %p232, %p233
    %p235 = pneg %p234
    // Predicated region
    $region41: #{spectral_transform2d.10} parent=5 // pred_check
      _
    $region42: #{spectral_transform2d.10} parent=5 // pred_check_branch
      %237 = sbr.rel (%p234) target = $region44
    $region43: #{spectral_transform2d.10} parent=5 // pred_region
      %s238 = ssub.s32 %s12, 1
      %s239 = smul.u32 2, %s22
      %p240 = scmp.lt.s32.totalorder %s21, 1
      %s241 = scalar_select %p240, %s21, 1
      %p242 = scmp.lt.s32.totalorder %s239, 1
      %s243 = scalar_select %p242, %s239, 1
      %s244 = smul.addr %s241, 2
      %s245 = sadd.s32 %s243, %s244
      %s246 = smul.addr %s245, 8
      %s247 = scalar_lea.vmem %s0, %s246
      %p248 = pneg %p52
      %p249 = pneg %p49
      %p250 = pneg %p73
      %p251 = pneg %p70
      %p252 = pneg %p94
      %p253 = pneg %p91
      %p254 = pneg %p115
      %p255 = pneg %p112
      %p256 = pneg %p136
      %p257 = pneg %p133
      %p258 = pneg %p157
      %p259 = pneg %p154
      %p260 = pneg %p185
      %p261 = pneg %p182
      %s262 = smul.u32 2, %s22
      %p263 = scmp.lt.s32.totalorder %s21, 1
      %s264 = scalar_select %p263, %s21, 1
      %p265 = scmp.lt.s32.totalorder %s262, 1
      %s266 = scalar_select %p265, %s262, 1
      %s267 = smul.addr %s264, 2
      %s268 = sadd.s32 %s266, %s267
      %s269 = smul.addr %s268, 8
      %s270 = scalar_lea.vmem %s6, %s269
      %s271 = smul.u32 2, %s22
      %p272 = scmp.lt.s32.totalorder %s21, 1
      %s273 = scalar_select %p272, %s21, 1
      %p274 = scmp.lt.s32.totalorder %s271, 1
      %s275 = scalar_select %p274, %s271, 1
      %s276 = smul.addr %s273, 2
      %s277 = sadd.s32 %s275, %s276
      %s278 = smul.addr %s277, 8
      %s279 = scalar_lea.vmem %s0, %s278
      %s280 = smul.u32 2, %s22
      %s281 = smul.u32 2, %s22
      %p282 = scmp.lt.s32.totalorder %s21, 1
      %s283 = scalar_select %p282, %s21, 1
      %p284 = scmp.lt.s32.totalorder %s281, 1
      %s285 = scalar_select %p284, %s281, 1
      %s286 = smul.addr %s283, 2
      %s287 = sadd.s32 %s285, %s286
      %s288 = smul.addr %s287, 8
      %s289 = scalar_lea.vmem %s6, %s288
      %s290 = smul.u32 2, %s22
      %v291 = vld [vmem:[%s4] sm:$0xff]
      %v292 = vmul.f32 %v291, 0.0034722222
      %v293 = vld [vmem:[%s5] sm:$0xff]
      %v294 = vmul.f32 %v293, 0.0034722222
      %v295 = vmul.f32 %v292, %v292
      %v296 = vsub.f32 %v294, %v295
      %v297 = vmax.f32 %v296, 0.0
      %v298 = vadd.f32 %v297, 1e-05
      %v299 = vrsqrt.pop %v298
      %v300 = vld [vmem:[%s2] sm:$0xff]
      %v301 = vmul.f32 %v300, %v299
      %v302 = vld [vmem:[%s3] sm:$0xff]
      %v303 = vmul.f32 %v292, %v301
      %v304 = vsub.f32 %v302, %v303
      %v305 = vld [vmem:[%s1] sm:$0xff]
      %v306 = vld [vmem:[%s279] sm:$0xff]
      %v307 = vld [vmem:[%s279 + $0x8] sm:$0xff]
      %vm308 = vcmask 64512
      %v310 = vsel %vm308, %v305, 0
      %312 = vmatprep.subr.mxu0 0.0
      %313 = vmatpush1.msra.mxu0 0.0
      %314 = vmatprep.subr.mxu0 0.0
      %315 = vmatpush1.msra.mxu0 0.0
      %316 = vmatprep.subr.mxu0 0.0
      %317 = vmatpush1.msra.mxu0 0.0
      %318 = vmatprep.subr.mxu0 0.0
      %319 = vmatpush1.msra.mxu0 0.0
      %320 = vmatprep.subr.mxu0 0.0
      %321 = vmatpush1.msra.mxu0 0.0
      %322 = vmatprep.subr.mxu0 0.0
      %323 = vmatpush1.msra.mxu0 0.0
      %324 = vmatprep.subr.mxu0 0.0
      %325 = vmatpush1.msra.mxu0 0.0
      %326 = vmatprep.subr.mxu0 0.0
      %327 = vmatpush1.msra.mxu0 0.0
      %328 = vmatprep.subr.mxu0 0.0
      %329 = vmatpush1.msra.mxu0 0.0
      %330 = vmatprep.subr.mxu0 0.0
      %331 = vmatpush1.msra.mxu0 0.0
      %332 = vmatprep.subr.mxu0 0.0
      %333 = vmatpush1.msra.mxu0 0.0
      %334 = vmatprep.subr.mxu0 0.0
      %335 = vmatpush1.msra.mxu0 0.0
      %336 = vmatprep.subr.mxu0 0.0
      %337 = vmatpush1.msra.mxu0 0.0
      %338 = vmatprep.subr.mxu0 0.0
      %339 = vmatpush1.msra.mxu0 0.0
      %340 = vmatprep.subr.mxu0 0.0
      %341 = vmatpush1.msra.mxu0 0.0
      %342 = vmatprep.subr.mxu0 %v307
      %343 = vmatpush1.msra.mxu0 %v306
      %344 = vmatprep.subr.mxu0 0.0
      %345 = vmatpush2.msra.mxu0 0.0
      %346 = vmatprep.subr.mxu0 0.0
      %347 = vmatpush2.msra.mxu0 0.0
      %348 = vmatprep.subr.mxu0 0.0
      %349 = vmatpush2.msra.mxu0 0.0
      %350 = vmatprep.subr.mxu0 0.0
      %351 = vmatpush2.msra.mxu0 0.0
      %352 = vmatprep.subr.mxu0 0.0
      %353 = vmatpush2.msra.mxu0 0.0
      %354 = vmatprep.subr.mxu0 0.0
      %355 = vmatpush2.msra.mxu0 0.0
      %356 = vmatprep.subr.mxu0 0.0
      %357 = vmatpush2.msra.mxu0 0.0
      %358 = vmatprep.subr.mxu0 0.0
      %359 = vmatpush2.msra.mxu0 0.0
      %360 = vmatprep.subr.mxu0 0.0
      %361 = vmatpush2.msra.mxu0 0.0
      %362 = vmatprep.subr.mxu0 0.0
      %363 = vmatpush2.msra.mxu0 0.0
      %364 = vmatprep.subr.mxu0 0.0
      %365 = vmatpush2.msra.mxu0 0.0
      %366 = vmatprep.subr.mxu0 0.0
      %367 = vmatpush2.msra.mxu0 0.0
      %368 = vmatprep.subr.mxu0 0.0
      %369 = vmatpush2.msra.mxu0 0.0
      %370 = vmatprep.subr.mxu0 0.0
      %371 = vmatpush2.msra.mxu0 0.0
      %372 = vmatprep.subr.mxu0 0.0
      %373 = vmatpush2.msra.mxu0 0.0
      %374 = vmatprep.subr.mxu0 0.0
      %375 = vmatpush2.msra.mxu0 0.0
      %376 = vmatprep.mubr.f32.mxu0 0.0
      %377 = vmatmul.mubr.f32.gmra.mxu0 %v310
      %v378 = vpop.f32.mrf.mxu0
      %v379 = vadd.f32 0.0, %v378
      %v380 = vpop.f32.mrf.mxu0
      %v381 = vadd.f32 0.0, %v380
      %382 = vdwg.mxu0
      %384 = vset.pattern.permute.xlu0 0
      %385 = vperm.xlu0 %384, %v301
      %v386 = vpop.permute.xlu0 %385
      %v388 = vmul.f32 %v379, %v386
      %v389 = vmul.f32 %v381, %v386
      %391 = vset.pattern.permute.xlu0 0
      %392 = vperm.xlu0 %391, %v304
      %v393 = vpop.permute.xlu0 %392
      %v395 = vadd.f32 %v388, %v393
      %v396 = vadd.f32 %v389, %v393
      %v397 = vmax.f32 %v395, 0.0
      %v398 = vmax.f32 %v396, 0.0
      %399 = vst [vmem:[%s289] sm:$0xff] %v397
      %vm400 = vcmask 130048
      %401 = vst.msk [vmem:[%s289 + $0x8] sm:$0xff] %vm400, %v398
      %s402 = smul.u32 2, %s22
      %p403 = scmp.lt.s32.totalorder %s21, 1
      %s404 = scalar_select %p403, %s21, 1
      %p405 = scmp.lt.s32.totalorder %s402, 1
      %s406 = scalar_select %p405, %s402, 1
      %s407 = smul.addr %s404, 2
      %s408 = sadd.s32 %s406, %s407
      %s409 = smul.addr %s408, 8
      %s410 = scalar_lea.vmem %s6, %s409
      // Predicated region
      $region45: #{spectral_transform2d.10} parent=43 // pred_check
        %p411 = pneg %p182
      $region46: #{spectral_transform2d.10} parent=43 // pred_check_branch
        %413 = sbr.rel (%p411) target = $region48
      $region47: #{spectral_transform2d.10} parent=43 // pred_region
        %s414 = smul.u32 2, %s22
      $region48: #{spectral_transform2d.10} parent=43 // pred_fallthru
        _
    $region44: #{spectral_transform2d.10} parent=5 // pred_fallthru
      _
    %p415 = scmp.le.s32.totalorder 2, %s12
    // Predicated region
    $region49: #{spectral_transform2d.10} parent=5 // pred_check
      %p416 = pneg %p415
    $region50: #{spectral_transform2d.10} parent=5 // pred_check_branch
      %418 = sbr.rel (%p416) target = $region52
    $region51: #{spectral_transform2d.10} parent=5 // pred_region
      %s419 = ssub.s32 %s12, 2
      // Predicated region
      $region53: #{spectral_transform2d.10} parent=51 // pred_check
        %p420 = pneg %p188
      $region54: #{spectral_transform2d.10} parent=51 // pred_check_branch
        %422 = sbr.rel (%p420) target = $region56
      $region55: #{spectral_transform2d.10} parent=51 // pred_region
        %s423 = smul.u32 2, %s24
        %p424 = scmp.lt.s32.totalorder %s23, 1
        %s425 = scalar_select %p424, %s23, 1
        %p426 = scmp.lt.s32.totalorder %s423, 1
        %s427 = scalar_select %p426, %s423, 1
        %s428 = smul.addr %s425, 2
        %s429 = sadd.s32 %s427, %s428
        %s430 = smul.addr %s429, 8
        %s431 = scalar_lea.vmem %s6, %s430
      $region56: #{spectral_transform2d.10} parent=51 // pred_fallthru
        _
    $region52: #{spectral_transform2d.10} parent=5 // pred_fallthru
      _
  $region6: #{spectral_transform2d.10} parent=0 // loop_footer
    %s16 = sadd.s32 1, %s12
  $region7: #{spectral_transform2d.10} parent=0 // loop_footer_branch
    %11 = sbr.rel target = $region3
  $region8: #{spectral_transform2d.10} parent=0 // loop_exit
    _

// kernel: reverse.0
$region0: #{reverse.0}
  %s0 = inlined_call_operand.vmem [shape: f32[2,4,16,7], index: 0, kind: input, shape index: {}]
  %s1 = inlined_call_operand.vmem [shape: f32[2,4,16,7], index: 1, kind: output, shape index: {}]
  $region1: #{reverse.0} parent=0
    #allocation0 [shape = 'u8[65536]{0}', space=vmem, size = 0x10000, scoped, tag = 'operand span for operand 0']
    #allocation1 [shape = 'u8[32768]{0}', space=vmem, size = 0x8000, scoped, tag = 'operand span for operand 1']
    %s2 = scalar_lea.vmem [#allocation0], 8
    // Predicated region
    $region2: #{reverse.0} parent=1 // pred_check
      _
    $region3: #{reverse.0} parent=1 // pred_check_branch
      %4 = sbr.rel (0) target = $region5
    $region4: #{reverse.0} parent=1 // pred_region
      // Predicated region
      $region6: #{reverse.0} parent=4 // pred_check
        _
      $region7: #{reverse.0} parent=4 // pred_check_branch
        %6 = sbr.rel (0) target = $region9
      $region8: #{reverse.0} parent=4 // pred_region
        // Predicated region
        $region21: #{reverse.0} parent=8 // pred_check
          _
        $region22: #{reverse.0} parent=8 // pred_check_branch
          %36 = sbr.rel (0) target = $region24
        $region23: #{reverse.0} parent=8 // pred_region
          loop: start=0, step=1, limit=1
          $region25: #{reverse.0} parent=23 // loop_pre_header
            _
          $region26: #{reverse.0} parent=23 // loop_header
            %s38 = sphi 0, %s42
            %p39 = scmp.ge.s32.totalorder %s38, 1
            %s43 = sphi %s0, %s0
            %s44 = sphi %s2, %s2
          $region27: #{reverse.0} parent=23 // loop_header_branch
            %41 = sbr.rel (%p39) target = $region31
          $region28: #{reverse.0} parent=23 // loop_body
            %v45 = vld [vmem:[%s43] sm:$0xff]
            %46 = vst [vmem:[%s44] sm:$0xff] %v45
            %v47 = vld [vmem:[%s43 + $0x8] sm:$0xff]
            %48 = vst [vmem:[%s44 + $0x10] sm:$0xff] %v47
            %v49 = vld [vmem:[%s43 + $0x10] sm:$0xff]
            %50 = vst [vmem:[%s44 + $0x20] sm:$0xff] %v49
            %v51 = vld [vmem:[%s43 + $0x18] sm:$0xff]
            %52 = vst [vmem:[%s44 + $0x30] sm:$0xff] %v51
            %v53 = vld [vmem:[%s43 + $0x20] sm:$0xff]
            %54 = vst [vmem:[%s44 + $0x40] sm:$0xff] %v53
            %v55 = vld [vmem:[%s43 + $0x28] sm:$0xff]
            %56 = vst [vmem:[%s44 + $0x50] sm:$0xff] %v55
            %v57 = vld [vmem:[%s43 + $0x30] sm:$0xff]
            %58 = vst [vmem:[%s44 + $0x60] sm:$0xff] %v57
            %v59 = vld [vmem:[%s43 + $0x38] sm:$0xff]
            %60 = vst [vmem:[%s44 + $0x70] sm:$0xff] %v59
          $region29: #{reverse.0} parent=23 // loop_footer
            %s42 = sadd.s32 1, %s38
          $region30: #{reverse.0} parent=23 // loop_footer_branch
            %37 = sbr.rel target = $region26
          $region31: #{reverse.0} parent=23 // loop_exit
            _
        $region24: #{reverse.0} parent=8 // pred_fallthru
          _
        // Predicated region
        $region32: #{reverse.0} parent=8 // pred_check
          _
        $region33: #{reverse.0} parent=8 // pred_check_branch
          %62 = sbr.rel target = $region35
        $region34: #{reverse.0} parent=8 // pred_region
          _
        $region35: #{reverse.0} parent=8 // pred_fallthru
          _
      $region9: #{reverse.0} parent=4 // pred_fallthru
        _
      // Predicated region
      $region10: #{reverse.0} parent=4 // pred_check
        _
      $region11: #{reverse.0} parent=4 // pred_check_branch
        %8 = sbr.rel target = $region13
      $region12: #{reverse.0} parent=4 // pred_region
        %s10 = ssub.s32 256, 1
        loop: start=0, step=1, limit=1
        $region14: #{reverse.0} parent=12 // loop_pre_header
          _
        $region15: #{reverse.0} parent=12 // loop_header
          %s12 = sphi 0, %s16
          %p13 = scmp.ge.s32.totalorder %s12, 1
          %s17 = sphi %s0, %s0
          %s18 = sphi %s2, %s2
        $region16: #{reverse.0} parent=12 // loop_header_branch
          %15 = sbr.rel (%p13) target = $region20
        $region17: #{reverse.0} parent=12 // loop_body
          %v19 = vld [vmem:[%s17] sm:%s10]
          %20 = vst [vmem:[%s18] sm:%s10] %v19
          %v21 = vld [vmem:[%s17 + $0x8] sm:%s10]
          %22 = vst [vmem:[%s18 + $0x10] sm:%s10] %v21
          %v23 = vld [vmem:[%s17 + $0x10] sm:%s10]
          %24 = vst [vmem:[%s18 + $0x20] sm:%s10] %v23
          %v25 = vld [vmem:[%s17 + $0x18] sm:%s10]
          %26 = vst [vmem:[%s18 + $0x30] sm:%s10] %v25
          %v27 = vld [vmem:[%s17 + $0x20] sm:%s10]
          %28 = vst [vmem:[%s18 + $0x40] sm:%s10] %v27
          %v29 = vld [vmem:[%s17 + $0x28] sm:%s10]
          %30 = vst [vmem:[%s18 + $0x50] sm:%s10] %v29
          %v31 = vld [vmem:[%s17 + $0x30] sm:%s10]
          %32 = vst [vmem:[%s18 + $0x60] sm:%s10] %v31
          %v33 = vld [vmem:[%s17 + $0x38] sm:%s10]
          %34 = vst [vmem:[%s18 + $0x70] sm:%s10] %v33
        $region18: #{reverse.0} parent=12 // loop_footer
          %s16 = sadd.s32 1, %s12
        $region19: #{reverse.0} parent=12 // loop_footer_branch
          %11 = sbr.rel target = $region15
        $region20: #{reverse.0} parent=12 // loop_exit
          _
      $region13: #{reverse.0} parent=4 // pred_fallthru
        _
    $region5: #{reverse.0} parent=1 // pred_fallthru
      _
    %63 = vnop
    %s64 = scalar_lea.vmem [#allocation0], 7
    %v65 = vld [vmem:[%s64] ss:$-1 sm:$0xff]
    %v66 = vrot.slane %v65, 1
    %67 = vst [vmem:[#allocation1] sm:$0xff] %v66
    %s68 = scalar_lea.vmem [#allocation0], 8
    %s69 = scalar_lea.vmem %s68, 7 [#allocation0]
    %v70 = vld [vmem:[%s69] ss:$-1 sm:$0xff]
    %v71 = vrot.slane %v70, 1
    %v72 = vlaneseq
    %v73 = vshrl.u32 %v72, 7
    %vm74 = vcmp.lt.s32.totalorder %v73, 7
    %75 = vst.msk [vmem:[#allocation1] sm:$0xff] %vm74, %v71
    %s76 = scalar_lea.vmem [#allocation1], 8
    %s77 = scalar_lea.vmem [#allocation0], 16
    %s78 = scalar_lea.vmem %s77, 7 [#allocation0]
    %v79 = vld [vmem:[%s78] ss:$-1 sm:$0xff]
    %v80 = vrot.slane %v79, 1
    %81 = vst [vmem:[%s76] sm:$0xff] %v80
    %s82 = scalar_lea.vmem %s77, 8 [#allocation0]
    %s83 = scalar_lea.vmem %s82, 7 [#allocation0]
    %v84 = vld [vmem:[%s83] ss:$-1 sm:$0xff]
    %v85 = vrot.slane %v84, 1
    %v86 = vlaneseq
    %v87 = vshrl.u32 %v86, 7
    %vm88 = vcmp.lt.s32.totalorder %v87, 7
    %89 = vst.msk [vmem:[%s76] sm:$0xff] %vm88, %v85
    %s90 = scalar_lea.vmem [#allocation1], 16
    %s91 = scalar_lea.vmem [#allocation0], 32
    %s92 = scalar_lea.vmem %s91, 7 [#allocation0]
    %v93 = vld [vmem:[%s92] ss:$-1 sm:$0xff]
    %v94 = vrot.slane %v93, 1
    %95 = vst [vmem:[%s90] sm:$0xff] %v94
    %s96 = scalar_lea.vmem %s91, 8 [#allocation0]
    %s97 = scalar_lea.vmem %s96, 7 [#allocation0]
    %v98 = vld [vmem:[%s97] ss:$-1 sm:$0xff]
    %v99 = vrot.slane %v98, 1
    %v100 = vlaneseq
    %v101 = vshrl.u32 %v100, 7
    %vm102 = vcmp.lt.s32.totalorder %v101, 7
    %103 = vst.msk [vmem:[%s90] sm:$0xff] %vm102, %v99
    %s104 = scalar_lea.vmem [#allocation1], 24
    %s105 = scalar_lea.vmem [#allocation0], 48
    %s106 = scalar_lea.vmem %s105, 7 [#allocation0]
    %v107 = vld [vmem:[%s106] ss:$-1 sm:$0xff]
    %v108 = vrot.slane %v107, 1
    %109 = vst [vmem:[%s104] sm:$0xff] %v108
    %s110 = scalar_lea.vmem %s105, 8 [#allocation0]
    %s111 = scalar_lea.vmem %s110, 7 [#allocation0]
    %v112 = vld [vmem:[%s111] ss:$-1 sm:$0xff]
    %v113 = vrot.slane %v112, 1
    %v114 = vlaneseq
    %v115 = vshrl.u32 %v114, 7
    %vm116 = vcmp.lt.s32.totalorder %v115, 7
    %117 = vst.msk [vmem:[%s104] sm:$0xff] %vm116, %v113
    %s118 = scalar_lea.vmem [#allocation1], 32
    %s119 = scalar_lea.vmem [#allocation0], 64
    %s120 = scalar_lea.vmem %s119, 7 [#allocation0]
    %v121 = vld [vmem:[%s120] ss:$-1 sm:$0xff]
    %v122 = vrot.slane %v121, 1
    %123 = vst [vmem:[%s118] sm:$0xff] %v122
    %s124 = scalar_lea.vmem %s119, 8 [#allocation0]
    %s125 = scalar_lea.vmem %s124, 7 [#allocation0]
    %v126 = vld [vmem:[%s125] ss:$-1 sm:$0xff]
    %v127 = vrot.slane %v126, 1
    %v128 = vlaneseq
    %v129 = vshrl.u32 %v128, 7
    %vm130 = vcmp.lt.s32.totalorder %v129, 7
    %131 = vst.msk [vmem:[%s118] sm:$0xff] %vm130, %v127
    %s132 = scalar_lea.vmem [#allocation1], 40
    %s133 = scalar_lea.vmem [#allocation0], 80
    %s134 = scalar_lea.vmem %s133, 7 [#allocation0]
    %v135 = vld [vmem:[%s134] ss:$-1 sm:$0xff]
    %v136 = vrot.slane %v135, 1
    %137 = vst [vmem:[%s132] sm:$0xff] %v136
    %s138 = scalar_lea.vmem %s133, 8 [#allocation0]
    %s139 = scalar_lea.vmem %s138, 7 [#allocation0]
    %v140 = vld [vmem:[%s139] ss:$-1 sm:$0xff]
    %v141 = vrot.slane %v140, 1
    %v142 = vlaneseq
    %v143 = vshrl.u32 %v142, 7
    %vm144 = vcmp.lt.s32.totalorder %v143, 7
    %145 = vst.msk [vmem:[%s132] sm:$0xff] %vm144, %v141
    %s146 = scalar_lea.vmem [#allocation1], 48
    %s147 = scalar_lea.vmem [#allocation0], 96
    %s148 = scalar_lea.vmem %s147, 7 [#allocation0]
    %v149 = vld [vmem:[%s148] ss:$-1 sm:$0xff]
    %v150 = vrot.slane %v149, 1
    %151 = vst [vmem:[%s146] sm:$0xff] %v150
    %s152 = scalar_lea.vmem %s147, 8 [#allocation0]
    %s153 = scalar_lea.vmem %s152, 7 [#allocation0]
    %v154 = vld [vmem:[%s153] ss:$-1 sm:$0xff]
    %v155 = vrot.slane %v154, 1
    %v156 = vlaneseq
    %v157 = vshrl.u32 %v156, 7
    %vm158 = vcmp.lt.s32.totalorder %v157, 7
    %159 = vst.msk [vmem:[%s146] sm:$0xff] %vm158, %v155
    %s160 = scalar_lea.vmem [#allocation1], 56
    %s161 = scalar_lea.vmem [#allocation0], 112
    %s162 = scalar_lea.vmem %s161, 7 [#allocation0]
    %v163 = vld [vmem:[%s162] ss:$-1 sm:$0xff]
    %v164 = vrot.slane %v163, 1
    %165 = vst [vmem:[%s160] sm:$0xff] %v164
    %s166 = scalar_lea.vmem %s161, 8 [#allocation0]
    %s167 = scalar_lea.vmem %s166, 7 [#allocation0]
    %v168 = vld [vmem:[%s167] ss:$-1 sm:$0xff]
    %v169 = vrot.slane %v168, 1
    %v170 = vlaneseq
    %v171 = vshrl.u32 %v170, 7
    %vm172 = vcmp.lt.s32.totalorder %v171, 7
    %173 = vst.msk [vmem:[%s160] sm:$0xff] %vm172, %v169
    // Predicated region
    $region36: #{reverse.0} parent=1 // pred_check
      _
    $region37: #{reverse.0} parent=1 // pred_check_branch
      %175 = sbr.rel (0) target = $region39
    $region38: #{reverse.0} parent=1 // pred_region
      // Predicated region
      $region40: #{reverse.0} parent=38 // pred_check
        _
      $region41: #{reverse.0} parent=38 // pred_check_branch
        %177 = sbr.rel (0) target = $region43
      $region42: #{reverse.0} parent=38 // pred_region
        // Predicated region
        $region55: #{reverse.0} parent=42 // pred_check
          _
        $region56: #{reverse.0} parent=42 // pred_check_branch
          %207 = sbr.rel (0) target = $region58
        $region57: #{reverse.0} parent=42 // pred_region
          loop: start=0, step=1, limit=1
          $region59: #{reverse.0} parent=57 // loop_pre_header
            _
          $region60: #{reverse.0} parent=57 // loop_header
            %s209 = sphi 0, %s213
            %p210 = scmp.ge.s32.totalorder %s209, 1
            %s214 = sphi [#allocation1], [#allocation1]
            %s215 = sphi %s1, %s1
          $region61: #{reverse.0} parent=57 // loop_header_branch
            %212 = sbr.rel (%p210) target = $region65
          $region62: #{reverse.0} parent=57 // loop_body
            %v216 = vld [vmem:[%s214] sm:$0xff]
            %217 = vst [vmem:[%s215] sm:$0xff] %v216
            %v218 = vld [vmem:[%s214 + $0x8] sm:$0xff]
            %219 = vst [vmem:[%s215 + $0x8] sm:$0xff] %v218
            %v220 = vld [vmem:[%s214 + $0x10] sm:$0xff]
            %221 = vst [vmem:[%s215 + $0x10] sm:$0xff] %v220
            %v222 = vld [vmem:[%s214 + $0x18] sm:$0xff]
            %223 = vst [vmem:[%s215 + $0x18] sm:$0xff] %v222
            %v224 = vld [vmem:[%s214 + $0x20] sm:$0xff]
            %225 = vst [vmem:[%s215 + $0x20] sm:$0xff] %v224
            %v226 = vld [vmem:[%s214 + $0x28] sm:$0xff]
            %227 = vst [vmem:[%s215 + $0x28] sm:$0xff] %v226
            %v228 = vld [vmem:[%s214 + $0x30] sm:$0xff]
            %229 = vst [vmem:[%s215 + $0x30] sm:$0xff] %v228
            %v230 = vld [vmem:[%s214 + $0x38] sm:$0xff]
            %231 = vst [vmem:[%s215 + $0x38] sm:$0xff] %v230
          $region63: #{reverse.0} parent=57 // loop_footer
            %s213 = sadd.s32 1, %s209
          $region64: #{reverse.0} parent=57 // loop_footer_branch
            %208 = sbr.rel target = $region60
          $region65: #{reverse.0} parent=57 // loop_exit
            _
        $region58: #{reverse.0} parent=42 // pred_fallthru
          _
        // Predicated region
        $region66: #{reverse.0} parent=42 // pred_check
          _
        $region67: #{reverse.0} parent=42 // pred_check_branch
          %233 = sbr.rel target = $region69
        $region68: #{reverse.0} parent=42 // pred_region
          _
        $region69: #{reverse.0} parent=42 // pred_fallthru
          _
      $region43: #{reverse.0} parent=38 // pred_fallthru
        _
      // Predicated region
      $region44: #{reverse.0} parent=38 // pred_check
        _
      $region45: #{reverse.0} parent=38 // pred_check_branch
        %179 = sbr.rel target = $region47
      $region46: #{reverse.0} parent=38 // pred_region
        %s181 = ssub.s32 256, 1
        loop: start=0, step=1, limit=1
        $region48: #{reverse.0} parent=46 // loop_pre_header
          _
        $region49: #{reverse.0} parent=46 // loop_header
          %s183 = sphi 0, %s187
          %p184 = scmp.ge.s32.totalorder %s183, 1
          %s188 = sphi [#allocation1], [#allocation1]
          %s189 = sphi %s1, %s1
        $region50: #{reverse.0} parent=46 // loop_header_branch
          %186 = sbr.rel (%p184) target = $region54
        $region51: #{reverse.0} parent=46 // loop_body
          %v190 = vld [vmem:[%s188] sm:%s181]
          %191 = vst [vmem:[%s189] sm:%s181] %v190
          %v192 = vld [vmem:[%s188 + $0x8] sm:%s181]
          %193 = vst [vmem:[%s189 + $0x8] sm:%s181] %v192
          %v194 = vld [vmem:[%s188 + $0x10] sm:%s181]
          %195 = vst [vmem:[%s189 + $0x10] sm:%s181] %v194
          %v196 = vld [vmem:[%s188 + $0x18] sm:%s181]
          %197 = vst [vmem:[%s189 + $0x18] sm:%s181] %v196
          %v198 = vld [vmem:[%s188 + $0x20] sm:%s181]
          %199 = vst [vmem:[%s189 + $0x20] sm:%s181] %v198
          %v200 = vld [vmem:[%s188 + $0x28] sm:%s181]
          %201 = vst [vmem:[%s189 + $0x28] sm:%s181] %v200
          %v202 = vld [vmem:[%s188 + $0x30] sm:%s181]
          %203 = vst [vmem:[%s189 + $0x30] sm:%s181] %v202
          %v204 = vld [vmem:[%s188 + $0x38] sm:%s181]
          %205 = vst [vmem:[%s189 + $0x38] sm:%s181] %v204
        $region52: #{reverse.0} parent=46 // loop_footer
          %s187 = sadd.s32 1, %s183
        $region53: #{reverse.0} parent=46 // loop_footer_branch
          %182 = sbr.rel target = $region49
        $region54: #{reverse.0} parent=46 // loop_exit
          _
      $region47: #{reverse.0} parent=38 // pred_fallthru
        _
    $region39: #{reverse.0} parent=1 // pred_fallthru
      _
    %234 = vnop

// kernel: spectral_transform2d.13
$region0: #{spectral_transform2d.13}
  #allocation0 [shape = 'u32[]', space=smem, size = 0x4, offset = 0x4, fixed_abs, tag = 'smem constant byte address 0x4 - core index']
  #allocation1 [shape = 'u32[144,128]{1,0:T(1,128)}', space=vmem, size = 0x12000, scoped, tag = 'internal scratch']
  %s0 = inlined_call_operand.vmem [shape: f32[2,4,256], index: 0, kind: input, shape index: {}]
  %s1 = inlined_call_operand.vmem [shape: f32[2,4,256], index: 1, kind: input, shape index: {}]
  %s2 = inlined_call_operand.vmem [shape: f32[2,4,256], index: 2, kind: input, shape index: {}]
  %s3 = inlined_call_operand.vmem [shape: f32[8,4], index: 3, kind: input, shape index: {}]
  %s4 = inlined_call_operand.vmem [shape: f32[2,8,256], index: 4, kind: output, shape index: {}]
  %s5 = sld [smem:[#allocation0]]
  $region49: #{spectral_transform2d.13} parent=0
    _
  %s7 = ssub.s32 1, %s5
  %s8 = scalar_select 0, %s7, %s5
  loop: start=0, step=1, limit=4
  $region2: #{spectral_transform2d.13} parent=0 // loop_pre_header
    _
  $region3: #{spectral_transform2d.13} parent=0 // loop_header
    %s10 = sphi 0, %s14
    %p11 = scmp.ge.s32.totalorder %s10, 4
    %s17 = sphi 0, %s29
    %s18 = sphi 0, %s25
    %s19 = sphi 0, %s17
    %s20 = sphi 0, %s18
    %s21 = sphi 0, %s19
    %s22 = sphi 0, %s20
    %s34 = sphi 0, %s36
    %s37 = sphi 0, %s34
    %s38 = sphi 0, %s37
    %s54 = sphi 0, %s38
    %s62 = sphi 0, %s64
    %s65 = sphi 0, %s62
    %s66 = sphi 0, %s65
    %s82 = sphi 0, %s66
    %s90 = sphi 0, %s92
    %s93 = sphi 0, %s90
    %s94 = sphi 0, %s93
    %s110 = sphi 0, %s94
    %s114 = sphi 0, %s114
    %s116 = sphi 0, %s114
    %s117 = sphi 0, %s116
    %s131 = sphi 0, %s117
    %s139 = sphi 0, %s141
    %s142 = sphi 0, %s139
    %s143 = sphi 0, %s142
    %s159 = sphi 0, %s143
  $region4: #{spectral_transform2d.13} parent=0 // loop_header_branch
    %13 = sbr.rel (%p11) target = $region8
  $region5: #{spectral_transform2d.13} parent=0 // loop_body
    %s15 = ssub.s32 %s10, 1
    %s16 = ssub.s32 %s10, 2
    %s23 = sadd.s32 1, %s18
    %p24 = scmp.ge.s32.totalorder %s23, 1
    %s25 = scalar_select %p24, 0, %s23
    %s26 = sadd.s32 1, %s17
    %s27 = scalar_select %p24, %s26, %s17
    %p28 = scmp.ge.s32.totalorder %s27, 2
    %s29 = scalar_select %p28, 0, %s27
    %s30 = ssub.s32 %s17, %s29
    %s31 = ssub.s32 %s18, %s25
    %s32 = sor.u32 %s30, %s31
    %p33 = scmp.eq.s32.totalorder %s32, 0
    %s35 = sadd.s32 %s34, 1
    %s36 = scalar_select %p33, %s34, %s35
    %p39 = pneg %p33
    %p40 = scmp.eq.s32.totalorder %s10, 1
    %p41 = por %p39, %p40
    %p42 = scmp.ne.s32.totalorder %s34, %s37
    %p43 = scmp.eq.s32.totalorder %s10, 0
    %p44 = por %p42, %p43
    %p45 = scmp.ne.s32.totalorder %s34, %s37
    %p46 = scmp.eq.s32.totalorder %s15, 1
    %p47 = por %p45, %p46
    %p48 = scmp.ne.s32.totalorder %s37, %s38
    %p49 = scmp.eq.s32.totalorder %s15, 0
    %p50 = por %p48, %p49
    %p51 = scmp.ne.s32.totalorder %s37, %s38
    %p52 = scmp.eq.s32.totalorder %s16, 1
    %p53 = por %p51, %p52
    %p55 = scmp.ne.s32.totalorder %s38, %s54
    %p56 = scmp.eq.s32.totalorder %s16, 0
    %p57 = por %p55, %p56
    %s58 = ssub.s32 %s17, %s29
    %s59 = ssub.s32 %s18, %s25
    %s60 = sor.u32 %s58, %s59
    %p61 = scmp.eq.s32.totalorder %s60, 0
    %s63 = sadd.s32 %s62, 1
    %s64 = scalar_select %p61, %s62, %s63
    %p67 = pneg %p61
    %p68 = scmp.eq.s32.totalorder %s10, 1
    %p69 = por %p67, %p68
    %p70 = scmp.ne.s32.totalorder %s62, %s65
    %p71 = scmp.eq.s32.totalorder %s10, 0
    %p72 = por %p70, %p71
    %p73 = scmp.ne.s32.totalorder %s62, %s65
    %p74 = scmp.eq.s32.totalorder %s15, 1
    %p75 = por %p73, %p74
    %p76 = scmp.ne.s32.totalorder %s65, %s66
    %p77 = scmp.eq.s32.totalorder %s15, 0
    %p78 = por %p76, %p77
    %p79 = scmp.ne.s32.totalorder %s65, %s66
    %p80 = scmp.eq.s32.totalorder %s16, 1
    %p81 = por %p79, %p80
    %p83 = scmp.ne.s32.totalorder %s66, %s82
    %p84 = scmp.eq.s32.totalorder %s16, 0
    %p85 = por %p83, %p84
    %s86 = ssub.s32 %s17, %s29
    %s87 = ssub.s32 %s18, %s25
    %s88 = sor.u32 %s86, %s87
    %p89 = scmp.eq.s32.totalorder %s88, 0
    %s91 = sadd.s32 %s90, 1
    %s92 = scalar_select %p89, %s90, %s91
    %p95 = pneg %p89
    %p96 = scmp.eq.s32.totalorder %s10, 1
    %p97 = por %p95, %p96
    %p98 = scmp.ne.s32.totalorder %s90, %s93
    %p99 = scmp.eq.s32.totalorder %s10, 0
    %p100 = por %p98, %p99
    %p101 = scmp.ne.s32.totalorder %s90, %s93
    %p102 = scmp.eq.s32.totalorder %s15, 1
    %p103 = por %p101, %p102
    %p104 = scmp.ne.s32.totalorder %s93, %s94
    %p105 = scmp.eq.s32.totalorder %s15, 0
    %p106 = por %p104, %p105
    %p107 = scmp.ne.s32.totalorder %s93, %s94
    %p108 = scmp.eq.s32.totalorder %s16, 1
    %p109 = por %p107, %p108
    %p111 = scmp.ne.s32.totalorder %s94, %s110
    %p112 = scmp.eq.s32.totalorder %s16, 0
    %p113 = por %p111, %p112
    %s115 = sadd.s32 %s114, 1
    %p118 = scmp.eq.s32.totalorder %s10, 1
    %p119 = scmp.ne.s32.totalorder %s114, %s116
    %p120 = scmp.eq.s32.totalorder %s10, 0
    %p121 = por %p119, %p120
    %p122 = scmp.ne.s32.totalorder %s114, %s116
    %p123 = scmp.eq.s32.totalorder %s15, 1
    %p124 = por %p122, %p123
    %p125 = scmp.ne.s32.totalorder %s116, %s117
    %p126 = scmp.eq.s32.totalorder %s15, 0
    %p127 = por %p125, %p126
    %p128 = scmp.ne.s32.totalorder %s116, %s117
    %p129 = scmp.eq.s32.totalorder %s16, 1
    %p130 = por %p128, %p129
    %p132 = scmp.ne.s32.totalorder %s117, %s131
    %p133 = scmp.eq.s32.totalorder %s16, 0
    %p134 = por %p132, %p133
    %s135 = ssub.s32 %s17, %s29
    %s136 = ssub.s32 %s18, %s25
    %s137 = sor.u32 %s135, %s136
    %p138 = scmp.eq.s32.totalorder %s137, 0
    %s140 = sadd.s32 %s139, 1
    %s141 = scalar_select %p138, %s139, %s140
    %p144 = pneg %p138
    %p145 = scmp.eq.s32.totalorder %s10, 1
    %p146 = por %p144, %p145
    %p147 = scmp.ne.s32.totalorder %s139, %s142
    %p148 = scmp.eq.s32.totalorder %s10, 0
    %p149 = por %p147, %p148
    %p150 = scmp.ne.s32.totalorder %s139, %s142
    %p151 = scmp.eq.s32.totalorder %s15, 1
    %p152 = por %p150, %p151
    %p153 = scmp.ne.s32.totalorder %s142, %s143
    %p154 = scmp.eq.s32.totalorder %s15, 0
    %p155 = por %p153, %p154
    %p156 = scmp.ne.s32.totalorder %s142, %s143
    %p157 = scmp.eq.s32.totalorder %s16, 1
    %p158 = por %p156, %p157
    %p160 = scmp.ne.s32.totalorder %s143, %s159
    %p161 = scmp.eq.s32.totalorder %s16, 0
    %p162 = por %p160, %p161
    %p163 = scmp.le.s32.totalorder 1, %s10
    %p164 = scmp.lt.s32.totalorder %s10, 3
    %p165 = pnand %p163, %p164
    %p166 = pneg %p165
    // Predicated region
    $region9: #{spectral_transform2d.13} parent=5 // pred_check
      _
    $region10: #{spectral_transform2d.13} parent=5 // pred_check_branch
      %168 = sbr.rel (%p165) target = $region12
    $region11: #{spectral_transform2d.13} parent=5 // pred_region
      %s169 = ssub.s32 %s10, 1
      // Predicated region
      $region13: #{spectral_transform2d.13} parent=11 // pred_check
        %p170 = pneg %p127
      $region14: #{spectral_transform2d.13} parent=11 // pred_check_branch
        %172 = sbr.rel (%p170) target = $region16
      $region15: #{spectral_transform2d.13} parent=11 // pred_region
        _
      $region16: #{spectral_transform2d.13} parent=11 // pred_fallthru
        _
    $region12: #{spectral_transform2d.13} parent=5 // pred_fallthru
      _
    %p173 = scmp.lt.s32.totalorder %s10, 2
    // Predicated region
    $region17: #{spectral_transform2d.13} parent=5 // pred_check
      %p174 = pneg %p173
    $region18: #{spectral_transform2d.13} parent=5 // pred_check_branch
      %176 = sbr.rel (%p174) target = $region20
    $region19: #{spectral_transform2d.13} parent=5 // pred_region
      // Predicated region
      $region21: #{spectral_transform2d.13} parent=19 // pred_check
        %p177 = pneg %p44
      $region22: #{spectral_transform2d.13} parent=19 // pred_check_branch
        %179 = sbr.rel (%p177) target = $region24
      $region23: #{spectral_transform2d.13} parent=19 // pred_region
        %s180 = smul.u32 2, %s18
        %p181 = scmp.lt.s32.totalorder %s17, 1
        %s182 = scalar_select %p181, %s17, 1
        %p183 = scmp.lt.s32.totalorder %s180, 1
        %s184 = scalar_select %p183, %s180, 1
        %s185 = smul.addr %s182, 2
        %s186 = sadd.s32 %s184, %s185
        %s187 = smul.addr %s186, 4
        %s188 = scalar_lea.vmem %s0, %s187
        %s189 = smul.u32 2, %s18
      $region24: #{spectral_transform2d.13} parent=19 // pred_fallthru
        _
      // Predicated region
      $region25: #{spectral_transform2d.13} parent=19 // pred_check
        %p190 = pneg %p72
      $region26: #{spectral_transform2d.13} parent=19 // pred_check_branch
        %192 = sbr.rel (%p190) target = $region28
      $region27: #{spectral_transform2d.13} parent=19 // pred_region
        %s193 = smul.u32 2, %s18
        %p194 = scmp.lt.s32.totalorder %s17, 1
        %s195 = scalar_select %p194, %s17, 1
        %p196 = scmp.lt.s32.totalorder %s193, 1
        %s197 = scalar_select %p196, %s193, 1
        %s198 = smul.addr %s195, 2
        %s199 = sadd.s32 %s197, %s198
        %s200 = smul.addr %s199, 4
        %s201 = scalar_lea.vmem %s1, %s200
        %s202 = smul.u32 2, %s18
      $region28: #{spectral_transform2d.13} parent=19 // pred_fallthru
        _
      // Predicated region
      $region29: #{spectral_transform2d.13} parent=19 // pred_check
        %p203 = pneg %p100
      $region30: #{spectral_transform2d.13} parent=19 // pred_check_branch
        %205 = sbr.rel (%p203) target = $region32
      $region31: #{spectral_transform2d.13} parent=19 // pred_region
        %s206 = smul.u32 2, %s18
        %p207 = scmp.lt.s32.totalorder %s17, 1
        %s208 = scalar_select %p207, %s17, 1
        %p209 = scmp.lt.s32.totalorder %s206, 1
        %s210 = scalar_select %p209, %s206, 1
        %s211 = smul.addr %s208, 2
        %s212 = sadd.s32 %s210, %s211
        %s213 = smul.addr %s212, 4
        %s214 = scalar_lea.vmem %s2, %s213
        %s215 = smul.u32 2, %s18
      $region32: #{spectral_transform2d.13} parent=19 // pred_fallthru
        _
    $region20: #{spectral_transform2d.13} parent=5 // pred_fallthru
      _
    %p216 = scmp.le.s32.totalorder 1, %s10
    %p217 = scmp.lt.s32.totalorder %s10, 3
    %p218 = pnand %p216, %p217
    %p219 = pneg %p218
    // Predicated region
    $region33: #{spectral_transform2d.13} parent=5 // pred_check
      _
    $region34: #{spectral_transform2d.13} parent=5 // pred_check_branch
      %221 = sbr.rel (%p218) target = $region36
    $region35: #{spectral_transform2d.13} parent=5 // pred_region
      %s222 = ssub.s32 %s10, 1
      %s223 = smul.u32 2, %s20
      %p224 = scmp.lt.s32.totalorder %s19, 1
      %s225 = scalar_select %p224, %s19, 1
      %p226 = scmp.lt.s32.totalorder %s223, 1
      %s227 = scalar_select %p226, %s223, 1
      %s228 = smul.addr %s225, 2
      %s229 = sadd.s32 %s227, %s228
      %s230 = smul.addr %s229, 4
      %s231 = scalar_lea.vmem %s0, %s230
      %p232 = pneg %p50
      %p233 = pneg %p47
      %s234 = smul.u32 2, %s20
      %p235 = scmp.lt.s32.totalorder %s19, 1
      %s236 = scalar_select %p235, %s19, 1
      %p237 = scmp.lt.s32.totalorder %s234, 1
      %s238 = scalar_select %p237, %s234, 1
      %s239 = smul.addr %s236, 2
      %s240 = sadd.s32 %s238, %s239
      %s241 = smul.addr %s240, 4
      %s242 = scalar_lea.vmem %s1, %s241
      %p243 = pneg %p78
      %p244 = pneg %p75
      %s245 = smul.u32 2, %s20
      %p246 = scmp.lt.s32.totalorder %s19, 1
      %s247 = scalar_select %p246, %s19, 1
      %p248 = scmp.lt.s32.totalorder %s245, 1
      %s249 = scalar_select %p248, %s245, 1
      %s250 = smul.addr %s247, 2
      %s251 = sadd.s32 %s249, %s250
      %s252 = smul.addr %s251, 4
      %s253 = scalar_lea.vmem %s2, %s252
      %p254 = pneg %p106
      %p255 = pneg %p103
      %p256 = pneg %p127
      %p257 = pneg %p124
      %p258 = pneg %p155
      %p259 = pneg %p152
      %s260 = smul.u32 2, %s20
      %p261 = scmp.lt.s32.totalorder %s19, 1
      %s262 = scalar_select %p261, %s19, 1
      %p263 = scmp.lt.s32.totalorder %s260, 1
      %s264 = scalar_select %p263, %s260, 1
      %s265 = smul.addr %s262, 2
      %s266 = sadd.s32 %s264, %s265
      %s267 = smul.addr %s266, 8
      %s268 = scalar_lea.vmem %s4, %s267
      %s269 = smul.u32 2, %s20
      %p270 = scmp.lt.s32.totalorder %s19, 1
      %s271 = scalar_select %p270, %s19, 1
      %p272 = scmp.lt.s32.totalorder %s269, 1
      %s273 = scalar_select %p272, %s269, 1
      %s274 = smul.addr %s271, 2
      %s275 = sadd.s32 %s273, %s274
      %s276 = smul.addr %s275, 4
      %s277 = scalar_lea.vmem %s0, %s276
      %s278 = smul.u32 2, %s20
      %s279 = smul.u32 2, %s20
      %p280 = scmp.lt.s32.totalorder %s19, 1
      %s281 = scalar_select %p280, %s19, 1
      %p282 = scmp.lt.s32.totalorder %s279, 1
      %s283 = scalar_select %p282, %s279, 1
      %s284 = smul.addr %s281, 2
      %s285 = sadd.s32 %s283, %s284
      %s286 = smul.addr %s285, 4
      %s287 = scalar_lea.vmem %s1, %s286
      %s288 = smul.u32 2, %s20
      %s289 = smul.u32 2, %s20
      %p290 = scmp.lt.s32.totalorder %s19, 1
      %s291 = scalar_select %p290, %s19, 1
      %p292 = scmp.lt.s32.totalorder %s289, 1
      %s293 = scalar_select %p292, %s289, 1
      %s294 = smul.addr %s291, 2
      %s295 = sadd.s32 %s293, %s294
      %s296 = smul.addr %s295, 4
      %s297 = scalar_lea.vmem %s2, %s296
      %s298 = smul.u32 2, %s20
      %s299 = smul.u32 2, %s20
      %p300 = scmp.lt.s32.totalorder %s19, 1
      %s301 = scalar_select %p300, %s19, 1
      %p302 = scmp.lt.s32.totalorder %s299, 1
      %s303 = scalar_select %p302, %s299, 1
      %s304 = smul.addr %s301, 2
      %s305 = sadd.s32 %s303, %s304
      %s306 = smul.addr %s305, 8
      %s307 = scalar_lea.vmem %s4, %s306
      %s308 = smul.u32 2, %s20
      %v309 = vld [vmem:[%s277] sm:$0xff]
      %v310 = vld [vmem:[%s287] sm:$0xff]
      %v311 = vadd.f32 %v309, %v310
      %v312 = vld [vmem:[%s297] sm:$0xff]
      %v313 = vadd.f32 %v311, %v312
      %v314 = vld [vmem:[%s3] sm:$0xff]
      %v316 = vcombine.high %v313, %v313
      %vm317 = vcmask 31744
      %v319 = vsel %vm317, %v314, 0
      %vm321 = vcmask 1043456
      %v322 = vsel %vm321, %v313, 0
      %v324 = vsel %vm321, %v316, 0
      %326 = vmatprep.subr.mxu0 0.0
      %327 = vmatpush1.msra.mxu0 0.0
      %328 = vmatprep.subr.mxu0 0.0
      %329 = vmatpush1.msra.mxu0 0.0
      %330 = vmatprep.subr.mxu0 0.0
      %331 = vmatpush1.msra.mxu0 0.0
      %332 = vmatprep.subr.mxu0 0.0
      %333 = vmatpush1.msra.mxu0 0.0
      %334 = vmatprep.subr.mxu0 0.0
      %335 = vmatpush1.msra.mxu0 0.0
      %336 = vmatprep.subr.mxu0 0.0
      %337 = vmatpush1.msra.mxu0 0.0
      %338 = vmatprep.subr.mxu0 0.0
      %339 = vmatpush1.msra.mxu0 0.0
      %340 = vmatprep.subr.mxu0 0.0
      %341 = vmatpush1.msra.mxu0 0.0
      %342 = vmatprep.subr.mxu0 0.0
      %343 = vmatpush1.msra.mxu0 0.0
      %344 = vmatprep.subr.mxu0 0.0
      %345 = vmatpush1.msra.mxu0 0.0
      %346 = vmatprep.subr.mxu0 0.0
      %347 = vmatpush1.msra.mxu0 0.0
      %348 = vmatprep.subr.mxu0 0.0
      %349 = vmatpush1.msra.mxu0 0.0
      %350 = vmatprep.subr.mxu0 0.0
      %351 = vmatpush1.msra.mxu0 0.0
      %352 = vmatprep.subr.mxu0 0.0
      %353 = vmatpush1.msra.mxu0 0.0
      %354 = vmatprep.subr.mxu0 0.0
      %355 = vmatpush1.msra.mxu0 0.0
      %356 = vmatprep.subr.mxu0 %v324
      %357 = vmatpush1.msra.mxu0 %v322
      %358 = vmatprep.subr.mxu0 0.0
      %359 = vmatpush2.msra.mxu0 0.0
      %360 = vmatprep.subr.mxu0 0.0
      %361 = vmatpush2.msra.mxu0 0.0
      %362 = vmatprep.subr.mxu0 0.0
      %363 = vmatpush2.msra.mxu0 0.0
      %364 = vmatprep.subr.mxu0 0.0
      %365 = vmatpush2.msra.mxu0 0.0
      %366 = vmatprep.subr.mxu0 0.0
      %367 = vmatpush2.msra.mxu0 0.0
      %368 = vmatprep.subr.mxu0 0.0
      %369 = vmatpush2.msra.mxu0 0.0
      %370 = vmatprep.subr.mxu0 0.0
      %371 = vmatpush2.msra.mxu0 0.0
      %372 = vmatprep.subr.mxu0 0.0
      %373 = vmatpush2.msra.mxu0 0.0
      %374 = vmatprep.subr.mxu0 0.0
      %375 = vmatpush2.msra.mxu0 0.0
      %376 = vmatprep.subr.mxu0 0.0
      %377 = vmatpush2.msra.mxu0 0.0
      %378 = vmatprep.subr.mxu0 0.0
      %379 = vmatpush2.msra.mxu0 0.0
      %380 = vmatprep.subr.mxu0 0.0
      %381 = vmatpush2.msra.mxu0 0.0
      %382 = vmatprep.subr.mxu0 0.0
      %383 = vmatpush2.msra.mxu0 0.0
      %384 = vmatprep.subr.mxu0 0.0
      %385 = vmatpush2.msra.mxu0 0.0
      %386 = vmatprep.subr.mxu0 0.0
      %387 = vmatpush2.msra.mxu0 0.0
      %388 = vmatprep.subr.mxu0 0.0
      %389 = vmatpush2.msra.mxu0 0.0
      %390 = vmatprep.mubr.f32.mxu0 0.0
      %391 = vmatmul.mubr.f32.gmra.mxu0 %v319
      %v392 = vpop.f32.mrf.mxu0
      %v393 = vadd.f32 0.0, %v392
      %v394 = vpop.f32.mrf.mxu0
      %v395 = vadd.f32 0.0, %v394
      %396 = vdwg.mxu0
      %397 = vst [vmem:[%s307] sm:$0xff] %v393
      %398 = vst [vmem:[%s307 + $0x8] sm:$0xff] %v395
      %s399 = smul.u32 2, %s20
      %p400 = scmp.lt.s32.totalorder %s19, 1
      %s401 = scalar_select %p400, %s19, 1
      %p402 = scmp.lt.s32.totalorder %s399, 1
      %s403 = scalar_select %p402, %s399, 1
      %s404 = smul.addr %s401, 2
      %s405 = sadd.s32 %s403, %s404
      %s406 = smul.addr %s405, 8
      %s407 = scalar_lea.vmem %s4, %s406
      // Predicated region
      $region37: #{spectral_transform2d.13} parent=35 // pred_check
        %p408 = pneg %p152
      $region38: #{spectral_transform2d.13} parent=35 // pred_check_branch
        %410 = sbr.rel (%p408) target = $region40
      $region39: #{spectral_transform2d.13} parent=35 // pred_region
        %s411 = smul.u32 2, %s20
      $region40: #{spectral_transform2d.13} parent=35 // pred_fallthru
        _
    $region36: #{spectral_transform2d.13} parent=5 // pred_fallthru
      _
    %p412 = scmp.le.s32.totalorder 2, %s10
    // Predicated region
    $region41: #{spectral_transform2d.13} parent=5 // pred_check
      %p413 = pneg %p412
    $region42: #{spectral_transform2d.13} parent=5 // pred_check_branch
      %415 = sbr.rel (%p413) target = $region44
    $region43: #{spectral_transform2d.13} parent=5 // pred_region
      %s416 = ssub.s32 %s10, 2
      // Predicated region
      $region45: #{spectral_transform2d.13} parent=43 // pred_check
        %p417 = pneg %p158
      $region46: #{spectral_transform2d.13} parent=43 // pred_check_branch
        %419 = sbr.rel (%p417) target = $region48
      $region47: #{spectral_transform2d.13} parent=43 // pred_region
        %s420 = smul.u32 2, %s22
        %p421 = scmp.lt.s32.totalorder %s21, 1
        %s422 = scalar_select %p421, %s21, 1
        %p423 = scmp.lt.s32.totalorder %s420, 1
        %s424 = scalar_select %p423, %s420, 1
        %s425 = smul.addr %s422, 2
        %s426 = sadd.s32 %s424, %s425
        %s427 = smul.addr %s426, 8
        %s428 = scalar_lea.vmem %s4, %s427
      $region48: #{spectral_transform2d.13} parent=43 // pred_fallthru
        _
    $region44: #{spectral_transform2d.13} parent=5 // pred_fallthru
      _
  $region6: #{spectral_transform2d.13} parent=0 // loop_footer
    %s14 = sadd.s32 1, %s10
  $region7: #{spectral_transform2d.13} parent=0 // loop_footer_branch
    %9 = sbr.rel target = $region3
  $region8: #{spectral_transform2d.13} parent=0 // loop_exit
    _

</llo_original>
